<compile_context>
chip_gen: v7x
topology: tpu7x:2x2x1
jax: 0.10.0
libtpu: 0.0.40
codegen_flags: <defaults>
</compile_context>

<pallas_src>
import jax
import jax.numpy as jnp
from jax.experimental import pallas as pl
from jax.experimental.pallas import tpu as pltpu

# ----------------------------- small model config -----------------------------
B = 2
IN_CHANS = 1            # must be 1 (see layout note / TODO below)
WINDOW = 20             # window_size; three temporal convs shrink it by 18
PATCH = 10              # patch_size -> num_patches = WINDOW // PATCH = 2 == WINDOW-18
EMBED = 20              # embed_dim
DEPTH = 3
HEADS = 4
MLP_RATIO = 4.0
NUM_CLASSES = 16
HIDDEN = int(EMBED * MLP_RATIO)
NUM_PATCHES = WINDOW // PATCH
N_TOK = NUM_PATCHES + 1          # tokens per batch element (cls + patches)
HD = EMBED // HEADS              # head dim
LN_EPS = 1e-5

T1 = WINDOW - 14                 # time samples after conv1 (kernel 15)
T2 = WINDOW - 16                 # after conv2 (kernel 3)
T3 = WINDOW - 18                 # after conv3 (kernel 3) == NUM_PATCHES
assert T3 == NUM_PATCHES

# TODO(synk): the reference PatchEmbed as written (transpose(2,3) + LayerNorm(8)
# + squeeze(1) + 3D cat) is not shape-consistent for any input; we implement the
# evident intent: LayerNorm over the 8 conv channels and one token per remaining
# time sample, with in_chans=1 and WINDOW chosen so tokens == num_patches.


# ------------------------------- kernel helpers --------------------------------
def _ln(x, w, b, eps=LN_EPS):
    # LayerNorm over last dim (biased variance, like torch).  w, b: (1, C).
    m = jnp.mean(x, axis=-1, keepdims=True)
    v = jnp.mean(jnp.square(x - m), axis=-1, keepdims=True)
    return (x - m) * jax.lax.rsqrt(v + eps) * w + b


def _erf(x):
    # Abramowitz–Stegun 7.1.26 rational approximation (|err| < 1.5e-7, i.e.
    # fp32-exact); avoids depending on a lax.erf lowering inside Mosaic.
    a1, a2, a3, a4, a5 = 0.254829592, -0.284496736, 1.421413741, -1.453152027, 1.061405429
    p = 0.3275911
    s = jnp.where(x >= 0.0, 1.0, -1.0)
    z = jnp.abs(x)
    t = 1.0 / (1.0 + p * z)
    poly = ((((a5 * t + a4) * t + a3) * t + a2) * t + a1) * t
    return s * (1.0 - poly * jnp.exp(-z * z))


def _gelu_exact(x):
    return 0.5 * x * (1.0 + _erf(x * 0.7071067811865476))


# ------------------------------ fused forward kernel ---------------------------
def labram_kernel(xunf_ref, pe_w1, pe_w23, pe_vecs, pe_pw, pe_pb,
                  cls_ref, pos_ref,
                  blk_vecs, blk_fc1b, blk_qkvp, blk_fc1w, blk_fc2w,
                  norm_vecs, head_w, head_b,
                  o_ref, xbuf):
    f32, bf16 = jnp.float32, jnp.bfloat16

    # ------------------------------ patch embed ------------------------------
    vecs = pe_vecs[...]                               # (9, 8) f32
    c1b, n1w, n1b = vecs[0:1], vecs[1:2], vecs[2:3]
    c2b, n2w, n2b = vecs[3:4], vecs[4:5], vecs[5:6]
    c3b, n3w, n3b = vecs[6:7], vecs[7:8], vecs[8:9]

    # conv1 (kernel 15): im2col was built in the wrapper -> one MXU matmul.
    h = jnp.dot(xunf_ref[...].astype(bf16), pe_w1[...],
                preferred_element_type=f32) + c1b      # (T1, 8)
    h = _ln(h, n1w, n1b)                               # LN over the 8 channels

    w23 = pe_w23[...]                                  # (2, 3, 8, 8) bf16 [layer,k,ci,co]

    def conv_k3(hin, w, n_out):
        # 3-tap temporal conv on ONE batch element (tiny static sublane slices,
        # no per-batch loops / concatenates).
        hb = hin.astype(bf16)
        acc = jnp.dot(hb[0:n_out], w[0], preferred_element_type=f32)
        acc = acc + jnp.dot(hb[1:1 + n_out], w[1], preferred_element_type=f32)
        acc = acc + jnp.dot(hb[2:2 + n_out], w[2], preferred_element_type=f32)
        return acc

    h = _ln(conv_k3(h, w23[0], T2) + c2b, n2w, n2b)    # (T2, 8)
    h = _ln(conv_k3(h, w23[1], T3) + c3b, n3w, n3b)    # (T3, 8)
    tok = jnp.dot(h.astype(bf16), pe_pw[...],
                  preferred_element_type=f32) + pe_pb[...]          # (T3, E)

    # ------- cls token + positional embedding via scratch stores (no concat) ----
    pos = pos_ref[...]                                 # (N_TOK, E)
    xbuf[0:1, :] = cls_ref[...] + pos[0:1]
    xbuf[1:N_TOK, :] = tok + pos[1:N_TOK]
    x = xbuf[...]                                      # (N_TOK, E) f32

    # Per-head lane masks (hoisted out of the depth loop; VPU iota only, no slices).
    lane = jax.lax.broadcasted_iota(jnp.int32, (1, EMBED), 1)
    head_masks = [((lane >= hh * HD) & (lane < (hh + 1) * HD)).astype(f32)
                  for hh in range(HEADS)]
    scale = HD ** -0.5

    # --------------------------- transformer blocks ---------------------------
    for d in range(DEPTH):
        vec = blk_vecs[d]                              # (12, E) f32
        ln1w, ln1b = vec[0:1], vec[1:2]
        qnw, qnb = vec[2:3], vec[3:4]
        knw, knb = vec[4:5], vec[5:6]
        pjb = vec[6:7]
        g1 = vec[7:8]
        ln2w, ln2b = vec[8:9], vec[9:10]
        fc2b = vec[10:11]
        g2 = vec[11:12]
        qkvp = blk_qkvp[d]                             # (4, E, E) bf16: q, k, v, proj

        # ---- attention branch: x + gamma_1 * Attn(LN(x)) ----
        # NOTE: q/k/v kept as 3 matmuls on purpose -- q_norm/k_norm are LayerNorms
        # over the full embed dim, so a fused (E,3E) matmul would need unaligned
        # lane splits of the fused output.
        hn = _ln(x, ln1w, ln1b)
        hnb = hn.astype(bf16)
        q = _ln(jnp.dot(hnb, qkvp[0], preferred_element_type=f32), qnw, qnb)
        k = _ln(jnp.dot(hnb, qkvp[1], preferred_element_type=f32), knw, knb)
        v = jnp.dot(hnb, qkvp[2], preferred_element_type=f32)
        kb = k.astype(bf16)

        heads_out = jnp.zeros((N_TOK, EMBED), f32)
        for hh in range(HEADS):
            m = head_masks[hh]
            # scores: mask q to this head's lanes, contract over full E --
            # avoids any lane slice at the non-128-aligned offsets of head_dim=5.
            qh = (q * m).astype(bf16)
            s = jax.lax.dot_general(qh, kb, (((1,), (1,)), ((), ())),
                                    preferred_element_type=f32) * scale
            s = s - jnp.max(s, axis=-1, keepdims=True)
            p = jnp.exp(s)
            p = p / jnp.sum(p, axis=-1, keepdims=True)     # exact softmax (f32)
            vh = (v * m).astype(bf16)                  # head output lands in its own lanes
            heads_out = heads_out + jnp.dot(p.astype(bf16), vh,
                                            preferred_element_type=f32)
        # one output-projection matmul for all heads
        ao = jnp.dot(heads_out.astype(bf16), qkvp[3],
                     preferred_element_type=f32) + pjb
        x = x + g1 * ao

        # ---- MLP branch: x + gamma_2 * MLP(LN(x)) ----
        hn = _ln(x, ln2w, ln2b)
        hn = jnp.dot(hn.astype(bf16), blk_fc1w[d],
                     preferred_element_type=f32) + blk_fc1b[d]
        hn = _gelu_exact(hn)
        hn = jnp.dot(hn.astype(bf16), blk_fc2w[d],
                     preferred_element_type=f32) + fc2b
        x = x + g2 * hn

    # -------------- final norm (cls row only) + classifier head --------------
    nv = norm_vecs[...]                                # (2, E): weight, bias
    cls_out = _ln(x[0:1, :], nv[0:1], nv[1:2])         # row 0 == cls token (no strided gather)
    o_ref[...] = jnp.dot(cls_out.astype(bf16), head_w[...],
                         preferred_element_type=f32) + head_b[...]


# ------------------------------- pallas_call wrapper ----------------------------
def _const_spec(a):
    nd = a.ndim
    return pl.BlockSpec(a.shape, lambda i, _nd=nd: (0,) * _nd)


def labram_forward(x, params):
    p = params
    bf16 = jnp.bfloat16
    xs = x[:, 0, :].astype(jnp.float32)                               # (B, WINDOW)
    # conv1 im2col hoisted to the wrapper (tiny XLA op): x_unf[b,t,k] = xs[b,t+k]
    x_unf = jnp.stack([xs[:, t:t + 15] for t in range(T1)], axis=1)   # (B, T1, 15)

    ins = [x_unf,
           p['pe_conv1_w'].astype(bf16), p['pe_conv23_w'].astype(bf16),
           p['pe_vecs'], p['pe_proj_w'].astype(bf16), p['pe_proj_b'],
           p['cls_token'], p['pos_embed'],
           p['blk_vecs'], p['blk_fc1_b'],
           p['blk_qkvp'].astype(bf16), p['blk_fc1_w'].astype(bf16),
           p['blk_fc2_w'].astype(bf16),
           p['norm_vecs'], p['head_w'].astype(bf16), p['head_b']]

    in_specs = [pl.BlockSpec((None, T1, 15), lambda i: (i, 0, 0))]    # per-batch im2col block
    in_specs += [_const_spec(a) for a in ins[1:]]                     # weights stay resident

    out = pl.pallas_call(
        labram_kernel,
        grid=(B,),                      # one batch element per step; both TCs usable on v7x
        in_specs=in_specs,
        out_specs=pl.BlockSpec((None, 1, NUM_CLASSES), lambda i: (i, 0, 0)),
        out_shape=jax.ShapeDtypeStruct((B, 1, NUM_CLASSES), jnp.float32),
        scratch_shapes=[pltpu.VMEM((N_TOK, EMBED), jnp.float32)],
        compiler_params=pltpu.CompilerParams(dimension_semantics=("parallel",)),
    )(*ins)
    return out[:, 0, :]


# ------------------------------ deterministic init ------------------------------
def init_params(key):
    keys = iter(jax.random.split(key, 40))

    def nrm(shape, std=0.02):
        return (std * jax.random.normal(next(keys), shape)).astype(jnp.float32)

    ones = lambda s: jnp.ones(s, jnp.float32)
    zeros = lambda s: jnp.zeros(s, jnp.float32)
    E = EMBED

    # ---- patch embed (packed) ----
    pe_conv1_w = nrm((15, 8))                                   # Conv2d(1,8,(1,15)) as [k, c_out]
    pe_conv23_w = jnp.stack([nrm((3, 8, 8)), nrm((3, 8, 8))])   # [layer, k, c_in, c_out]
    pe_vecs = jnp.stack([zeros((8,)), ones((8,)), zeros((8,)),  # conv1_b, n1_w, n1_b
                         zeros((8,)), ones((8,)), zeros((8,)),  # conv2_b, n2_w, n2_b
                         zeros((8,)), ones((8,)), zeros((8,))]) # conv3_b, n3_w, n3_b
    pe_proj_w = nrm((8, E))                                     # Linear(8, E) stored (in, out)
    pe_proj_b = zeros((1, E))

    # ---- transformer blocks, stacked along DEPTH ----
    blk_vecs, blk_fc1_b, blk_qkvp, blk_fc1_w, blk_fc2_w = [], [], [], [], []
    for _ in range(DEPTH):
        blk_vecs.append(jnp.stack([
            ones((E,)), zeros((E,)),      # 0,1  ln1 weight, bias
            ones((E,)), zeros((E,)),      # 2,3  q_norm weight, bias
            ones((E,)), zeros((E,)),      # 4,5  k_norm weight, bias
            zeros((E,)),                  # 6    attn proj bias
            ones((E,)),                   # 7    gamma_1
            ones((E,)), zeros((E,)),      # 8,9  ln2 weight, bias
            zeros((E,)),                  # 10   fc2 bias
            ones((E,)),                   # 11   gamma_2
        ]))
        blk_qkvp.append(jnp.stack([nrm((E, E)) for _ in range(4)]))   # q, k, v, proj (in, out)
        blk_fc1_w.append(nrm((E, HIDDEN)))
        blk_fc1_b.append(zeros((1, HIDDEN)))
        blk_fc2_w.append(nrm((HIDDEN, E)))

    return dict(
        pe_conv1_w=pe_conv1_w, pe_conv23_w=pe_conv23_w, pe_vecs=pe_vecs,
        pe_proj_w=pe_proj_w, pe_proj_b=pe_proj_b,
        cls_token=nrm((1, E)),
        pos_embed=nrm((N_TOK, E)),
        blk_vecs=jnp.stack(blk_vecs),
        blk_fc1_b=jnp.stack(blk_fc1_b),
        blk_qkvp=jnp.stack(blk_qkvp),
        blk_fc1_w=jnp.stack(blk_fc1_w),
        blk_fc2_w=jnp.stack(blk_fc2_w),
        norm_vecs=jnp.stack([ones((E,)), zeros((E,))]),
        head_w=nrm((E, NUM_CLASSES)),
        head_b=zeros((1, NUM_CLASSES)),
    )


if __name__ == "__main__":
    key = jax.random.PRNGKey(0)
    pkey, xkey = jax.random.split(key)
    params = init_params(pkey)
    x = jax.random.normal(xkey, (B, IN_CHANS, WINDOW), jnp.float32)

    fwd = jax.jit(labram_forward)
    out = jax.block_until_ready(fwd(x, params))

    assert out.shape == (B, NUM_CLASSES), out.shape
    assert bool(jnp.all(jnp.isfinite(out)))
    print("KERNEL_OK")
</pallas_src>

<mosaic_0001>
module attributes {stable_mosaic.version = 11 : i64} {
  func.func @labram_kernel(%arg0: i32, %arg1: memref<1x6x15xf32, #tpu.memory_space<vmem>>, %arg2: memref<15x8xbf16, #tpu.memory_space<vmem>>, %arg3: memref<2x3x8x8xbf16, #tpu.memory_space<vmem>>, %arg4: memref<9x8xf32, #tpu.memory_space<vmem>>, %arg5: memref<8x20xbf16, #tpu.memory_space<vmem>>, %arg6: memref<1x20xf32, #tpu.memory_space<vmem>>, %arg7: memref<1x20xf32, #tpu.memory_space<vmem>>, %arg8: memref<3x20xf32, #tpu.memory_space<vmem>>, %arg9: memref<3x12x20xf32, #tpu.memory_space<vmem>>, %arg10: memref<3x1x80xf32, #tpu.memory_space<vmem>>, %arg11: memref<3x4x20x20xbf16, #tpu.memory_space<vmem>>, %arg12: memref<3x20x80xbf16, #tpu.memory_space<vmem>>, %arg13: memref<3x80x20xbf16, #tpu.memory_space<vmem>>, %arg14: memref<2x20xf32, #tpu.memory_space<vmem>>, %arg15: memref<20x16xbf16, #tpu.memory_space<vmem>>, %arg16: memref<1x16xf32, #tpu.memory_space<vmem>>, %arg17: memref<1x1x16xf32, #tpu.memory_space<vmem>>, %arg18: memref<3x20xf32, #tpu.memory_space<vmem>>) attributes {dimension_semantics = [#tpu.dimension_semantics<parallel>], iteration_bounds = array<i64: 2>, scalar_prefetch = 0 : i64, scratch_operands = 1 : i64, tpu.core_type = #tpu.core_type<tc>, window_params = [{transform_indices = @transform_0, window_bounds = array<i64: 1, 6, 15>}, {pipeline_mode = #tpu.pipeline_mode<synchronous>, transform_indices = @transform_1, window_bounds = array<i64: 15, 8>}, {pipeline_mode = #tpu.pipeline_mode<synchronous>, transform_indices = @transform_2, window_bounds = array<i64: 2, 3, 8, 8>}, {pipeline_mode = #tpu.pipeline_mode<synchronous>, transform_indices = @transform_3, window_bounds = array<i64: 9, 8>}, {pipeline_mode = #tpu.pipeline_mode<synchronous>, transform_indices = @transform_4, window_bounds = array<i64: 8, 20>}, {pipeline_mode = #tpu.pipeline_mode<synchronous>, transform_indices = @transform_5, window_bounds = array<i64: 1, 20>}, {pipeline_mode = #tpu.pipeline_mode<synchronous>, transform_indices = @transform_6, window_bounds = array<i64: 1, 20>}, {pipeline_mode = #tpu.pipeline_mode<synchronous>, transform_indices = @transform_7, window_bounds = array<i64: 3, 20>}, {pipeline_mode = #tpu.pipeline_mode<synchronous>, transform_indices = @transform_8, window_bounds = array<i64: 3, 12, 20>}, {pipeline_mode = #tpu.pipeline_mode<synchronous>, transform_indices = @transform_9, window_bounds = array<i64: 3, 1, 80>}, {pipeline_mode = #tpu.pipeline_mode<synchronous>, transform_indices = @transform_10, window_bounds = array<i64: 3, 4, 20, 20>}, {pipeline_mode = #tpu.pipeline_mode<synchronous>, transform_indices = @transform_11, window_bounds = array<i64: 3, 20, 80>}, {pipeline_mode = #tpu.pipeline_mode<synchronous>, transform_indices = @transform_12, window_bounds = array<i64: 3, 80, 20>}, {pipeline_mode = #tpu.pipeline_mode<synchronous>, transform_indices = @transform_13, window_bounds = array<i64: 2, 20>}, {pipeline_mode = #tpu.pipeline_mode<synchronous>, transform_indices = @transform_14, window_bounds = array<i64: 20, 16>}, {pipeline_mode = #tpu.pipeline_mode<synchronous>, transform_indices = @transform_15, window_bounds = array<i64: 1, 16>}, {transform_indices = @transform_16, window_bounds = array<i64: 1, 1, 16>}]} {
    %c0 = arith.constant 0 : index
    %c0_0 = arith.constant 0 : index
    %0 = vector.load %arg4[%c0, %c0_0] : memref<9x8xf32, #tpu.memory_space<vmem>>, vector<9x8xf32>
    %1 = vector.extract_strided_slice %0 {offsets = [0, 0], sizes = [1, 8], strides = [1, 1]} : vector<9x8xf32> to vector<1x8xf32>
    %2 = vector.extract_strided_slice %0 {offsets = [1, 0], sizes = [1, 8], strides = [1, 1]} : vector<9x8xf32> to vector<1x8xf32>
    %3 = vector.extract_strided_slice %0 {offsets = [2, 0], sizes = [1, 8], strides = [1, 1]} : vector<9x8xf32> to vector<1x8xf32>
    %4 = vector.extract_strided_slice %0 {offsets = [3, 0], sizes = [1, 8], strides = [1, 1]} : vector<9x8xf32> to vector<1x8xf32>
    %5 = vector.extract_strided_slice %0 {offsets = [4, 0], sizes = [1, 8], strides = [1, 1]} : vector<9x8xf32> to vector<1x8xf32>
    %6 = vector.extract_strided_slice %0 {offsets = [5, 0], sizes = [1, 8], strides = [1, 1]} : vector<9x8xf32> to vector<1x8xf32>
    %7 = vector.extract_strided_slice %0 {offsets = [6, 0], sizes = [1, 8], strides = [1, 1]} : vector<9x8xf32> to vector<1x8xf32>
    %8 = vector.extract_strided_slice %0 {offsets = [7, 0], sizes = [1, 8], strides = [1, 1]} : vector<9x8xf32> to vector<1x8xf32>
    %9 = vector.extract_strided_slice %0 {offsets = [8, 0], sizes = [1, 8], strides = [1, 1]} : vector<9x8xf32> to vector<1x8xf32>
    %c0_1 = arith.constant 0 : index
    %c0_2 = arith.constant 0 : index
    %c0_3 = arith.constant 0 : index
    %10 = vector.load %arg1[%c0_1, %c0_2, %c0_3] : memref<1x6x15xf32, #tpu.memory_space<vmem>>, vector<1x6x15xf32>
    %11 = vector.shape_cast %10 : vector<1x6x15xf32> to vector<6x15xf32>
    %12 = arith.truncf %11 : vector<6x15xf32> to vector<6x15xbf16>
    %c0_4 = arith.constant 0 : index
    %c0_5 = arith.constant 0 : index
    %13 = vector.load %arg2[%c0_4, %c0_5] : memref<15x8xbf16, #tpu.memory_space<vmem>>, vector<15x8xbf16>
    %cst = arith.constant dense<0.000000e+00> : vector<6x8xf32>
    %14 = tpu.matmul %12, %13, %cst {dimension_numbers = #tpu.dot_dimension_numbers<[1], [0], [0], [1], [0, 0, 1, 1], [], []>} : vector<6x15xbf16>, vector<15x8xbf16>, vector<6x8xf32> -> vector<6x8xf32>
    %15 = vector.broadcast %1 : vector<1x8xf32> to vector<6x8xf32>
    %16 = arith.addf %14, %15 : vector<6x8xf32>
    %cst_6 = arith.constant dense<0.000000e+00> : vector<6xf32>
    %17 = vector.multi_reduction <add>, %16, %cst_6 [1] : vector<6x8xf32> to vector<6xf32>
    %18 = vector.shape_cast %17 : vector<6xf32> to vector<6x1xf32>
    %cst_7 = arith.constant 8.000000e+00 : f32
    %19 = vector.broadcast %cst_7 : f32 to vector<6x1xf32>
    %20 = arith.divf %18, %19 : vector<6x1xf32>
    %21 = vector.broadcast %20 : vector<6x1xf32> to vector<6x8xf32>
    %22 = arith.subf %16, %21 : vector<6x8xf32>
    %23 = arith.mulf %22, %22 : vector<6x8xf32>
    %cst_8 = arith.constant dense<0.000000e+00> : vector<6xf32>
    %24 = vector.multi_reduction <add>, %23, %cst_8 [1] : vector<6x8xf32> to vector<6xf32>
    %25 = vector.shape_cast %24 : vector<6xf32> to vector<6x1xf32>
    %cst_9 = arith.constant 8.000000e+00 : f32
    %26 = vector.broadcast %cst_9 : f32 to vector<6x1xf32>
    %27 = arith.divf %25, %26 : vector<6x1xf32>
    %28 = vector.broadcast %20 : vector<6x1xf32> to vector<6x8xf32>
    %29 = arith.subf %16, %28 : vector<6x8xf32>
    %cst_10 = arith.constant 9.99999974E-6 : f32
    %30 = vector.broadcast %cst_10 : f32 to vector<6x1xf32>
    %31 = arith.addf %27, %30 : vector<6x1xf32>
    %32 = math.rsqrt %31 : vector<6x1xf32>
    %33 = vector.broadcast %32 : vector<6x1xf32> to vector<6x8xf32>
    %34 = arith.mulf %29, %33 : vector<6x8xf32>
    %35 = vector.broadcast %2 : vector<1x8xf32> to vector<6x8xf32>
    %36 = arith.mulf %34, %35 : vector<6x8xf32>
    %37 = vector.broadcast %3 : vector<1x8xf32> to vector<6x8xf32>
    %38 = arith.addf %36, %37 : vector<6x8xf32>
    %c0_11 = arith.constant 0 : index
    %c0_12 = arith.constant 0 : index
    %c0_13 = arith.constant 0 : index
    %c0_14 = arith.constant 0 : index
    %39 = vector.load %arg3[%c0_11, %c0_12, %c0_13, %c0_14] : memref<2x3x8x8xbf16, #tpu.memory_space<vmem>>, vector<2x3x8x8xbf16>
    %40 = vector.extract_strided_slice %39 {offsets = [0, 0, 0, 0], sizes = [1, 3, 8, 8], strides = [1, 1, 1, 1]} : vector<2x3x8x8xbf16> to vector<1x3x8x8xbf16>
    %41 = vector.shape_cast %40 : vector<1x3x8x8xbf16> to vector<3x8x8xbf16>
    %42 = arith.truncf %38 : vector<6x8xf32> to vector<6x8xbf16>
    %43 = vector.extract_strided_slice %42 {offsets = [0, 0], sizes = [4, 8], strides = [1, 1]} : vector<6x8xbf16> to vector<4x8xbf16>
    %44 = vector.extract_strided_slice %41 {offsets = [0, 0, 0], sizes = [1, 8, 8], strides = [1, 1, 1]} : vector<3x8x8xbf16> to vector<1x8x8xbf16>
    %45 = vector.shape_cast %44 : vector<1x8x8xbf16> to vector<8x8xbf16>
    %cst_15 = arith.constant dense<0.000000e+00> : vector<4x8xf32>
    %46 = tpu.matmul %43, %45, %cst_15 {dimension_numbers = #tpu.dot_dimension_numbers<[1], [0], [0], [1], [0, 0, 1, 1], [], []>} : vector<4x8xbf16>, vector<8x8xbf16>, vector<4x8xf32> -> vector<4x8xf32>
    %47 = vector.extract_strided_slice %42 {offsets = [1, 0], sizes = [4, 8], strides = [1, 1]} : vector<6x8xbf16> to vector<4x8xbf16>
    %48 = vector.extract_strided_slice %41 {offsets = [1, 0, 0], sizes = [1, 8, 8], strides = [1, 1, 1]} : vector<3x8x8xbf16> to vector<1x8x8xbf16>
    %49 = vector.shape_cast %48 : vector<1x8x8xbf16> to vector<8x8xbf16>
    %cst_16 = arith.constant dense<0.000000e+00> : vector<4x8xf32>
    %50 = tpu.matmul %47, %49, %cst_16 {dimension_numbers = #tpu.dot_dimension_numbers<[1], [0], [0], [1], [0, 0, 1, 1], [], []>} : vector<4x8xbf16>, vector<8x8xbf16>, vector<4x8xf32> -> vector<4x8xf32>
    %51 = arith.addf %46, %50 : vector<4x8xf32>
    %52 = vector.extract_strided_slice %42 {offsets = [2, 0], sizes = [4, 8], strides = [1, 1]} : vector<6x8xbf16> to vector<4x8xbf16>
    %53 = vector.extract_strided_slice %41 {offsets = [2, 0, 0], sizes = [1, 8, 8], strides = [1, 1, 1]} : vector<3x8x8xbf16> to vector<1x8x8xbf16>
    %54 = vector.shape_cast %53 : vector<1x8x8xbf16> to vector<8x8xbf16>
    %cst_17 = arith.constant dense<0.000000e+00> : vector<4x8xf32>
    %55 = tpu.matmul %52, %54, %cst_17 {dimension_numbers = #tpu.dot_dimension_numbers<[1], [0], [0], [1], [0, 0, 1, 1], [], []>} : vector<4x8xbf16>, vector<8x8xbf16>, vector<4x8xf32> -> vector<4x8xf32>
    %56 = arith.addf %51, %55 : vector<4x8xf32>
    %57 = vector.broadcast %4 : vector<1x8xf32> to vector<4x8xf32>
    %58 = arith.addf %56, %57 : vector<4x8xf32>
    %cst_18 = arith.constant dense<0.000000e+00> : vector<4xf32>
    %59 = vector.multi_reduction <add>, %58, %cst_18 [1] : vector<4x8xf32> to vector<4xf32>
    %60 = vector.shape_cast %59 : vector<4xf32> to vector<4x1xf32>
    %cst_19 = arith.constant 8.000000e+00 : f32
    %61 = vector.broadcast %cst_19 : f32 to vector<4x1xf32>
    %62 = arith.divf %60, %61 : vector<4x1xf32>
    %63 = vector.broadcast %62 : vector<4x1xf32> to vector<4x8xf32>
    %64 = arith.subf %58, %63 : vector<4x8xf32>
    %65 = arith.mulf %64, %64 : vector<4x8xf32>
    %cst_20 = arith.constant dense<0.000000e+00> : vector<4xf32>
    %66 = vector.multi_reduction <add>, %65, %cst_20 [1] : vector<4x8xf32> to vector<4xf32>
    %67 = vector.shape_cast %66 : vector<4xf32> to vector<4x1xf32>
    %cst_21 = arith.constant 8.000000e+00 : f32
    %68 = vector.broadcast %cst_21 : f32 to vector<4x1xf32>
    %69 = arith.divf %67, %68 : vector<4x1xf32>
    %70 = vector.broadcast %62 : vector<4x1xf32> to vector<4x8xf32>
    %71 = arith.subf %58, %70 : vector<4x8xf32>
    %cst_22 = arith.constant 9.99999974E-6 : f32
    %72 = vector.broadcast %cst_22 : f32 to vector<4x1xf32>
    %73 = arith.addf %69, %72 : vector<4x1xf32>
    %74 = math.rsqrt %73 : vector<4x1xf32>
    %75 = vector.broadcast %74 : vector<4x1xf32> to vector<4x8xf32>
    %76 = arith.mulf %71, %75 : vector<4x8xf32>
    %77 = vector.broadcast %5 : vector<1x8xf32> to vector<4x8xf32>
    %78 = arith.mulf %76, %77 : vector<4x8xf32>
    %79 = vector.broadcast %6 : vector<1x8xf32> to vector<4x8xf32>
    %80 = arith.addf %78, %79 : vector<4x8xf32>
    %81 = vector.extract_strided_slice %39 {offsets = [1, 0, 0, 0], sizes = [1, 3, 8, 8], strides = [1, 1, 1, 1]} : vector<2x3x8x8xbf16> to vector<1x3x8x8xbf16>
    %82 = vector.shape_cast %81 : vector<1x3x8x8xbf16> to vector<3x8x8xbf16>
    %83 = arith.truncf %80 : vector<4x8xf32> to vector<4x8xbf16>
    %84 = vector.extract_strided_slice %83 {offsets = [0, 0], sizes = [2, 8], strides = [1, 1]} : vector<4x8xbf16> to vector<2x8xbf16>
    %85 = vector.extract_strided_slice %82 {offsets = [0, 0, 0], sizes = [1, 8, 8], strides = [1, 1, 1]} : vector<3x8x8xbf16> to vector<1x8x8xbf16>
    %86 = vector.shape_cast %85 : vector<1x8x8xbf16> to vector<8x8xbf16>
    %cst_23 = arith.constant dense<0.000000e+00> : vector<2x8xf32>
    %87 = tpu.matmul %84, %86, %cst_23 {dimension_numbers = #tpu.dot_dimension_numbers<[1], [0], [0], [1], [0, 0, 1, 1], [], []>} : vector<2x8xbf16>, vector<8x8xbf16>, vector<2x8xf32> -> vector<2x8xf32>
    %88 = vector.extract_strided_slice %83 {offsets = [1, 0], sizes = [2, 8], strides = [1, 1]} : vector<4x8xbf16> to vector<2x8xbf16>
    %89 = vector.extract_strided_slice %82 {offsets = [1, 0, 0], sizes = [1, 8, 8], strides = [1, 1, 1]} : vector<3x8x8xbf16> to vector<1x8x8xbf16>
    %90 = vector.shape_cast %89 : vector<1x8x8xbf16> to vector<8x8xbf16>
    %cst_24 = arith.constant dense<0.000000e+00> : vector<2x8xf32>
    %91 = tpu.matmul %88, %90, %cst_24 {dimension_numbers = #tpu.dot_dimension_numbers<[1], [0], [0], [1], [0, 0, 1, 1], [], []>} : vector<2x8xbf16>, vector<8x8xbf16>, vector<2x8xf32> -> vector<2x8xf32>
    %92 = arith.addf %87, %91 : vector<2x8xf32>
    %93 = vector.extract_strided_slice %83 {offsets = [2, 0], sizes = [2, 8], strides = [1, 1]} : vector<4x8xbf16> to vector<2x8xbf16>
    %94 = vector.extract_strided_slice %82 {offsets = [2, 0, 0], sizes = [1, 8, 8], strides = [1, 1, 1]} : vector<3x8x8xbf16> to vector<1x8x8xbf16>
    %95 = vector.shape_cast %94 : vector<1x8x8xbf16> to vector<8x8xbf16>
    %cst_25 = arith.constant dense<0.000000e+00> : vector<2x8xf32>
    %96 = tpu.matmul %93, %95, %cst_25 {dimension_numbers = #tpu.dot_dimension_numbers<[1], [0], [0], [1], [0, 0, 1, 1], [], []>} : vector<2x8xbf16>, vector<8x8xbf16>, vector<2x8xf32> -> vector<2x8xf32>
    %97 = arith.addf %92, %96 : vector<2x8xf32>
    %98 = vector.broadcast %7 : vector<1x8xf32> to vector<2x8xf32>
    %99 = arith.addf %97, %98 : vector<2x8xf32>
    %cst_26 = arith.constant dense<0.000000e+00> : vector<2xf32>
    %100 = vector.multi_reduction <add>, %99, %cst_26 [1] : vector<2x8xf32> to vector<2xf32>
    %101 = vector.shape_cast %100 : vector<2xf32> to vector<2x1xf32>
    %cst_27 = arith.constant 8.000000e+00 : f32
    %102 = vector.broadcast %cst_27 : f32 to vector<2x1xf32>
    %103 = arith.divf %101, %102 : vector<2x1xf32>
    %104 = vector.broadcast %103 : vector<2x1xf32> to vector<2x8xf32>
    %105 = arith.subf %99, %104 : vector<2x8xf32>
    %106 = arith.mulf %105, %105 : vector<2x8xf32>
    %cst_28 = arith.constant dense<0.000000e+00> : vector<2xf32>
    %107 = vector.multi_reduction <add>, %106, %cst_28 [1] : vector<2x8xf32> to vector<2xf32>
    %108 = vector.shape_cast %107 : vector<2xf32> to vector<2x1xf32>
    %cst_29 = arith.constant 8.000000e+00 : f32
    %109 = vector.broadcast %cst_29 : f32 to vector<2x1xf32>
    %110 = arith.divf %108, %109 : vector<2x1xf32>
    %111 = vector.broadcast %103 : vector<2x1xf32> to vector<2x8xf32>
    %112 = arith.subf %99, %111 : vector<2x8xf32>
    %cst_30 = arith.constant 9.99999974E-6 : f32
    %113 = vector.broadcast %cst_30 : f32 to vector<2x1xf32>
    %114 = arith.addf %110, %113 : vector<2x1xf32>
    %115 = math.rsqrt %114 : vector<2x1xf32>
    %116 = vector.broadcast %115 : vector<2x1xf32> to vector<2x8xf32>
    %117 = arith.mulf %112, %116 : vector<2x8xf32>
    %118 = vector.broadcast %8 : vector<1x8xf32> to vector<2x8xf32>
    %119 = arith.mulf %117, %118 : vector<2x8xf32>
    %120 = vector.broadcast %9 : vector<1x8xf32> to vector<2x8xf32>
    %121 = arith.addf %119, %120 : vector<2x8xf32>
    %122 = arith.truncf %121 : vector<2x8xf32> to vector<2x8xbf16>
    %c0_31 = arith.constant 0 : index
    %c0_32 = arith.constant 0 : index
    %123 = vector.load %arg5[%c0_31, %c0_32] : memref<8x20xbf16, #tpu.memory_space<vmem>>, vector<8x20xbf16>
    %cst_33 = arith.constant dense<0.000000e+00> : vector<2x20xf32>
    %124 = tpu.matmul %122, %123, %cst_33 {dimension_numbers = #tpu.dot_dimension_numbers<[1], [0], [0], [1], [0, 0, 1, 1], [], []>} : vector<2x8xbf16>, vector<8x20xbf16>, vector<2x20xf32> -> vector<2x20xf32>
    %c0_34 = arith.constant 0 : index
    %c0_35 = arith.constant 0 : index
    %125 = vector.load %arg6[%c0_34, %c0_35] : memref<1x20xf32, #tpu.memory_space<vmem>>, vector<1x20xf32>
    %126 = vector.broadcast %125 : vector<1x20xf32> to vector<2x20xf32>
    %127 = arith.addf %124, %126 : vector<2x20xf32>
    %c0_36 = arith.constant 0 : index
    %c0_37 = arith.constant 0 : index
    %128 = vector.load %arg8[%c0_36, %c0_37] : memref<3x20xf32, #tpu.memory_space<vmem>>, vector<3x20xf32>
    %c0_38 = arith.constant 0 : index
    %c0_39 = arith.constant 0 : index
    %129 = vector.load %arg7[%c0_38, %c0_39] : memref<1x20xf32, #tpu.memory_space<vmem>>, vector<1x20xf32>
    %130 = vector.extract_strided_slice %128 {offsets = [0, 0], sizes = [1, 20], strides = [1, 1]} : vector<3x20xf32> to vector<1x20xf32>
    %131 = arith.addf %129, %130 : vector<1x20xf32>
    %c0_40 = arith.constant 0 : index
    %c0_41 = arith.constant 0 : index
    %132 = vector.load %arg18[%c0_40, %c0_41] : memref<3x20xf32, #tpu.memory_space<vmem>>, vector<1x20xf32>
    tpu.vector_store %arg18[%c0_40, %c0_41], %131 {strides = array<i32>} : memref<3x20xf32, #tpu.memory_space<vmem>>, vector<1x20xf32>,
    %133 = vector.extract_strided_slice %128 {offsets = [1, 0], sizes = [2, 20], strides = [1, 1]} : vector<3x20xf32> to vector<2x20xf32>
    %134 = arith.addf %127, %133 : vector<2x20xf32>
    %c1 = arith.constant 1 : index
    %c0_42 = arith.constant 0 : index
    %135 = vector.load %arg18[%c1, %c0_42] : memref<3x20xf32, #tpu.memory_space<vmem>>, vector<2x20xf32>
    tpu.vector_store %arg18[%c1, %c0_42], %134 {strides = array<i32>} : memref<3x20xf32, #tpu.memory_space<vmem>>, vector<2x20xf32>,
    %c0_43 = arith.constant 0 : index
    %c0_44 = arith.constant 0 : index
    %136 = vector.load %arg18[%c0_43, %c0_44] : memref<3x20xf32, #tpu.memory_space<vmem>>, vector<3x20xf32>
    %137 = tpu.iota {dimensions = array<i32: 1>} : vector<1x20xi32>
    %c0_i32 = arith.constant 0 : i32
    %138 = vector.broadcast %c0_i32 : i32 to vector<1x20xi32>
    %139 = arith.cmpi sge, %137, %138 : vector<1x20xi32>
    %c5_i32 = arith.constant 5 : i32
    %140 = vector.broadcast %c5_i32 : i32 to vector<1x20xi32>
    %141 = arith.cmpi slt, %137, %140 : vector<1x20xi32>
    %142 = arith.andi %139, %141 : vector<1x20xi1>
    %143 = arith.extui %142 : vector<1x20xi1> to vector<1x20xi32>
    %144 = arith.sitofp %143 : vector<1x20xi32> to vector<1x20xf32>
    %c5_i32_45 = arith.constant 5 : i32
    %145 = vector.broadcast %c5_i32_45 : i32 to vector<1x20xi32>
    %146 = arith.cmpi sge, %137, %145 : vector<1x20xi32>
    %c10_i32 = arith.constant 10 : i32
    %147 = vector.broadcast %c10_i32 : i32 to vector<1x20xi32>
    %148 = arith.cmpi slt, %137, %147 : vector<1x20xi32>
    %149 = arith.andi %146, %148 : vector<1x20xi1>
    %150 = arith.extui %149 : vector<1x20xi1> to vector<1x20xi32>
    %151 = arith.sitofp %150 : vector<1x20xi32> to vector<1x20xf32>
    %c10_i32_46 = arith.constant 10 : i32
    %152 = vector.broadcast %c10_i32_46 : i32 to vector<1x20xi32>
    %153 = arith.cmpi sge, %137, %152 : vector<1x20xi32>
    %c15_i32 = arith.constant 15 : i32
    %154 = vector.broadcast %c15_i32 : i32 to vector<1x20xi32>
    %155 = arith.cmpi slt, %137, %154 : vector<1x20xi32>
    %156 = arith.andi %153, %155 : vector<1x20xi1>
    %157 = arith.extui %156 : vector<1x20xi1> to vector<1x20xi32>
    %158 = arith.sitofp %157 : vector<1x20xi32> to vector<1x20xf32>
    %c15_i32_47 = arith.constant 15 : i32
    %159 = vector.broadcast %c15_i32_47 : i32 to vector<1x20xi32>
    %160 = arith.cmpi sge, %137, %159 : vector<1x20xi32>
    %c20_i32 = arith.constant 20 : i32
    %161 = vector.broadcast %c20_i32 : i32 to vector<1x20xi32>
    %162 = arith.cmpi slt, %137, %161 : vector<1x20xi32>
    %163 = arith.andi %160, %162 : vector<1x20xi1>
    %164 = arith.extui %163 : vector<1x20xi1> to vector<1x20xi32>
    %165 = arith.sitofp %164 : vector<1x20xi32> to vector<1x20xf32>
    %c0_48 = arith.constant 0 : index
    %c0_49 = arith.constant 0 : index
    %c0_50 = arith.constant 0 : index
    %166 = vector.load %arg9[%c0_48, %c0_49, %c0_50] : memref<3x12x20xf32, #tpu.memory_space<vmem>>, vector<1x12x20xf32>
    %167 = vector.shape_cast %166 : vector<1x12x20xf32> to vector<12x20xf32>
    %168 = vector.extract_strided_slice %167 {offsets = [0, 0], sizes = [1, 20], strides = [1, 1]} : vector<12x20xf32> to vector<1x20xf32>
    %169 = vector.extract_strided_slice %167 {offsets = [1, 0], sizes = [1, 20], strides = [1, 1]} : vector<12x20xf32> to vector<1x20xf32>
    %170 = vector.extract_strided_slice %167 {offsets = [2, 0], sizes = [1, 20], strides = [1, 1]} : vector<12x20xf32> to vector<1x20xf32>
    %171 = vector.extract_strided_slice %167 {offsets = [3, 0], sizes = [1, 20], strides = [1, 1]} : vector<12x20xf32> to vector<1x20xf32>
    %172 = vector.extract_strided_slice %167 {offsets = [4, 0], sizes = [1, 20], strides = [1, 1]} : vector<12x20xf32> to vector<1x20xf32>
    %173 = vector.extract_strided_slice %167 {offsets = [5, 0], sizes = [1, 20], strides = [1, 1]} : vector<12x20xf32> to vector<1x20xf32>
    %174 = vector.extract_strided_slice %167 {offsets = [6, 0], sizes = [1, 20], strides = [1, 1]} : vector<12x20xf32> to vector<1x20xf32>
    %175 = vector.extract_strided_slice %167 {offsets = [7, 0], sizes = [1, 20], strides = [1, 1]} : vector<12x20xf32> to vector<1x20xf32>
    %176 = vector.extract_strided_slice %167 {offsets = [8, 0], sizes = [1, 20], strides = [1, 1]} : vector<12x20xf32> to vector<1x20xf32>
    %177 = vector.extract_strided_slice %167 {offsets = [9, 0], sizes = [1, 20], strides = [1, 1]} : vector<12x20xf32> to vector<1x20xf32>
    %178 = vector.extract_strided_slice %167 {offsets = [10, 0], sizes = [1, 20], strides = [1, 1]} : vector<12x20xf32> to vector<1x20xf32>
    %179 = vector.extract_strided_slice %167 {offsets = [11, 0], sizes = [1, 20], strides = [1, 1]} : vector<12x20xf32> to vector<1x20xf32>
    %c0_51 = arith.constant 0 : index
    %c0_52 = arith.constant 0 : index
    %c0_53 = arith.constant 0 : index
    %c0_54 = arith.constant 0 : index
    %180 = vector.load %arg11[%c0_51, %c0_52, %c0_53, %c0_54] : memref<3x4x20x20xbf16, #tpu.memory_space<vmem>>, vector<1x4x20x20xbf16>
    %181 = vector.shape_cast %180 : vector<1x4x20x20xbf16> to vector<4x20x20xbf16>
    %cst_55 = arith.constant dense<0.000000e+00> : vector<3xf32>
    %182 = vector.multi_reduction <add>, %136, %cst_55 [1] : vector<3x20xf32> to vector<3xf32>
    %183 = vector.shape_cast %182 : vector<3xf32> to vector<3x1xf32>
    %cst_56 = arith.constant 2.000000e+01 : f32
    %184 = vector.broadcast %cst_56 : f32 to vector<3x1xf32>
    %185 = arith.divf %183, %184 : vector<3x1xf32>
    %186 = vector.broadcast %185 : vector<3x1xf32> to vector<3x20xf32>
    %187 = arith.subf %136, %186 : vector<3x20xf32>
    %188 = arith.mulf %187, %187 : vector<3x20xf32>
    %cst_57 = arith.constant dense<0.000000e+00> : vector<3xf32>
    %189 = vector.multi_reduction <add>, %188, %cst_57 [1] : vector<3x20xf32> to vector<3xf32>
    %190 = vector.shape_cast %189 : vector<3xf32> to vector<3x1xf32>
    %cst_58 = arith.constant 2.000000e+01 : f32
    %191 = vector.broadcast %cst_58 : f32 to vector<3x1xf32>
    %192 = arith.divf %190, %191 : vector<3x1xf32>
    %193 = vector.broadcast %185 : vector<3x1xf32> to vector<3x20xf32>
    %194 = arith.subf %136, %193 : vector<3x20xf32>
    %cst_59 = arith.constant 9.99999974E-6 : f32
    %195 = vector.broadcast %cst_59 : f32 to vector<3x1xf32>
    %196 = arith.addf %192, %195 : vector<3x1xf32>
    %197 = math.rsqrt %196 : vector<3x1xf32>
    %198 = vector.broadcast %197 : vector<3x1xf32> to vector<3x20xf32>
    %199 = arith.mulf %194, %198 : vector<3x20xf32>
    %200 = vector.broadcast %168 : vector<1x20xf32> to vector<3x20xf32>
    %201 = arith.mulf %199, %200 : vector<3x20xf32>
    %202 = vector.broadcast %169 : vector<1x20xf32> to vector<3x20xf32>
    %203 = arith.addf %201, %202 : vector<3x20xf32>
    %204 = arith.truncf %203 : vector<3x20xf32> to vector<3x20xbf16>
    %205 = vector.extract_strided_slice %181 {offsets = [0, 0, 0], sizes = [1, 20, 20], strides = [1, 1, 1]} : vector<4x20x20xbf16> to vector<1x20x20xbf16>
    %206 = vector.shape_cast %205 : vector<1x20x20xbf16> to vector<20x20xbf16>
    %cst_60 = arith.constant dense<0.000000e+00> : vector<3x20xf32>
    %207 = tpu.matmul %204, %206, %cst_60 {dimension_numbers = #tpu.dot_dimension_numbers<[1], [0], [0], [1], [0, 0, 1, 1], [], []>} : vector<3x20xbf16>, vector<20x20xbf16>, vector<3x20xf32> -> vector<3x20xf32>
    %cst_61 = arith.constant dense<0.000000e+00> : vector<3xf32>
    %208 = vector.multi_reduction <add>, %207, %cst_61 [1] : vector<3x20xf32> to vector<3xf32>
    %209 = vector.shape_cast %208 : vector<3xf32> to vector<3x1xf32>
    %cst_62 = arith.constant 2.000000e+01 : f32
    %210 = vector.broadcast %cst_62 : f32 to vector<3x1xf32>
    %211 = arith.divf %209, %210 : vector<3x1xf32>
    %212 = vector.broadcast %211 : vector<3x1xf32> to vector<3x20xf32>
    %213 = arith.subf %207, %212 : vector<3x20xf32>
    %214 = arith.mulf %213, %213 : vector<3x20xf32>
    %cst_63 = arith.constant dense<0.000000e+00> : vector<3xf32>
    %215 = vector.multi_reduction <add>, %214, %cst_63 [1] : vector<3x20xf32> to vector<3xf32>
    %216 = vector.shape_cast %215 : vector<3xf32> to vector<3x1xf32>
    %cst_64 = arith.constant 2.000000e+01 : f32
    %217 = vector.broadcast %cst_64 : f32 to vector<3x1xf32>
    %218 = arith.divf %216, %217 : vector<3x1xf32>
    %219 = vector.broadcast %211 : vector<3x1xf32> to vector<3x20xf32>
    %220 = arith.subf %207, %219 : vector<3x20xf32>
    %cst_65 = arith.constant 9.99999974E-6 : f32
    %221 = vector.broadcast %cst_65 : f32 to vector<3x1xf32>
    %222 = arith.addf %218, %221 : vector<3x1xf32>
    %223 = math.rsqrt %222 : vector<3x1xf32>
    %224 = vector.broadcast %223 : vector<3x1xf32> to vector<3x20xf32>
    %225 = arith.mulf %220, %224 : vector<3x20xf32>
    %226 = vector.broadcast %170 : vector<1x20xf32> to vector<3x20xf32>
    %227 = arith.mulf %225, %226 : vector<3x20xf32>
    %228 = vector.broadcast %171 : vector<1x20xf32> to vector<3x20xf32>
    %229 = arith.addf %227, %228 : vector<3x20xf32>
    %230 = vector.extract_strided_slice %181 {offsets = [1, 0, 0], sizes = [1, 20, 20], strides = [1, 1, 1]} : vector<4x20x20xbf16> to vector<1x20x20xbf16>
    %231 = vector.shape_cast %230 : vector<1x20x20xbf16> to vector<20x20xbf16>
    %cst_66 = arith.constant dense<0.000000e+00> : vector<3x20xf32>
    %232 = tpu.matmul %204, %231, %cst_66 {dimension_numbers = #tpu.dot_dimension_numbers<[1], [0], [0], [1], [0, 0, 1, 1], [], []>} : vector<3x20xbf16>, vector<20x20xbf16>, vector<3x20xf32> -> vector<3x20xf32>
    %cst_67 = arith.constant dense<0.000000e+00> : vector<3xf32>
    %233 = vector.multi_reduction <add>, %232, %cst_67 [1] : vector<3x20xf32> to vector<3xf32>
    %234 = vector.shape_cast %233 : vector<3xf32> to vector<3x1xf32>
    %cst_68 = arith.constant 2.000000e+01 : f32
    %235 = vector.broadcast %cst_68 : f32 to vector<3x1xf32>
    %236 = arith.divf %234, %235 : vector<3x1xf32>
    %237 = vector.broadcast %236 : vector<3x1xf32> to vector<3x20xf32>
    %238 = arith.subf %232, %237 : vector<3x20xf32>
    %239 = arith.mulf %238, %238 : vector<3x20xf32>
    %cst_69 = arith.constant dense<0.000000e+00> : vector<3xf32>
    %240 = vector.multi_reduction <add>, %239, %cst_69 [1] : vector<3x20xf32> to vector<3xf32>
    %241 = vector.shape_cast %240 : vector<3xf32> to vector<3x1xf32>
    %cst_70 = arith.constant 2.000000e+01 : f32
    %242 = vector.broadcast %cst_70 : f32 to vector<3x1xf32>
    %243 = arith.divf %241, %242 : vector<3x1xf32>
    %244 = vector.broadcast %236 : vector<3x1xf32> to vector<3x20xf32>
    %245 = arith.subf %232, %244 : vector<3x20xf32>
    %cst_71 = arith.constant 9.99999974E-6 : f32
    %246 = vector.broadcast %cst_71 : f32 to vector<3x1xf32>
    %247 = arith.addf %243, %246 : vector<3x1xf32>
    %248 = math.rsqrt %247 : vector<3x1xf32>
    %249 = vector.broadcast %248 : vector<3x1xf32> to vector<3x20xf32>
    %250 = arith.mulf %245, %249 : vector<3x20xf32>
    %251 = vector.broadcast %172 : vector<1x20xf32> to vector<3x20xf32>
    %252 = arith.mulf %250, %251 : vector<3x20xf32>
    %253 = vector.broadcast %173 : vector<1x20xf32> to vector<3x20xf32>
    %254 = arith.addf %252, %253 : vector<3x20xf32>
    %255 = vector.extract_strided_slice %181 {offsets = [2, 0, 0], sizes = [1, 20, 20], strides = [1, 1, 1]} : vector<4x20x20xbf16> to vector<1x20x20xbf16>
    %256 = vector.shape_cast %255 : vector<1x20x20xbf16> to vector<20x20xbf16>
    %cst_72 = arith.constant dense<0.000000e+00> : vector<3x20xf32>
    %257 = tpu.matmul %204, %256, %cst_72 {dimension_numbers = #tpu.dot_dimension_numbers<[1], [0], [0], [1], [0, 0, 1, 1], [], []>} : vector<3x20xbf16>, vector<20x20xbf16>, vector<3x20xf32> -> vector<3x20xf32>
    %258 = arith.truncf %254 : vector<3x20xf32> to vector<3x20xbf16>
    %cst_73 = arith.constant 0.000000e+00 : f32
    %259 = vector.broadcast %cst_73 : f32 to vector<3x20xf32>
    %260 = vector.broadcast %144 : vector<1x20xf32> to vector<3x20xf32>
    %261 = arith.mulf %229, %260 : vector<3x20xf32>
    %262 = arith.truncf %261 : vector<3x20xf32> to vector<3x20xbf16>
    %cst_74 = arith.constant dense<0.000000e+00> : vector<3x3xf32>
    %263 = tpu.matmul %262, %258, %cst_74 {dimension_numbers = #tpu.dot_dimension_numbers<[1], [1], [0], [0], [0, 0, 1, 0], [], []>} : vector<3x20xbf16>, vector<3x20xbf16>, vector<3x3xf32> -> vector<3x3xf32>
    %cst_75 = arith.constant 0.44721359 : f32
    %264 = vector.broadcast %cst_75 : f32 to vector<3x3xf32>
    %265 = arith.mulf %263, %264 : vector<3x3xf32>
    %cst_76 = arith.constant dense<0xFF800000> : vector<3xf32>
    %266 = vector.multi_reduction <maximumf>, %265, %cst_76 [1] : vector<3x3xf32> to vector<3xf32>
    %267 = vector.shape_cast %266 : vector<3xf32> to vector<3x1xf32>
    %268 = vector.broadcast %267 : vector<3x1xf32> to vector<3x3xf32>
    %269 = arith.subf %265, %268 : vector<3x3xf32>
    %270 = math.exp %269 : vector<3x3xf32>
    %cst_77 = arith.constant dense<0.000000e+00> : vector<3xf32>
    %271 = vector.multi_reduction <add>, %270, %cst_77 [1] : vector<3x3xf32> to vector<3xf32>
    %272 = vector.shape_cast %271 : vector<3xf32> to vector<3x1xf32>
    %273 = vector.broadcast %272 : vector<3x1xf32> to vector<3x3xf32>
    %274 = arith.divf %270, %273 : vector<3x3xf32>
    %275 = vector.broadcast %144 : vector<1x20xf32> to vector<3x20xf32>
    %276 = arith.mulf %257, %275 : vector<3x20xf32>
    %277 = arith.truncf %276 : vector<3x20xf32> to vector<3x20xbf16>
    %278 = arith.truncf %274 : vector<3x3xf32> to vector<3x3xbf16>
    %cst_78 = arith.constant dense<0.000000e+00> : vector<3x20xf32>
    %279 = tpu.matmul %278, %277, %cst_78 {dimension_numbers = #tpu.dot_dimension_numbers<[1], [0], [0], [1], [0, 0, 1, 1], [], []>} : vector<3x3xbf16>, vector<3x20xbf16>, vector<3x20xf32> -> vector<3x20xf32>
    %280 = arith.addf %259, %279 : vector<3x20xf32>
    %281 = vector.broadcast %151 : vector<1x20xf32> to vector<3x20xf32>
    %282 = arith.mulf %229, %281 : vector<3x20xf32>
    %283 = arith.truncf %282 : vector<3x20xf32> to vector<3x20xbf16>
    %cst_79 = arith.constant dense<0.000000e+00> : vector<3x3xf32>
    %284 = tpu.matmul %283, %258, %cst_79 {dimension_numbers = #tpu.dot_dimension_numbers<[1], [1], [0], [0], [0, 0, 1, 0], [], []>} : vector<3x20xbf16>, vector<3x20xbf16>, vector<3x3xf32> -> vector<3x3xf32>
    %cst_80 = arith.constant 0.44721359 : f32
    %285 = vector.broadcast %cst_80 : f32 to vector<3x3xf32>
    %286 = arith.mulf %284, %285 : vector<3x3xf32>
    %cst_81 = arith.constant dense<0xFF800000> : vector<3xf32>
    %287 = vector.multi_reduction <maximumf>, %286, %cst_81 [1] : vector<3x3xf32> to vector<3xf32>
    %288 = vector.shape_cast %287 : vector<3xf32> to vector<3x1xf32>
    %289 = vector.broadcast %288 : vector<3x1xf32> to vector<3x3xf32>
    %290 = arith.subf %286, %289 : vector<3x3xf32>
    %291 = math.exp %290 : vector<3x3xf32>
    %cst_82 = arith.constant dense<0.000000e+00> : vector<3xf32>
    %292 = vector.multi_reduction <add>, %291, %cst_82 [1] : vector<3x3xf32> to vector<3xf32>
    %293 = vector.shape_cast %292 : vector<3xf32> to vector<3x1xf32>
    %294 = vector.broadcast %293 : vector<3x1xf32> to vector<3x3xf32>
    %295 = arith.divf %291, %294 : vector<3x3xf32>
    %296 = vector.broadcast %151 : vector<1x20xf32> to vector<3x20xf32>
    %297 = arith.mulf %257, %296 : vector<3x20xf32>
    %298 = arith.truncf %297 : vector<3x20xf32> to vector<3x20xbf16>
    %299 = arith.truncf %295 : vector<3x3xf32> to vector<3x3xbf16>
    %cst_83 = arith.constant dense<0.000000e+00> : vector<3x20xf32>
    %300 = tpu.matmul %299, %298, %cst_83 {dimension_numbers = #tpu.dot_dimension_numbers<[1], [0], [0], [1], [0, 0, 1, 1], [], []>} : vector<3x3xbf16>, vector<3x20xbf16>, vector<3x20xf32> -> vector<3x20xf32>
    %301 = arith.addf %280, %300 : vector<3x20xf32>
    %302 = vector.broadcast %158 : vector<1x20xf32> to vector<3x20xf32>
    %303 = arith.mulf %229, %302 : vector<3x20xf32>
    %304 = arith.truncf %303 : vector<3x20xf32> to vector<3x20xbf16>
    %cst_84 = arith.constant dense<0.000000e+00> : vector<3x3xf32>
    %305 = tpu.matmul %304, %258, %cst_84 {dimension_numbers = #tpu.dot_dimension_numbers<[1], [1], [0], [0], [0, 0, 1, 0], [], []>} : vector<3x20xbf16>, vector<3x20xbf16>, vector<3x3xf32> -> vector<3x3xf32>
    %cst_85 = arith.constant 0.44721359 : f32
    %306 = vector.broadcast %cst_85 : f32 to vector<3x3xf32>
    %307 = arith.mulf %305, %306 : vector<3x3xf32>
    %cst_86 = arith.constant dense<0xFF800000> : vector<3xf32>
    %308 = vector.multi_reduction <maximumf>, %307, %cst_86 [1] : vector<3x3xf32> to vector<3xf32>
    %309 = vector.shape_cast %308 : vector<3xf32> to vector<3x1xf32>
    %310 = vector.broadcast %309 : vector<3x1xf32> to vector<3x3xf32>
    %311 = arith.subf %307, %310 : vector<3x3xf32>
    %312 = math.exp %311 : vector<3x3xf32>
    %cst_87 = arith.constant dense<0.000000e+00> : vector<3xf32>
    %313 = vector.multi_reduction <add>, %312, %cst_87 [1] : vector<3x3xf32> to vector<3xf32>
    %314 = vector.shape_cast %313 : vector<3xf32> to vector<3x1xf32>
    %315 = vector.broadcast %314 : vector<3x1xf32> to vector<3x3xf32>
    %316 = arith.divf %312, %315 : vector<3x3xf32>
    %317 = vector.broadcast %158 : vector<1x20xf32> to vector<3x20xf32>
    %318 = arith.mulf %257, %317 : vector<3x20xf32>
    %319 = arith.truncf %318 : vector<3x20xf32> to vector<3x20xbf16>
    %320 = arith.truncf %316 : vector<3x3xf32> to vector<3x3xbf16>
    %cst_88 = arith.constant dense<0.000000e+00> : vector<3x20xf32>
    %321 = tpu.matmul %320, %319, %cst_88 {dimension_numbers = #tpu.dot_dimension_numbers<[1], [0], [0], [1], [0, 0, 1, 1], [], []>} : vector<3x3xbf16>, vector<3x20xbf16>, vector<3x20xf32> -> vector<3x20xf32>
    %322 = arith.addf %301, %321 : vector<3x20xf32>
    %323 = vector.broadcast %165 : vector<1x20xf32> to vector<3x20xf32>
    %324 = arith.mulf %229, %323 : vector<3x20xf32>
    %325 = arith.truncf %324 : vector<3x20xf32> to vector<3x20xbf16>
    %cst_89 = arith.constant dense<0.000000e+00> : vector<3x3xf32>
    %326 = tpu.matmul %325, %258, %cst_89 {dimension_numbers = #tpu.dot_dimension_numbers<[1], [1], [0], [0], [0, 0, 1, 0], [], []>} : vector<3x20xbf16>, vector<3x20xbf16>, vector<3x3xf32> -> vector<3x3xf32>
    %cst_90 = arith.constant 0.44721359 : f32
    %327 = vector.broadcast %cst_90 : f32 to vector<3x3xf32>
    %328 = arith.mulf %326, %327 : vector<3x3xf32>
    %cst_91 = arith.constant dense<0xFF800000> : vector<3xf32>
    %329 = vector.multi_reduction <maximumf>, %328, %cst_91 [1] : vector<3x3xf32> to vector<3xf32>
    %330 = vector.shape_cast %329 : vector<3xf32> to vector<3x1xf32>
    %331 = vector.broadcast %330 : vector<3x1xf32> to vector<3x3xf32>
    %332 = arith.subf %328, %331 : vector<3x3xf32>
    %333 = math.exp %332 : vector<3x3xf32>
    %cst_92 = arith.constant dense<0.000000e+00> : vector<3xf32>
    %334 = vector.multi_reduction <add>, %333, %cst_92 [1] : vector<3x3xf32> to vector<3xf32>
    %335 = vector.shape_cast %334 : vector<3xf32> to vector<3x1xf32>
    %336 = vector.broadcast %335 : vector<3x1xf32> to vector<3x3xf32>
    %337 = arith.divf %333, %336 : vector<3x3xf32>
    %338 = vector.broadcast %165 : vector<1x20xf32> to vector<3x20xf32>
    %339 = arith.mulf %257, %338 : vector<3x20xf32>
    %340 = arith.truncf %339 : vector<3x20xf32> to vector<3x20xbf16>
    %341 = arith.truncf %337 : vector<3x3xf32> to vector<3x3xbf16>
    %cst_93 = arith.constant dense<0.000000e+00> : vector<3x20xf32>
    %342 = tpu.matmul %341, %340, %cst_93 {dimension_numbers = #tpu.dot_dimension_numbers<[1], [0], [0], [1], [0, 0, 1, 1], [], []>} : vector<3x3xbf16>, vector<3x20xbf16>, vector<3x20xf32> -> vector<3x20xf32>
    %343 = arith.addf %322, %342 : vector<3x20xf32>
    %344 = arith.truncf %343 : vector<3x20xf32> to vector<3x20xbf16>
    %345 = vector.extract_strided_slice %181 {offsets = [3, 0, 0], sizes = [1, 20, 20], strides = [1, 1, 1]} : vector<4x20x20xbf16> to vector<1x20x20xbf16>
    %346 = vector.shape_cast %345 : vector<1x20x20xbf16> to vector<20x20xbf16>
    %cst_94 = arith.constant dense<0.000000e+00> : vector<3x20xf32>
    %347 = tpu.matmul %344, %346, %cst_94 {dimension_numbers = #tpu.dot_dimension_numbers<[1], [0], [0], [1], [0, 0, 1, 1], [], []>} : vector<3x20xbf16>, vector<20x20xbf16>, vector<3x20xf32> -> vector<3x20xf32>
    %348 = vector.broadcast %174 : vector<1x20xf32> to vector<3x20xf32>
    %349 = arith.addf %347, %348 : vector<3x20xf32>
    %350 = vector.broadcast %175 : vector<1x20xf32> to vector<3x20xf32>
    %351 = arith.mulf %350, %349 : vector<3x20xf32>
    %352 = arith.addf %136, %351 : vector<3x20xf32>
    %cst_95 = arith.constant dense<0.000000e+00> : vector<3xf32>
    %353 = vector.multi_reduction <add>, %352, %cst_95 [1] : vector<3x20xf32> to vector<3xf32>
    %354 = vector.shape_cast %353 : vector<3xf32> to vector<3x1xf32>
    %cst_96 = arith.constant 2.000000e+01 : f32
    %355 = vector.broadcast %cst_96 : f32 to vector<3x1xf32>
    %356 = arith.divf %354, %355 : vector<3x1xf32>
    %357 = vector.broadcast %356 : vector<3x1xf32> to vector<3x20xf32>
    %358 = arith.subf %352, %357 : vector<3x20xf32>
    %359 = arith.mulf %358, %358 : vector<3x20xf32>
    %cst_97 = arith.constant dense<0.000000e+00> : vector<3xf32>
    %360 = vector.multi_reduction <add>, %359, %cst_97 [1] : vector<3x20xf32> to vector<3xf32>
    %361 = vector.shape_cast %360 : vector<3xf32> to vector<3x1xf32>
    %cst_98 = arith.constant 2.000000e+01 : f32
    %362 = vector.broadcast %cst_98 : f32 to vector<3x1xf32>
    %363 = arith.divf %361, %362 : vector<3x1xf32>
    %364 = vector.broadcast %356 : vector<3x1xf32> to vector<3x20xf32>
    %365 = arith.subf %352, %364 : vector<3x20xf32>
    %cst_99 = arith.constant 9.99999974E-6 : f32
    %366 = vector.broadcast %cst_99 : f32 to vector<3x1xf32>
    %367 = arith.addf %363, %366 : vector<3x1xf32>
    %368 = math.rsqrt %367 : vector<3x1xf32>
    %369 = vector.broadcast %368 : vector<3x1xf32> to vector<3x20xf32>
    %370 = arith.mulf %365, %369 : vector<3x20xf32>
    %371 = vector.broadcast %176 : vector<1x20xf32> to vector<3x20xf32>
    %372 = arith.mulf %370, %371 : vector<3x20xf32>
    %373 = vector.broadcast %177 : vector<1x20xf32> to vector<3x20xf32>
    %374 = arith.addf %372, %373 : vector<3x20xf32>
    %375 = arith.truncf %374 : vector<3x20xf32> to vector<3x20xbf16>
    %c0_100 = arith.constant 0 : index
    %c0_101 = arith.constant 0 : index
    %c0_102 = arith.constant 0 : index
    %376 = vector.load %arg12[%c0_100, %c0_101, %c0_102] : memref<3x20x80xbf16, #tpu.memory_space<vmem>>, vector<1x20x80xbf16>
    %377 = vector.shape_cast %376 : vector<1x20x80xbf16> to vector<20x80xbf16>
    %cst_103 = arith.constant dense<0.000000e+00> : vector<3x80xf32>
    %378 = tpu.matmul %375, %377, %cst_103 {dimension_numbers = #tpu.dot_dimension_numbers<[1], [0], [0], [1], [0, 0, 1, 1], [], []>} : vector<3x20xbf16>, vector<20x80xbf16>, vector<3x80xf32> -> vector<3x80xf32>
    %c0_104 = arith.constant 0 : index
    %c0_105 = arith.constant 0 : index
    %c0_106 = arith.constant 0 : index
    %379 = vector.load %arg10[%c0_104, %c0_105, %c0_106] : memref<3x1x80xf32, #tpu.memory_space<vmem>>, vector<1x1x80xf32>
    %380 = vector.shape_cast %379 : vector<1x1x80xf32> to vector<1x80xf32>
    %381 = vector.broadcast %380 : vector<1x80xf32> to vector<3x80xf32>
    %382 = arith.addf %378, %381 : vector<3x80xf32>
    %cst_107 = arith.constant 5.000000e-01 : f32
    %383 = vector.broadcast %cst_107 : f32 to vector<3x80xf32>
    %384 = arith.mulf %383, %382 : vector<3x80xf32>
    %cst_108 = arith.constant 0.707106769 : f32
    %385 = vector.broadcast %cst_108 : f32 to vector<3x80xf32>
    %386 = arith.mulf %382, %385 : vector<3x80xf32>
    %cst_109 = arith.constant 0.000000e+00 : f32
    %387 = vector.broadcast %cst_109 : f32 to vector<3x80xf32>
    %388 = arith.cmpf oge, %386, %387 : vector<3x80xf32>
    %cst_110 = arith.constant 1.000000e+00 : f32
    %cst_111 = arith.constant -1.000000e+00 : f32
    %389 = vector.broadcast %cst_110 : f32 to vector<3x80xf32>
    %390 = vector.broadcast %cst_111 : f32 to vector<3x80xf32>
    %391 = arith.select %388, %389, %390 : vector<3x80xi1>, vector<3x80xf32>
    %392 = math.absf %386 : vector<3x80xf32>
    %cst_112 = arith.constant 0.327591091 : f32
    %393 = vector.broadcast %cst_112 : f32 to vector<3x80xf32>
    %394 = arith.mulf %393, %392 : vector<3x80xf32>
    %cst_113 = arith.constant 1.000000e+00 : f32
    %395 = vector.broadcast %cst_113 : f32 to vector<3x80xf32>
    %396 = arith.addf %395, %394 : vector<3x80xf32>
    %cst_114 = arith.constant 1.000000e+00 : f32
    %397 = vector.broadcast %cst_114 : f32 to vector<3x80xf32>
    %398 = arith.divf %397, %396 : vector<3x80xf32>
    %cst_115 = arith.constant 1.06140542 : f32
    %399 = vector.broadcast %cst_115 : f32 to vector<3x80xf32>
    %400 = arith.mulf %399, %398 : vector<3x80xf32>
    %cst_116 = arith.constant -1.45315206 : f32
    %401 = vector.broadcast %cst_116 : f32 to vector<3x80xf32>
    %402 = arith.addf %400, %401 : vector<3x80xf32>
    %403 = arith.mulf %402, %398 : vector<3x80xf32>
    %cst_117 = arith.constant 1.42141378 : f32
    %404 = vector.broadcast %cst_117 : f32 to vector<3x80xf32>
    %405 = arith.addf %403, %404 : vector<3x80xf32>
    %406 = arith.mulf %405, %398 : vector<3x80xf32>
    %cst_118 = arith.constant -0.284496725 : f32
    %407 = vector.broadcast %cst_118 : f32 to vector<3x80xf32>
    %408 = arith.addf %406, %407 : vector<3x80xf32>
    %409 = arith.mulf %408, %398 : vector<3x80xf32>
    %cst_119 = arith.constant 0.254829586 : f32
    %410 = vector.broadcast %cst_119 : f32 to vector<3x80xf32>
    %411 = arith.addf %409, %410 : vector<3x80xf32>
    %412 = arith.mulf %411, %398 : vector<3x80xf32>
    %cst_120 = arith.constant 0.000000e+00 : f32
    %413 = vector.broadcast %cst_120 : f32 to vector<3x80xf32>
    %414 = arith.subf %413, %392 : vector<3x80xf32>
    %415 = arith.mulf %414, %392 : vector<3x80xf32>
    %416 = math.exp %415 : vector<3x80xf32>
    %417 = arith.mulf %412, %416 : vector<3x80xf32>
    %cst_121 = arith.constant 1.000000e+00 : f32
    %418 = vector.broadcast %cst_121 : f32 to vector<3x80xf32>
    %419 = arith.subf %418, %417 : vector<3x80xf32>
    %420 = arith.mulf %391, %419 : vector<3x80xf32>
    %cst_122 = arith.constant 1.000000e+00 : f32
    %421 = vector.broadcast %cst_122 : f32 to vector<3x80xf32>
    %422 = arith.addf %421, %420 : vector<3x80xf32>
    %423 = arith.mulf %384, %422 : vector<3x80xf32>
    %424 = arith.truncf %423 : vector<3x80xf32> to vector<3x80xbf16>
    %c0_123 = arith.constant 0 : index
    %c0_124 = arith.constant 0 : index
    %c0_125 = arith.constant 0 : index
    %425 = vector.load %arg13[%c0_123, %c0_124, %c0_125] : memref<3x80x20xbf16, #tpu.memory_space<vmem>>, vector<1x80x20xbf16>
    %426 = vector.shape_cast %425 : vector<1x80x20xbf16> to vector<80x20xbf16>
    %cst_126 = arith.constant dense<0.000000e+00> : vector<3x20xf32>
    %427 = tpu.matmul %424, %426, %cst_126 {dimension_numbers = #tpu.dot_dimension_numbers<[1], [0], [0], [1], [0, 0, 1, 1], [], []>} : vector<3x80xbf16>, vector<80x20xbf16>, vector<3x20xf32> -> vector<3x20xf32>
    %428 = vector.broadcast %178 : vector<1x20xf32> to vector<3x20xf32>
    %429 = arith.addf %427, %428 : vector<3x20xf32>
    %430 = vector.broadcast %179 : vector<1x20xf32> to vector<3x20xf32>
    %431 = arith.mulf %430, %429 : vector<3x20xf32>
    %432 = arith.addf %352, %431 : vector<3x20xf32>
    %c1_127 = arith.constant 1 : index
    %c0_128 = arith.constant 0 : index
    %c0_129 = arith.constant 0 : index
    %433 = vector.load %arg9[%c1_127, %c0_128, %c0_129] : memref<3x12x20xf32, #tpu.memory_space<vmem>>, vector<1x12x20xf32>
    %434 = vector.shape_cast %433 : vector<1x12x20xf32> to vector<12x20xf32>
    %435 = vector.extract_strided_slice %434 {offsets = [0, 0], sizes = [1, 20], strides = [1, 1]} : vector<12x20xf32> to vector<1x20xf32>
    %436 = vector.extract_strided_slice %434 {offsets = [1, 0], sizes = [1, 20], strides = [1, 1]} : vector<12x20xf32> to vector<1x20xf32>
    %437 = vector.extract_strided_slice %434 {offsets = [2, 0], sizes = [1, 20], strides = [1, 1]} : vector<12x20xf32> to vector<1x20xf32>
    %438 = vector.extract_strided_slice %434 {offsets = [3, 0], sizes = [1, 20], strides = [1, 1]} : vector<12x20xf32> to vector<1x20xf32>
    %439 = vector.extract_strided_slice %434 {offsets = [4, 0], sizes = [1, 20], strides = [1, 1]} : vector<12x20xf32> to vector<1x20xf32>
    %440 = vector.extract_strided_slice %434 {offsets = [5, 0], sizes = [1, 20], strides = [1, 1]} : vector<12x20xf32> to vector<1x20xf32>
    %441 = vector.extract_strided_slice %434 {offsets = [6, 0], sizes = [1, 20], strides = [1, 1]} : vector<12x20xf32> to vector<1x20xf32>
    %442 = vector.extract_strided_slice %434 {offsets = [7, 0], sizes = [1, 20], strides = [1, 1]} : vector<12x20xf32> to vector<1x20xf32>
    %443 = vector.extract_strided_slice %434 {offsets = [8, 0], sizes = [1, 20], strides = [1, 1]} : vector<12x20xf32> to vector<1x20xf32>
    %444 = vector.extract_strided_slice %434 {offsets = [9, 0], sizes = [1, 20], strides = [1, 1]} : vector<12x20xf32> to vector<1x20xf32>
    %445 = vector.extract_strided_slice %434 {offsets = [10, 0], sizes = [1, 20], strides = [1, 1]} : vector<12x20xf32> to vector<1x20xf32>
    %446 = vector.extract_strided_slice %434 {offsets = [11, 0], sizes = [1, 20], strides = [1, 1]} : vector<12x20xf32> to vector<1x20xf32>
    %c1_130 = arith.constant 1 : index
    %c0_131 = arith.constant 0 : index
    %c0_132 = arith.constant 0 : index
    %c0_133 = arith.constant 0 : index
    %447 = vector.load %arg11[%c1_130, %c0_131, %c0_132, %c0_133] : memref<3x4x20x20xbf16, #tpu.memory_space<vmem>>, vector<1x4x20x20xbf16>
    %448 = vector.shape_cast %447 : vector<1x4x20x20xbf16> to vector<4x20x20xbf16>
    %cst_134 = arith.constant dense<0.000000e+00> : vector<3xf32>
    %449 = vector.multi_reduction <add>, %432, %cst_134 [1] : vector<3x20xf32> to vector<3xf32>
    %450 = vector.shape_cast %449 : vector<3xf32> to vector<3x1xf32>
    %cst_135 = arith.constant 2.000000e+01 : f32
    %451 = vector.broadcast %cst_135 : f32 to vector<3x1xf32>
    %452 = arith.divf %450, %451 : vector<3x1xf32>
    %453 = vector.broadcast %452 : vector<3x1xf32> to vector<3x20xf32>
    %454 = arith.subf %432, %453 : vector<3x20xf32>
    %455 = arith.mulf %454, %454 : vector<3x20xf32>
    %cst_136 = arith.constant dense<0.000000e+00> : vector<3xf32>
    %456 = vector.multi_reduction <add>, %455, %cst_136 [1] : vector<3x20xf32> to vector<3xf32>
    %457 = vector.shape_cast %456 : vector<3xf32> to vector<3x1xf32>
    %cst_137 = arith.constant 2.000000e+01 : f32
    %458 = vector.broadcast %cst_137 : f32 to vector<3x1xf32>
    %459 = arith.divf %457, %458 : vector<3x1xf32>
    %460 = vector.broadcast %452 : vector<3x1xf32> to vector<3x20xf32>
    %461 = arith.subf %432, %460 : vector<3x20xf32>
    %cst_138 = arith.constant 9.99999974E-6 : f32
    %462 = vector.broadcast %cst_138 : f32 to vector<3x1xf32>
    %463 = arith.addf %459, %462 : vector<3x1xf32>
    %464 = math.rsqrt %463 : vector<3x1xf32>
    %465 = vector.broadcast %464 : vector<3x1xf32> to vector<3x20xf32>
    %466 = arith.mulf %461, %465 : vector<3x20xf32>
    %467 = vector.broadcast %435 : vector<1x20xf32> to vector<3x20xf32>
    %468 = arith.mulf %466, %467 : vector<3x20xf32>
    %469 = vector.broadcast %436 : vector<1x20xf32> to vector<3x20xf32>
    %470 = arith.addf %468, %469 : vector<3x20xf32>
    %471 = arith.truncf %470 : vector<3x20xf32> to vector<3x20xbf16>
    %472 = vector.extract_strided_slice %448 {offsets = [0, 0, 0], sizes = [1, 20, 20], strides = [1, 1, 1]} : vector<4x20x20xbf16> to vector<1x20x20xbf16>
    %473 = vector.shape_cast %472 : vector<1x20x20xbf16> to vector<20x20xbf16>
    %cst_139 = arith.constant dense<0.000000e+00> : vector<3x20xf32>
    %474 = tpu.matmul %471, %473, %cst_139 {dimension_numbers = #tpu.dot_dimension_numbers<[1], [0], [0], [1], [0, 0, 1, 1], [], []>} : vector<3x20xbf16>, vector<20x20xbf16>, vector<3x20xf32> -> vector<3x20xf32>
    %cst_140 = arith.constant dense<0.000000e+00> : vector<3xf32>
    %475 = vector.multi_reduction <add>, %474, %cst_140 [1] : vector<3x20xf32> to vector<3xf32>
    %476 = vector.shape_cast %475 : vector<3xf32> to vector<3x1xf32>
    %cst_141 = arith.constant 2.000000e+01 : f32
    %477 = vector.broadcast %cst_141 : f32 to vector<3x1xf32>
    %478 = arith.divf %476, %477 : vector<3x1xf32>
    %479 = vector.broadcast %478 : vector<3x1xf32> to vector<3x20xf32>
    %480 = arith.subf %474, %479 : vector<3x20xf32>
    %481 = arith.mulf %480, %480 : vector<3x20xf32>
    %cst_142 = arith.constant dense<0.000000e+00> : vector<3xf32>
    %482 = vector.multi_reduction <add>, %481, %cst_142 [1] : vector<3x20xf32> to vector<3xf32>
    %483 = vector.shape_cast %482 : vector<3xf32> to vector<3x1xf32>
    %cst_143 = arith.constant 2.000000e+01 : f32
    %484 = vector.broadcast %cst_143 : f32 to vector<3x1xf32>
    %485 = arith.divf %483, %484 : vector<3x1xf32>
    %486 = vector.broadcast %478 : vector<3x1xf32> to vector<3x20xf32>
    %487 = arith.subf %474, %486 : vector<3x20xf32>
    %cst_144 = arith.constant 9.99999974E-6 : f32
    %488 = vector.broadcast %cst_144 : f32 to vector<3x1xf32>
    %489 = arith.addf %485, %488 : vector<3x1xf32>
    %490 = math.rsqrt %489 : vector<3x1xf32>
    %491 = vector.broadcast %490 : vector<3x1xf32> to vector<3x20xf32>
    %492 = arith.mulf %487, %491 : vector<3x20xf32>
    %493 = vector.broadcast %437 : vector<1x20xf32> to vector<3x20xf32>
    %494 = arith.mulf %492, %493 : vector<3x20xf32>
    %495 = vector.broadcast %438 : vector<1x20xf32> to vector<3x20xf32>
    %496 = arith.addf %494, %495 : vector<3x20xf32>
    %497 = vector.extract_strided_slice %448 {offsets = [1, 0, 0], sizes = [1, 20, 20], strides = [1, 1, 1]} : vector<4x20x20xbf16> to vector<1x20x20xbf16>
    %498 = vector.shape_cast %497 : vector<1x20x20xbf16> to vector<20x20xbf16>
    %cst_145 = arith.constant dense<0.000000e+00> : vector<3x20xf32>
    %499 = tpu.matmul %471, %498, %cst_145 {dimension_numbers = #tpu.dot_dimension_numbers<[1], [0], [0], [1], [0, 0, 1, 1], [], []>} : vector<3x20xbf16>, vector<20x20xbf16>, vector<3x20xf32> -> vector<3x20xf32>
    %cst_146 = arith.constant dense<0.000000e+00> : vector<3xf32>
    %500 = vector.multi_reduction <add>, %499, %cst_146 [1] : vector<3x20xf32> to vector<3xf32>
    %501 = vector.shape_cast %500 : vector<3xf32> to vector<3x1xf32>
    %cst_147 = arith.constant 2.000000e+01 : f32
    %502 = vector.broadcast %cst_147 : f32 to vector<3x1xf32>
    %503 = arith.divf %501, %502 : vector<3x1xf32>
    %504 = vector.broadcast %503 : vector<3x1xf32> to vector<3x20xf32>
    %505 = arith.subf %499, %504 : vector<3x20xf32>
    %506 = arith.mulf %505, %505 : vector<3x20xf32>
    %cst_148 = arith.constant dense<0.000000e+00> : vector<3xf32>
    %507 = vector.multi_reduction <add>, %506, %cst_148 [1] : vector<3x20xf32> to vector<3xf32>
    %508 = vector.shape_cast %507 : vector<3xf32> to vector<3x1xf32>
    %cst_149 = arith.constant 2.000000e+01 : f32
    %509 = vector.broadcast %cst_149 : f32 to vector<3x1xf32>
    %510 = arith.divf %508, %509 : vector<3x1xf32>
    %511 = vector.broadcast %503 : vector<3x1xf32> to vector<3x20xf32>
    %512 = arith.subf %499, %511 : vector<3x20xf32>
    %cst_150 = arith.constant 9.99999974E-6 : f32
    %513 = vector.broadcast %cst_150 : f32 to vector<3x1xf32>
    %514 = arith.addf %510, %513 : vector<3x1xf32>
    %515 = math.rsqrt %514 : vector<3x1xf32>
    %516 = vector.broadcast %515 : vector<3x1xf32> to vector<3x20xf32>
    %517 = arith.mulf %512, %516 : vector<3x20xf32>
    %518 = vector.broadcast %439 : vector<1x20xf32> to vector<3x20xf32>
    %519 = arith.mulf %517, %518 : vector<3x20xf32>
    %520 = vector.broadcast %440 : vector<1x20xf32> to vector<3x20xf32>
    %521 = arith.addf %519, %520 : vector<3x20xf32>
    %522 = vector.extract_strided_slice %448 {offsets = [2, 0, 0], sizes = [1, 20, 20], strides = [1, 1, 1]} : vector<4x20x20xbf16> to vector<1x20x20xbf16>
    %523 = vector.shape_cast %522 : vector<1x20x20xbf16> to vector<20x20xbf16>
    %cst_151 = arith.constant dense<0.000000e+00> : vector<3x20xf32>
    %524 = tpu.matmul %471, %523, %cst_151 {dimension_numbers = #tpu.dot_dimension_numbers<[1], [0], [0], [1], [0, 0, 1, 1], [], []>} : vector<3x20xbf16>, vector<20x20xbf16>, vector<3x20xf32> -> vector<3x20xf32>
    %525 = arith.truncf %521 : vector<3x20xf32> to vector<3x20xbf16>
    %cst_152 = arith.constant 0.000000e+00 : f32
    %526 = vector.broadcast %cst_152 : f32 to vector<3x20xf32>
    %527 = vector.broadcast %144 : vector<1x20xf32> to vector<3x20xf32>
    %528 = arith.mulf %496, %527 : vector<3x20xf32>
    %529 = arith.truncf %528 : vector<3x20xf32> to vector<3x20xbf16>
    %cst_153 = arith.constant dense<0.000000e+00> : vector<3x3xf32>
    %530 = tpu.matmul %529, %525, %cst_153 {dimension_numbers = #tpu.dot_dimension_numbers<[1], [1], [0], [0], [0, 0, 1, 0], [], []>} : vector<3x20xbf16>, vector<3x20xbf16>, vector<3x3xf32> -> vector<3x3xf32>
    %cst_154 = arith.constant 0.44721359 : f32
    %531 = vector.broadcast %cst_154 : f32 to vector<3x3xf32>
    %532 = arith.mulf %530, %531 : vector<3x3xf32>
    %cst_155 = arith.constant dense<0xFF800000> : vector<3xf32>
    %533 = vector.multi_reduction <maximumf>, %532, %cst_155 [1] : vector<3x3xf32> to vector<3xf32>
    %534 = vector.shape_cast %533 : vector<3xf32> to vector<3x1xf32>
    %535 = vector.broadcast %534 : vector<3x1xf32> to vector<3x3xf32>
    %536 = arith.subf %532, %535 : vector<3x3xf32>
    %537 = math.exp %536 : vector<3x3xf32>
    %cst_156 = arith.constant dense<0.000000e+00> : vector<3xf32>
    %538 = vector.multi_reduction <add>, %537, %cst_156 [1] : vector<3x3xf32> to vector<3xf32>
    %539 = vector.shape_cast %538 : vector<3xf32> to vector<3x1xf32>
    %540 = vector.broadcast %539 : vector<3x1xf32> to vector<3x3xf32>
    %541 = arith.divf %537, %540 : vector<3x3xf32>
    %542 = vector.broadcast %144 : vector<1x20xf32> to vector<3x20xf32>
    %543 = arith.mulf %524, %542 : vector<3x20xf32>
    %544 = arith.truncf %543 : vector<3x20xf32> to vector<3x20xbf16>
    %545 = arith.truncf %541 : vector<3x3xf32> to vector<3x3xbf16>
    %cst_157 = arith.constant dense<0.000000e+00> : vector<3x20xf32>
    %546 = tpu.matmul %545, %544, %cst_157 {dimension_numbers = #tpu.dot_dimension_numbers<[1], [0], [0], [1], [0, 0, 1, 1], [], []>} : vector<3x3xbf16>, vector<3x20xbf16>, vector<3x20xf32> -> vector<3x20xf32>
    %547 = arith.addf %526, %546 : vector<3x20xf32>
    %548 = vector.broadcast %151 : vector<1x20xf32> to vector<3x20xf32>
    %549 = arith.mulf %496, %548 : vector<3x20xf32>
    %550 = arith.truncf %549 : vector<3x20xf32> to vector<3x20xbf16>
    %cst_158 = arith.constant dense<0.000000e+00> : vector<3x3xf32>
    %551 = tpu.matmul %550, %525, %cst_158 {dimension_numbers = #tpu.dot_dimension_numbers<[1], [1], [0], [0], [0, 0, 1, 0], [], []>} : vector<3x20xbf16>, vector<3x20xbf16>, vector<3x3xf32> -> vector<3x3xf32>
    %cst_159 = arith.constant 0.44721359 : f32
    %552 = vector.broadcast %cst_159 : f32 to vector<3x3xf32>
    %553 = arith.mulf %551, %552 : vector<3x3xf32>
    %cst_160 = arith.constant dense<0xFF800000> : vector<3xf32>
    %554 = vector.multi_reduction <maximumf>, %553, %cst_160 [1] : vector<3x3xf32> to vector<3xf32>
    %555 = vector.shape_cast %554 : vector<3xf32> to vector<3x1xf32>
    %556 = vector.broadcast %555 : vector<3x1xf32> to vector<3x3xf32>
    %557 = arith.subf %553, %556 : vector<3x3xf32>
    %558 = math.exp %557 : vector<3x3xf32>
    %cst_161 = arith.constant dense<0.000000e+00> : vector<3xf32>
    %559 = vector.multi_reduction <add>, %558, %cst_161 [1] : vector<3x3xf32> to vector<3xf32>
    %560 = vector.shape_cast %559 : vector<3xf32> to vector<3x1xf32>
    %561 = vector.broadcast %560 : vector<3x1xf32> to vector<3x3xf32>
    %562 = arith.divf %558, %561 : vector<3x3xf32>
    %563 = vector.broadcast %151 : vector<1x20xf32> to vector<3x20xf32>
    %564 = arith.mulf %524, %563 : vector<3x20xf32>
    %565 = arith.truncf %564 : vector<3x20xf32> to vector<3x20xbf16>
    %566 = arith.truncf %562 : vector<3x3xf32> to vector<3x3xbf16>
    %cst_162 = arith.constant dense<0.000000e+00> : vector<3x20xf32>
    %567 = tpu.matmul %566, %565, %cst_162 {dimension_numbers = #tpu.dot_dimension_numbers<[1], [0], [0], [1], [0, 0, 1, 1], [], []>} : vector<3x3xbf16>, vector<3x20xbf16>, vector<3x20xf32> -> vector<3x20xf32>
    %568 = arith.addf %547, %567 : vector<3x20xf32>
    %569 = vector.broadcast %158 : vector<1x20xf32> to vector<3x20xf32>
    %570 = arith.mulf %496, %569 : vector<3x20xf32>
    %571 = arith.truncf %570 : vector<3x20xf32> to vector<3x20xbf16>
    %cst_163 = arith.constant dense<0.000000e+00> : vector<3x3xf32>
    %572 = tpu.matmul %571, %525, %cst_163 {dimension_numbers = #tpu.dot_dimension_numbers<[1], [1], [0], [0], [0, 0, 1, 0], [], []>} : vector<3x20xbf16>, vector<3x20xbf16>, vector<3x3xf32> -> vector<3x3xf32>
    %cst_164 = arith.constant 0.44721359 : f32
    %573 = vector.broadcast %cst_164 : f32 to vector<3x3xf32>
    %574 = arith.mulf %572, %573 : vector<3x3xf32>
    %cst_165 = arith.constant dense<0xFF800000> : vector<3xf32>
    %575 = vector.multi_reduction <maximumf>, %574, %cst_165 [1] : vector<3x3xf32> to vector<3xf32>
    %576 = vector.shape_cast %575 : vector<3xf32> to vector<3x1xf32>
    %577 = vector.broadcast %576 : vector<3x1xf32> to vector<3x3xf32>
    %578 = arith.subf %574, %577 : vector<3x3xf32>
    %579 = math.exp %578 : vector<3x3xf32>
    %cst_166 = arith.constant dense<0.000000e+00> : vector<3xf32>
    %580 = vector.multi_reduction <add>, %579, %cst_166 [1] : vector<3x3xf32> to vector<3xf32>
    %581 = vector.shape_cast %580 : vector<3xf32> to vector<3x1xf32>
    %582 = vector.broadcast %581 : vector<3x1xf32> to vector<3x3xf32>
    %583 = arith.divf %579, %582 : vector<3x3xf32>
    %584 = vector.broadcast %158 : vector<1x20xf32> to vector<3x20xf32>
    %585 = arith.mulf %524, %584 : vector<3x20xf32>
    %586 = arith.truncf %585 : vector<3x20xf32> to vector<3x20xbf16>
    %587 = arith.truncf %583 : vector<3x3xf32> to vector<3x3xbf16>
    %cst_167 = arith.constant dense<0.000000e+00> : vector<3x20xf32>
    %588 = tpu.matmul %587, %586, %cst_167 {dimension_numbers = #tpu.dot_dimension_numbers<[1], [0], [0], [1], [0, 0, 1, 1], [], []>} : vector<3x3xbf16>, vector<3x20xbf16>, vector<3x20xf32> -> vector<3x20xf32>
    %589 = arith.addf %568, %588 : vector<3x20xf32>
    %590 = vector.broadcast %165 : vector<1x20xf32> to vector<3x20xf32>
    %591 = arith.mulf %496, %590 : vector<3x20xf32>
    %592 = arith.truncf %591 : vector<3x20xf32> to vector<3x20xbf16>
    %cst_168 = arith.constant dense<0.000000e+00> : vector<3x3xf32>
    %593 = tpu.matmul %592, %525, %cst_168 {dimension_numbers = #tpu.dot_dimension_numbers<[1], [1], [0], [0], [0, 0, 1, 0], [], []>} : vector<3x20xbf16>, vector<3x20xbf16>, vector<3x3xf32> -> vector<3x3xf32>
    %cst_169 = arith.constant 0.44721359 : f32
    %594 = vector.broadcast %cst_169 : f32 to vector<3x3xf32>
    %595 = arith.mulf %593, %594 : vector<3x3xf32>
    %cst_170 = arith.constant dense<0xFF800000> : vector<3xf32>
    %596 = vector.multi_reduction <maximumf>, %595, %cst_170 [1] : vector<3x3xf32> to vector<3xf32>
    %597 = vector.shape_cast %596 : vector<3xf32> to vector<3x1xf32>
    %598 = vector.broadcast %597 : vector<3x1xf32> to vector<3x3xf32>
    %599 = arith.subf %595, %598 : vector<3x3xf32>
    %600 = math.exp %599 : vector<3x3xf32>
    %cst_171 = arith.constant dense<0.000000e+00> : vector<3xf32>
    %601 = vector.multi_reduction <add>, %600, %cst_171 [1] : vector<3x3xf32> to vector<3xf32>
    %602 = vector.shape_cast %601 : vector<3xf32> to vector<3x1xf32>
    %603 = vector.broadcast %602 : vector<3x1xf32> to vector<3x3xf32>
    %604 = arith.divf %600, %603 : vector<3x3xf32>
    %605 = vector.broadcast %165 : vector<1x20xf32> to vector<3x20xf32>
    %606 = arith.mulf %524, %605 : vector<3x20xf32>
    %607 = arith.truncf %606 : vector<3x20xf32> to vector<3x20xbf16>
    %608 = arith.truncf %604 : vector<3x3xf32> to vector<3x3xbf16>
    %cst_172 = arith.constant dense<0.000000e+00> : vector<3x20xf32>
    %609 = tpu.matmul %608, %607, %cst_172 {dimension_numbers = #tpu.dot_dimension_numbers<[1], [0], [0], [1], [0, 0, 1, 1], [], []>} : vector<3x3xbf16>, vector<3x20xbf16>, vector<3x20xf32> -> vector<3x20xf32>
    %610 = arith.addf %589, %609 : vector<3x20xf32>
    %611 = arith.truncf %610 : vector<3x20xf32> to vector<3x20xbf16>
    %612 = vector.extract_strided_slice %448 {offsets = [3, 0, 0], sizes = [1, 20, 20], strides = [1, 1, 1]} : vector<4x20x20xbf16> to vector<1x20x20xbf16>
    %613 = vector.shape_cast %612 : vector<1x20x20xbf16> to vector<20x20xbf16>
    %cst_173 = arith.constant dense<0.000000e+00> : vector<3x20xf32>
    %614 = tpu.matmul %611, %613, %cst_173 {dimension_numbers = #tpu.dot_dimension_numbers<[1], [0], [0], [1], [0, 0, 1, 1], [], []>} : vector<3x20xbf16>, vector<20x20xbf16>, vector<3x20xf32> -> vector<3x20xf32>
    %615 = vector.broadcast %441 : vector<1x20xf32> to vector<3x20xf32>
    %616 = arith.addf %614, %615 : vector<3x20xf32>
    %617 = vector.broadcast %442 : vector<1x20xf32> to vector<3x20xf32>
    %618 = arith.mulf %617, %616 : vector<3x20xf32>
    %619 = arith.addf %432, %618 : vector<3x20xf32>
    %cst_174 = arith.constant dense<0.000000e+00> : vector<3xf32>
    %620 = vector.multi_reduction <add>, %619, %cst_174 [1] : vector<3x20xf32> to vector<3xf32>
    %621 = vector.shape_cast %620 : vector<3xf32> to vector<3x1xf32>
    %cst_175 = arith.constant 2.000000e+01 : f32
    %622 = vector.broadcast %cst_175 : f32 to vector<3x1xf32>
    %623 = arith.divf %621, %622 : vector<3x1xf32>
    %624 = vector.broadcast %623 : vector<3x1xf32> to vector<3x20xf32>
    %625 = arith.subf %619, %624 : vector<3x20xf32>
    %626 = arith.mulf %625, %625 : vector<3x20xf32>
    %cst_176 = arith.constant dense<0.000000e+00> : vector<3xf32>
    %627 = vector.multi_reduction <add>, %626, %cst_176 [1] : vector<3x20xf32> to vector<3xf32>
    %628 = vector.shape_cast %627 : vector<3xf32> to vector<3x1xf32>
    %cst_177 = arith.constant 2.000000e+01 : f32
    %629 = vector.broadcast %cst_177 : f32 to vector<3x1xf32>
    %630 = arith.divf %628, %629 : vector<3x1xf32>
    %631 = vector.broadcast %623 : vector<3x1xf32> to vector<3x20xf32>
    %632 = arith.subf %619, %631 : vector<3x20xf32>
    %cst_178 = arith.constant 9.99999974E-6 : f32
    %633 = vector.broadcast %cst_178 : f32 to vector<3x1xf32>
    %634 = arith.addf %630, %633 : vector<3x1xf32>
    %635 = math.rsqrt %634 : vector<3x1xf32>
    %636 = vector.broadcast %635 : vector<3x1xf32> to vector<3x20xf32>
    %637 = arith.mulf %632, %636 : vector<3x20xf32>
    %638 = vector.broadcast %443 : vector<1x20xf32> to vector<3x20xf32>
    %639 = arith.mulf %637, %638 : vector<3x20xf32>
    %640 = vector.broadcast %444 : vector<1x20xf32> to vector<3x20xf32>
    %641 = arith.addf %639, %640 : vector<3x20xf32>
    %642 = arith.truncf %641 : vector<3x20xf32> to vector<3x20xbf16>
    %c1_179 = arith.constant 1 : index
    %c0_180 = arith.constant 0 : index
    %c0_181 = arith.constant 0 : index
    %643 = vector.load %arg12[%c1_179, %c0_180, %c0_181] : memref<3x20x80xbf16, #tpu.memory_space<vmem>>, vector<1x20x80xbf16>
    %644 = vector.shape_cast %643 : vector<1x20x80xbf16> to vector<20x80xbf16>
    %cst_182 = arith.constant dense<0.000000e+00> : vector<3x80xf32>
    %645 = tpu.matmul %642, %644, %cst_182 {dimension_numbers = #tpu.dot_dimension_numbers<[1], [0], [0], [1], [0, 0, 1, 1], [], []>} : vector<3x20xbf16>, vector<20x80xbf16>, vector<3x80xf32> -> vector<3x80xf32>
    %c1_183 = arith.constant 1 : index
    %c0_184 = arith.constant 0 : index
    %c0_185 = arith.constant 0 : index
    %646 = vector.load %arg10[%c1_183, %c0_184, %c0_185] : memref<3x1x80xf32, #tpu.memory_space<vmem>>, vector<1x1x80xf32>
    %647 = vector.shape_cast %646 : vector<1x1x80xf32> to vector<1x80xf32>
    %648 = vector.broadcast %647 : vector<1x80xf32> to vector<3x80xf32>
    %649 = arith.addf %645, %648 : vector<3x80xf32>
    %cst_186 = arith.constant 5.000000e-01 : f32
    %650 = vector.broadcast %cst_186 : f32 to vector<3x80xf32>
    %651 = arith.mulf %650, %649 : vector<3x80xf32>
    %cst_187 = arith.constant 0.707106769 : f32
    %652 = vector.broadcast %cst_187 : f32 to vector<3x80xf32>
    %653 = arith.mulf %649, %652 : vector<3x80xf32>
    %cst_188 = arith.constant 0.000000e+00 : f32
    %654 = vector.broadcast %cst_188 : f32 to vector<3x80xf32>
    %655 = arith.cmpf oge, %653, %654 : vector<3x80xf32>
    %cst_189 = arith.constant 1.000000e+00 : f32
    %cst_190 = arith.constant -1.000000e+00 : f32
    %656 = vector.broadcast %cst_189 : f32 to vector<3x80xf32>
    %657 = vector.broadcast %cst_190 : f32 to vector<3x80xf32>
    %658 = arith.select %655, %656, %657 : vector<3x80xi1>, vector<3x80xf32>
    %659 = math.absf %653 : vector<3x80xf32>
    %cst_191 = arith.constant 0.327591091 : f32
    %660 = vector.broadcast %cst_191 : f32 to vector<3x80xf32>
    %661 = arith.mulf %660, %659 : vector<3x80xf32>
    %cst_192 = arith.constant 1.000000e+00 : f32
    %662 = vector.broadcast %cst_192 : f32 to vector<3x80xf32>
    %663 = arith.addf %662, %661 : vector<3x80xf32>
    %cst_193 = arith.constant 1.000000e+00 : f32
    %664 = vector.broadcast %cst_193 : f32 to vector<3x80xf32>
    %665 = arith.divf %664, %663 : vector<3x80xf32>
    %cst_194 = arith.constant 1.06140542 : f32
    %666 = vector.broadcast %cst_194 : f32 to vector<3x80xf32>
    %667 = arith.mulf %666, %665 : vector<3x80xf32>
    %cst_195 = arith.constant -1.45315206 : f32
    %668 = vector.broadcast %cst_195 : f32 to vector<3x80xf32>
    %669 = arith.addf %667, %668 : vector<3x80xf32>
    %670 = arith.mulf %669, %665 : vector<3x80xf32>
    %cst_196 = arith.constant 1.42141378 : f32
    %671 = vector.broadcast %cst_196 : f32 to vector<3x80xf32>
    %672 = arith.addf %670, %671 : vector<3x80xf32>
    %673 = arith.mulf %672, %665 : vector<3x80xf32>
    %cst_197 = arith.constant -0.284496725 : f32
    %674 = vector.broadcast %cst_197 : f32 to vector<3x80xf32>
    %675 = arith.addf %673, %674 : vector<3x80xf32>
    %676 = arith.mulf %675, %665 : vector<3x80xf32>
    %cst_198 = arith.constant 0.254829586 : f32
    %677 = vector.broadcast %cst_198 : f32 to vector<3x80xf32>
    %678 = arith.addf %676, %677 : vector<3x80xf32>
    %679 = arith.mulf %678, %665 : vector<3x80xf32>
    %cst_199 = arith.constant 0.000000e+00 : f32
    %680 = vector.broadcast %cst_199 : f32 to vector<3x80xf32>
    %681 = arith.subf %680, %659 : vector<3x80xf32>
    %682 = arith.mulf %681, %659 : vector<3x80xf32>
    %683 = math.exp %682 : vector<3x80xf32>
    %684 = arith.mulf %679, %683 : vector<3x80xf32>
    %cst_200 = arith.constant 1.000000e+00 : f32
    %685 = vector.broadcast %cst_200 : f32 to vector<3x80xf32>
    %686 = arith.subf %685, %684 : vector<3x80xf32>
    %687 = arith.mulf %658, %686 : vector<3x80xf32>
    %cst_201 = arith.constant 1.000000e+00 : f32
    %688 = vector.broadcast %cst_201 : f32 to vector<3x80xf32>
    %689 = arith.addf %688, %687 : vector<3x80xf32>
    %690 = arith.mulf %651, %689 : vector<3x80xf32>
    %691 = arith.truncf %690 : vector<3x80xf32> to vector<3x80xbf16>
    %c1_202 = arith.constant 1 : index
    %c0_203 = arith.constant 0 : index
    %c0_204 = arith.constant 0 : index
    %692 = vector.load %arg13[%c1_202, %c0_203, %c0_204] : memref<3x80x20xbf16, #tpu.memory_space<vmem>>, vector<1x80x20xbf16>
    %693 = vector.shape_cast %692 : vector<1x80x20xbf16> to vector<80x20xbf16>
    %cst_205 = arith.constant dense<0.000000e+00> : vector<3x20xf32>
    %694 = tpu.matmul %691, %693, %cst_205 {dimension_numbers = #tpu.dot_dimension_numbers<[1], [0], [0], [1], [0, 0, 1, 1], [], []>} : vector<3x80xbf16>, vector<80x20xbf16>, vector<3x20xf32> -> vector<3x20xf32>
    %695 = vector.broadcast %445 : vector<1x20xf32> to vector<3x20xf32>
    %696 = arith.addf %694, %695 : vector<3x20xf32>
    %697 = vector.broadcast %446 : vector<1x20xf32> to vector<3x20xf32>
    %698 = arith.mulf %697, %696 : vector<3x20xf32>
    %699 = arith.addf %619, %698 : vector<3x20xf32>
    %c2 = arith.constant 2 : index
    %c0_206 = arith.constant 0 : index
    %c0_207 = arith.constant 0 : index
    %700 = vector.load %arg9[%c2, %c0_206, %c0_207] : memref<3x12x20xf32, #tpu.memory_space<vmem>>, vector<1x12x20xf32>
    %701 = vector.shape_cast %700 : vector<1x12x20xf32> to vector<12x20xf32>
    %702 = vector.extract_strided_slice %701 {offsets = [0, 0], sizes = [1, 20], strides = [1, 1]} : vector<12x20xf32> to vector<1x20xf32>
    %703 = vector.extract_strided_slice %701 {offsets = [1, 0], sizes = [1, 20], strides = [1, 1]} : vector<12x20xf32> to vector<1x20xf32>
    %704 = vector.extract_strided_slice %701 {offsets = [2, 0], sizes = [1, 20], strides = [1, 1]} : vector<12x20xf32> to vector<1x20xf32>
    %705 = vector.extract_strided_slice %701 {offsets = [3, 0], sizes = [1, 20], strides = [1, 1]} : vector<12x20xf32> to vector<1x20xf32>
    %706 = vector.extract_strided_slice %701 {offsets = [4, 0], sizes = [1, 20], strides = [1, 1]} : vector<12x20xf32> to vector<1x20xf32>
    %707 = vector.extract_strided_slice %701 {offsets = [5, 0], sizes = [1, 20], strides = [1, 1]} : vector<12x20xf32> to vector<1x20xf32>
    %708 = vector.extract_strided_slice %701 {offsets = [6, 0], sizes = [1, 20], strides = [1, 1]} : vector<12x20xf32> to vector<1x20xf32>
    %709 = vector.extract_strided_slice %701 {offsets = [7, 0], sizes = [1, 20], strides = [1, 1]} : vector<12x20xf32> to vector<1x20xf32>
    %710 = vector.extract_strided_slice %701 {offsets = [8, 0], sizes = [1, 20], strides = [1, 1]} : vector<12x20xf32> to vector<1x20xf32>
    %711 = vector.extract_strided_slice %701 {offsets = [9, 0], sizes = [1, 20], strides = [1, 1]} : vector<12x20xf32> to vector<1x20xf32>
    %712 = vector.extract_strided_slice %701 {offsets = [10, 0], sizes = [1, 20], strides = [1, 1]} : vector<12x20xf32> to vector<1x20xf32>
    %713 = vector.extract_strided_slice %701 {offsets = [11, 0], sizes = [1, 20], strides = [1, 1]} : vector<12x20xf32> to vector<1x20xf32>
    %c2_208 = arith.constant 2 : index
    %c0_209 = arith.constant 0 : index
    %c0_210 = arith.constant 0 : index
    %c0_211 = arith.constant 0 : index
    %714 = vector.load %arg11[%c2_208, %c0_209, %c0_210, %c0_211] : memref<3x4x20x20xbf16, #tpu.memory_space<vmem>>, vector<1x4x20x20xbf16>
    %715 = vector.shape_cast %714 : vector<1x4x20x20xbf16> to vector<4x20x20xbf16>
    %cst_212 = arith.constant dense<0.000000e+00> : vector<3xf32>
    %716 = vector.multi_reduction <add>, %699, %cst_212 [1] : vector<3x20xf32> to vector<3xf32>
    %717 = vector.shape_cast %716 : vector<3xf32> to vector<3x1xf32>
    %cst_213 = arith.constant 2.000000e+01 : f32
    %718 = vector.broadcast %cst_213 : f32 to vector<3x1xf32>
    %719 = arith.divf %717, %718 : vector<3x1xf32>
    %720 = vector.broadcast %719 : vector<3x1xf32> to vector<3x20xf32>
    %721 = arith.subf %699, %720 : vector<3x20xf32>
    %722 = arith.mulf %721, %721 : vector<3x20xf32>
    %cst_214 = arith.constant dense<0.000000e+00> : vector<3xf32>
    %723 = vector.multi_reduction <add>, %722, %cst_214 [1] : vector<3x20xf32> to vector<3xf32>
    %724 = vector.shape_cast %723 : vector<3xf32> to vector<3x1xf32>
    %cst_215 = arith.constant 2.000000e+01 : f32
    %725 = vector.broadcast %cst_215 : f32 to vector<3x1xf32>
    %726 = arith.divf %724, %725 : vector<3x1xf32>
    %727 = vector.broadcast %719 : vector<3x1xf32> to vector<3x20xf32>
    %728 = arith.subf %699, %727 : vector<3x20xf32>
    %cst_216 = arith.constant 9.99999974E-6 : f32
    %729 = vector.broadcast %cst_216 : f32 to vector<3x1xf32>
    %730 = arith.addf %726, %729 : vector<3x1xf32>
    %731 = math.rsqrt %730 : vector<3x1xf32>
    %732 = vector.broadcast %731 : vector<3x1xf32> to vector<3x20xf32>
    %733 = arith.mulf %728, %732 : vector<3x20xf32>
    %734 = vector.broadcast %702 : vector<1x20xf32> to vector<3x20xf32>
    %735 = arith.mulf %733, %734 : vector<3x20xf32>
    %736 = vector.broadcast %703 : vector<1x20xf32> to vector<3x20xf32>
    %737 = arith.addf %735, %736 : vector<3x20xf32>
    %738 = arith.truncf %737 : vector<3x20xf32> to vector<3x20xbf16>
    %739 = vector.extract_strided_slice %715 {offsets = [0, 0, 0], sizes = [1, 20, 20], strides = [1, 1, 1]} : vector<4x20x20xbf16> to vector<1x20x20xbf16>
    %740 = vector.shape_cast %739 : vector<1x20x20xbf16> to vector<20x20xbf16>
    %cst_217 = arith.constant dense<0.000000e+00> : vector<3x20xf32>
    %741 = tpu.matmul %738, %740, %cst_217 {dimension_numbers = #tpu.dot_dimension_numbers<[1], [0], [0], [1], [0, 0, 1, 1], [], []>} : vector<3x20xbf16>, vector<20x20xbf16>, vector<3x20xf32> -> vector<3x20xf32>
    %cst_218 = arith.constant dense<0.000000e+00> : vector<3xf32>
    %742 = vector.multi_reduction <add>, %741, %cst_218 [1] : vector<3x20xf32> to vector<3xf32>
    %743 = vector.shape_cast %742 : vector<3xf32> to vector<3x1xf32>
    %cst_219 = arith.constant 2.000000e+01 : f32
    %744 = vector.broadcast %cst_219 : f32 to vector<3x1xf32>
    %745 = arith.divf %743, %744 : vector<3x1xf32>
    %746 = vector.broadcast %745 : vector<3x1xf32> to vector<3x20xf32>
    %747 = arith.subf %741, %746 : vector<3x20xf32>
    %748 = arith.mulf %747, %747 : vector<3x20xf32>
    %cst_220 = arith.constant dense<0.000000e+00> : vector<3xf32>
    %749 = vector.multi_reduction <add>, %748, %cst_220 [1] : vector<3x20xf32> to vector<3xf32>
    %750 = vector.shape_cast %749 : vector<3xf32> to vector<3x1xf32>
    %cst_221 = arith.constant 2.000000e+01 : f32
    %751 = vector.broadcast %cst_221 : f32 to vector<3x1xf32>
    %752 = arith.divf %750, %751 : vector<3x1xf32>
    %753 = vector.broadcast %745 : vector<3x1xf32> to vector<3x20xf32>
    %754 = arith.subf %741, %753 : vector<3x20xf32>
    %cst_222 = arith.constant 9.99999974E-6 : f32
    %755 = vector.broadcast %cst_222 : f32 to vector<3x1xf32>
    %756 = arith.addf %752, %755 : vector<3x1xf32>
    %757 = math.rsqrt %756 : vector<3x1xf32>
    %758 = vector.broadcast %757 : vector<3x1xf32> to vector<3x20xf32>
    %759 = arith.mulf %754, %758 : vector<3x20xf32>
    %760 = vector.broadcast %704 : vector<1x20xf32> to vector<3x20xf32>
    %761 = arith.mulf %759, %760 : vector<3x20xf32>
    %762 = vector.broadcast %705 : vector<1x20xf32> to vector<3x20xf32>
    %763 = arith.addf %761, %762 : vector<3x20xf32>
    %764 = vector.extract_strided_slice %715 {offsets = [1, 0, 0], sizes = [1, 20, 20], strides = [1, 1, 1]} : vector<4x20x20xbf16> to vector<1x20x20xbf16>
    %765 = vector.shape_cast %764 : vector<1x20x20xbf16> to vector<20x20xbf16>
    %cst_223 = arith.constant dense<0.000000e+00> : vector<3x20xf32>
    %766 = tpu.matmul %738, %765, %cst_223 {dimension_numbers = #tpu.dot_dimension_numbers<[1], [0], [0], [1], [0, 0, 1, 1], [], []>} : vector<3x20xbf16>, vector<20x20xbf16>, vector<3x20xf32> -> vector<3x20xf32>
    %cst_224 = arith.constant dense<0.000000e+00> : vector<3xf32>
    %767 = vector.multi_reduction <add>, %766, %cst_224 [1] : vector<3x20xf32> to vector<3xf32>
    %768 = vector.shape_cast %767 : vector<3xf32> to vector<3x1xf32>
    %cst_225 = arith.constant 2.000000e+01 : f32
    %769 = vector.broadcast %cst_225 : f32 to vector<3x1xf32>
    %770 = arith.divf %768, %769 : vector<3x1xf32>
    %771 = vector.broadcast %770 : vector<3x1xf32> to vector<3x20xf32>
    %772 = arith.subf %766, %771 : vector<3x20xf32>
    %773 = arith.mulf %772, %772 : vector<3x20xf32>
    %cst_226 = arith.constant dense<0.000000e+00> : vector<3xf32>
    %774 = vector.multi_reduction <add>, %773, %cst_226 [1] : vector<3x20xf32> to vector<3xf32>
    %775 = vector.shape_cast %774 : vector<3xf32> to vector<3x1xf32>
    %cst_227 = arith.constant 2.000000e+01 : f32
    %776 = vector.broadcast %cst_227 : f32 to vector<3x1xf32>
    %777 = arith.divf %775, %776 : vector<3x1xf32>
    %778 = vector.broadcast %770 : vector<3x1xf32> to vector<3x20xf32>
    %779 = arith.subf %766, %778 : vector<3x20xf32>
    %cst_228 = arith.constant 9.99999974E-6 : f32
    %780 = vector.broadcast %cst_228 : f32 to vector<3x1xf32>
    %781 = arith.addf %777, %780 : vector<3x1xf32>
    %782 = math.rsqrt %781 : vector<3x1xf32>
    %783 = vector.broadcast %782 : vector<3x1xf32> to vector<3x20xf32>
    %784 = arith.mulf %779, %783 : vector<3x20xf32>
    %785 = vector.broadcast %706 : vector<1x20xf32> to vector<3x20xf32>
    %786 = arith.mulf %784, %785 : vector<3x20xf32>
    %787 = vector.broadcast %707 : vector<1x20xf32> to vector<3x20xf32>
    %788 = arith.addf %786, %787 : vector<3x20xf32>
    %789 = vector.extract_strided_slice %715 {offsets = [2, 0, 0], sizes = [1, 20, 20], strides = [1, 1, 1]} : vector<4x20x20xbf16> to vector<1x20x20xbf16>
    %790 = vector.shape_cast %789 : vector<1x20x20xbf16> to vector<20x20xbf16>
    %cst_229 = arith.constant dense<0.000000e+00> : vector<3x20xf32>
    %791 = tpu.matmul %738, %790, %cst_229 {dimension_numbers = #tpu.dot_dimension_numbers<[1], [0], [0], [1], [0, 0, 1, 1], [], []>} : vector<3x20xbf16>, vector<20x20xbf16>, vector<3x20xf32> -> vector<3x20xf32>
    %792 = arith.truncf %788 : vector<3x20xf32> to vector<3x20xbf16>
    %cst_230 = arith.constant 0.000000e+00 : f32
    %793 = vector.broadcast %cst_230 : f32 to vector<3x20xf32>
    %794 = vector.broadcast %144 : vector<1x20xf32> to vector<3x20xf32>
    %795 = arith.mulf %763, %794 : vector<3x20xf32>
    %796 = arith.truncf %795 : vector<3x20xf32> to vector<3x20xbf16>
    %cst_231 = arith.constant dense<0.000000e+00> : vector<3x3xf32>
    %797 = tpu.matmul %796, %792, %cst_231 {dimension_numbers = #tpu.dot_dimension_numbers<[1], [1], [0], [0], [0, 0, 1, 0], [], []>} : vector<3x20xbf16>, vector<3x20xbf16>, vector<3x3xf32> -> vector<3x3xf32>
    %cst_232 = arith.constant 0.44721359 : f32
    %798 = vector.broadcast %cst_232 : f32 to vector<3x3xf32>
    %799 = arith.mulf %797, %798 : vector<3x3xf32>
    %cst_233 = arith.constant dense<0xFF800000> : vector<3xf32>
    %800 = vector.multi_reduction <maximumf>, %799, %cst_233 [1] : vector<3x3xf32> to vector<3xf32>
    %801 = vector.shape_cast %800 : vector<3xf32> to vector<3x1xf32>
    %802 = vector.broadcast %801 : vector<3x1xf32> to vector<3x3xf32>
    %803 = arith.subf %799, %802 : vector<3x3xf32>
    %804 = math.exp %803 : vector<3x3xf32>
    %cst_234 = arith.constant dense<0.000000e+00> : vector<3xf32>
    %805 = vector.multi_reduction <add>, %804, %cst_234 [1] : vector<3x3xf32> to vector<3xf32>
    %806 = vector.shape_cast %805 : vector<3xf32> to vector<3x1xf32>
    %807 = vector.broadcast %806 : vector<3x1xf32> to vector<3x3xf32>
    %808 = arith.divf %804, %807 : vector<3x3xf32>
    %809 = vector.broadcast %144 : vector<1x20xf32> to vector<3x20xf32>
    %810 = arith.mulf %791, %809 : vector<3x20xf32>
    %811 = arith.truncf %810 : vector<3x20xf32> to vector<3x20xbf16>
    %812 = arith.truncf %808 : vector<3x3xf32> to vector<3x3xbf16>
    %cst_235 = arith.constant dense<0.000000e+00> : vector<3x20xf32>
    %813 = tpu.matmul %812, %811, %cst_235 {dimension_numbers = #tpu.dot_dimension_numbers<[1], [0], [0], [1], [0, 0, 1, 1], [], []>} : vector<3x3xbf16>, vector<3x20xbf16>, vector<3x20xf32> -> vector<3x20xf32>
    %814 = arith.addf %793, %813 : vector<3x20xf32>
    %815 = vector.broadcast %151 : vector<1x20xf32> to vector<3x20xf32>
    %816 = arith.mulf %763, %815 : vector<3x20xf32>
    %817 = arith.truncf %816 : vector<3x20xf32> to vector<3x20xbf16>
    %cst_236 = arith.constant dense<0.000000e+00> : vector<3x3xf32>
    %818 = tpu.matmul %817, %792, %cst_236 {dimension_numbers = #tpu.dot_dimension_numbers<[1], [1], [0], [0], [0, 0, 1, 0], [], []>} : vector<3x20xbf16>, vector<3x20xbf16>, vector<3x3xf32> -> vector<3x3xf32>
    %cst_237 = arith.constant 0.44721359 : f32
    %819 = vector.broadcast %cst_237 : f32 to vector<3x3xf32>
    %820 = arith.mulf %818, %819 : vector<3x3xf32>
    %cst_238 = arith.constant dense<0xFF800000> : vector<3xf32>
    %821 = vector.multi_reduction <maximumf>, %820, %cst_238 [1] : vector<3x3xf32> to vector<3xf32>
    %822 = vector.shape_cast %821 : vector<3xf32> to vector<3x1xf32>
    %823 = vector.broadcast %822 : vector<3x1xf32> to vector<3x3xf32>
    %824 = arith.subf %820, %823 : vector<3x3xf32>
    %825 = math.exp %824 : vector<3x3xf32>
    %cst_239 = arith.constant dense<0.000000e+00> : vector<3xf32>
    %826 = vector.multi_reduction <add>, %825, %cst_239 [1] : vector<3x3xf32> to vector<3xf32>
    %827 = vector.shape_cast %826 : vector<3xf32> to vector<3x1xf32>
    %828 = vector.broadcast %827 : vector<3x1xf32> to vector<3x3xf32>
    %829 = arith.divf %825, %828 : vector<3x3xf32>
    %830 = vector.broadcast %151 : vector<1x20xf32> to vector<3x20xf32>
    %831 = arith.mulf %791, %830 : vector<3x20xf32>
    %832 = arith.truncf %831 : vector<3x20xf32> to vector<3x20xbf16>
    %833 = arith.truncf %829 : vector<3x3xf32> to vector<3x3xbf16>
    %cst_240 = arith.constant dense<0.000000e+00> : vector<3x20xf32>
    %834 = tpu.matmul %833, %832, %cst_240 {dimension_numbers = #tpu.dot_dimension_numbers<[1], [0], [0], [1], [0, 0, 1, 1], [], []>} : vector<3x3xbf16>, vector<3x20xbf16>, vector<3x20xf32> -> vector<3x20xf32>
    %835 = arith.addf %814, %834 : vector<3x20xf32>
    %836 = vector.broadcast %158 : vector<1x20xf32> to vector<3x20xf32>
    %837 = arith.mulf %763, %836 : vector<3x20xf32>
    %838 = arith.truncf %837 : vector<3x20xf32> to vector<3x20xbf16>
    %cst_241 = arith.constant dense<0.000000e+00> : vector<3x3xf32>
    %839 = tpu.matmul %838, %792, %cst_241 {dimension_numbers = #tpu.dot_dimension_numbers<[1], [1], [0], [0], [0, 0, 1, 0], [], []>} : vector<3x20xbf16>, vector<3x20xbf16>, vector<3x3xf32> -> vector<3x3xf32>
    %cst_242 = arith.constant 0.44721359 : f32
    %840 = vector.broadcast %cst_242 : f32 to vector<3x3xf32>
    %841 = arith.mulf %839, %840 : vector<3x3xf32>
    %cst_243 = arith.constant dense<0xFF800000> : vector<3xf32>
    %842 = vector.multi_reduction <maximumf>, %841, %cst_243 [1] : vector<3x3xf32> to vector<3xf32>
    %843 = vector.shape_cast %842 : vector<3xf32> to vector<3x1xf32>
    %844 = vector.broadcast %843 : vector<3x1xf32> to vector<3x3xf32>
    %845 = arith.subf %841, %844 : vector<3x3xf32>
    %846 = math.exp %845 : vector<3x3xf32>
    %cst_244 = arith.constant dense<0.000000e+00> : vector<3xf32>
    %847 = vector.multi_reduction <add>, %846, %cst_244 [1] : vector<3x3xf32> to vector<3xf32>
    %848 = vector.shape_cast %847 : vector<3xf32> to vector<3x1xf32>
    %849 = vector.broadcast %848 : vector<3x1xf32> to vector<3x3xf32>
    %850 = arith.divf %846, %849 : vector<3x3xf32>
    %851 = vector.broadcast %158 : vector<1x20xf32> to vector<3x20xf32>
    %852 = arith.mulf %791, %851 : vector<3x20xf32>
    %853 = arith.truncf %852 : vector<3x20xf32> to vector<3x20xbf16>
    %854 = arith.truncf %850 : vector<3x3xf32> to vector<3x3xbf16>
    %cst_245 = arith.constant dense<0.000000e+00> : vector<3x20xf32>
    %855 = tpu.matmul %854, %853, %cst_245 {dimension_numbers = #tpu.dot_dimension_numbers<[1], [0], [0], [1], [0, 0, 1, 1], [], []>} : vector<3x3xbf16>, vector<3x20xbf16>, vector<3x20xf32> -> vector<3x20xf32>
    %856 = arith.addf %835, %855 : vector<3x20xf32>
    %857 = vector.broadcast %165 : vector<1x20xf32> to vector<3x20xf32>
    %858 = arith.mulf %763, %857 : vector<3x20xf32>
    %859 = arith.truncf %858 : vector<3x20xf32> to vector<3x20xbf16>
    %cst_246 = arith.constant dense<0.000000e+00> : vector<3x3xf32>
    %860 = tpu.matmul %859, %792, %cst_246 {dimension_numbers = #tpu.dot_dimension_numbers<[1], [1], [0], [0], [0, 0, 1, 0], [], []>} : vector<3x20xbf16>, vector<3x20xbf16>, vector<3x3xf32> -> vector<3x3xf32>
    %cst_247 = arith.constant 0.44721359 : f32
    %861 = vector.broadcast %cst_247 : f32 to vector<3x3xf32>
    %862 = arith.mulf %860, %861 : vector<3x3xf32>
    %cst_248 = arith.constant dense<0xFF800000> : vector<3xf32>
    %863 = vector.multi_reduction <maximumf>, %862, %cst_248 [1] : vector<3x3xf32> to vector<3xf32>
    %864 = vector.shape_cast %863 : vector<3xf32> to vector<3x1xf32>
    %865 = vector.broadcast %864 : vector<3x1xf32> to vector<3x3xf32>
    %866 = arith.subf %862, %865 : vector<3x3xf32>
    %867 = math.exp %866 : vector<3x3xf32>
    %cst_249 = arith.constant dense<0.000000e+00> : vector<3xf32>
    %868 = vector.multi_reduction <add>, %867, %cst_249 [1] : vector<3x3xf32> to vector<3xf32>
    %869 = vector.shape_cast %868 : vector<3xf32> to vector<3x1xf32>
    %870 = vector.broadcast %869 : vector<3x1xf32> to vector<3x3xf32>
    %871 = arith.divf %867, %870 : vector<3x3xf32>
    %872 = vector.broadcast %165 : vector<1x20xf32> to vector<3x20xf32>
    %873 = arith.mulf %791, %872 : vector<3x20xf32>
    %874 = arith.truncf %873 : vector<3x20xf32> to vector<3x20xbf16>
    %875 = arith.truncf %871 : vector<3x3xf32> to vector<3x3xbf16>
    %cst_250 = arith.constant dense<0.000000e+00> : vector<3x20xf32>
    %876 = tpu.matmul %875, %874, %cst_250 {dimension_numbers = #tpu.dot_dimension_numbers<[1], [0], [0], [1], [0, 0, 1, 1], [], []>} : vector<3x3xbf16>, vector<3x20xbf16>, vector<3x20xf32> -> vector<3x20xf32>
    %877 = arith.addf %856, %876 : vector<3x20xf32>
    %878 = arith.truncf %877 : vector<3x20xf32> to vector<3x20xbf16>
    %879 = vector.extract_strided_slice %715 {offsets = [3, 0, 0], sizes = [1, 20, 20], strides = [1, 1, 1]} : vector<4x20x20xbf16> to vector<1x20x20xbf16>
    %880 = vector.shape_cast %879 : vector<1x20x20xbf16> to vector<20x20xbf16>
    %cst_251 = arith.constant dense<0.000000e+00> : vector<3x20xf32>
    %881 = tpu.matmul %878, %880, %cst_251 {dimension_numbers = #tpu.dot_dimension_numbers<[1], [0], [0], [1], [0, 0, 1, 1], [], []>} : vector<3x20xbf16>, vector<20x20xbf16>, vector<3x20xf32> -> vector<3x20xf32>
    %882 = vector.broadcast %708 : vector<1x20xf32> to vector<3x20xf32>
    %883 = arith.addf %881, %882 : vector<3x20xf32>
    %884 = vector.broadcast %709 : vector<1x20xf32> to vector<3x20xf32>
    %885 = arith.mulf %884, %883 : vector<3x20xf32>
    %886 = arith.addf %699, %885 : vector<3x20xf32>
    %cst_252 = arith.constant dense<0.000000e+00> : vector<3xf32>
    %887 = vector.multi_reduction <add>, %886, %cst_252 [1] : vector<3x20xf32> to vector<3xf32>
    %888 = vector.shape_cast %887 : vector<3xf32> to vector<3x1xf32>
    %cst_253 = arith.constant 2.000000e+01 : f32
    %889 = vector.broadcast %cst_253 : f32 to vector<3x1xf32>
    %890 = arith.divf %888, %889 : vector<3x1xf32>
    %891 = vector.broadcast %890 : vector<3x1xf32> to vector<3x20xf32>
    %892 = arith.subf %886, %891 : vector<3x20xf32>
    %893 = arith.mulf %892, %892 : vector<3x20xf32>
    %cst_254 = arith.constant dense<0.000000e+00> : vector<3xf32>
    %894 = vector.multi_reduction <add>, %893, %cst_254 [1] : vector<3x20xf32> to vector<3xf32>
    %895 = vector.shape_cast %894 : vector<3xf32> to vector<3x1xf32>
    %cst_255 = arith.constant 2.000000e+01 : f32
    %896 = vector.broadcast %cst_255 : f32 to vector<3x1xf32>
    %897 = arith.divf %895, %896 : vector<3x1xf32>
    %898 = vector.broadcast %890 : vector<3x1xf32> to vector<3x20xf32>
    %899 = arith.subf %886, %898 : vector<3x20xf32>
    %cst_256 = arith.constant 9.99999974E-6 : f32
    %900 = vector.broadcast %cst_256 : f32 to vector<3x1xf32>
    %901 = arith.addf %897, %900 : vector<3x1xf32>
    %902 = math.rsqrt %901 : vector<3x1xf32>
    %903 = vector.broadcast %902 : vector<3x1xf32> to vector<3x20xf32>
    %904 = arith.mulf %899, %903 : vector<3x20xf32>
    %905 = vector.broadcast %710 : vector<1x20xf32> to vector<3x20xf32>
    %906 = arith.mulf %904, %905 : vector<3x20xf32>
    %907 = vector.broadcast %711 : vector<1x20xf32> to vector<3x20xf32>
    %908 = arith.addf %906, %907 : vector<3x20xf32>
    %909 = arith.truncf %908 : vector<3x20xf32> to vector<3x20xbf16>
    %c2_257 = arith.constant 2 : index
    %c0_258 = arith.constant 0 : index
    %c0_259 = arith.constant 0 : index
    %910 = vector.load %arg12[%c2_257, %c0_258, %c0_259] : memref<3x20x80xbf16, #tpu.memory_space<vmem>>, vector<1x20x80xbf16>
    %911 = vector.shape_cast %910 : vector<1x20x80xbf16> to vector<20x80xbf16>
    %cst_260 = arith.constant dense<0.000000e+00> : vector<3x80xf32>
    %912 = tpu.matmul %909, %911, %cst_260 {dimension_numbers = #tpu.dot_dimension_numbers<[1], [0], [0], [1], [0, 0, 1, 1], [], []>} : vector<3x20xbf16>, vector<20x80xbf16>, vector<3x80xf32> -> vector<3x80xf32>
    %c2_261 = arith.constant 2 : index
    %c0_262 = arith.constant 0 : index
    %c0_263 = arith.constant 0 : index
    %913 = vector.load %arg10[%c2_261, %c0_262, %c0_263] : memref<3x1x80xf32, #tpu.memory_space<vmem>>, vector<1x1x80xf32>
    %914 = vector.shape_cast %913 : vector<1x1x80xf32> to vector<1x80xf32>
    %915 = vector.broadcast %914 : vector<1x80xf32> to vector<3x80xf32>
    %916 = arith.addf %912, %915 : vector<3x80xf32>
    %cst_264 = arith.constant 5.000000e-01 : f32
    %917 = vector.broadcast %cst_264 : f32 to vector<3x80xf32>
    %918 = arith.mulf %917, %916 : vector<3x80xf32>
    %cst_265 = arith.constant 0.707106769 : f32
    %919 = vector.broadcast %cst_265 : f32 to vector<3x80xf32>
    %920 = arith.mulf %916, %919 : vector<3x80xf32>
    %cst_266 = arith.constant 0.000000e+00 : f32
    %921 = vector.broadcast %cst_266 : f32 to vector<3x80xf32>
    %922 = arith.cmpf oge, %920, %921 : vector<3x80xf32>
    %cst_267 = arith.constant 1.000000e+00 : f32
    %cst_268 = arith.constant -1.000000e+00 : f32
    %923 = vector.broadcast %cst_267 : f32 to vector<3x80xf32>
    %924 = vector.broadcast %cst_268 : f32 to vector<3x80xf32>
    %925 = arith.select %922, %923, %924 : vector<3x80xi1>, vector<3x80xf32>
    %926 = math.absf %920 : vector<3x80xf32>
    %cst_269 = arith.constant 0.327591091 : f32
    %927 = vector.broadcast %cst_269 : f32 to vector<3x80xf32>
    %928 = arith.mulf %927, %926 : vector<3x80xf32>
    %cst_270 = arith.constant 1.000000e+00 : f32
    %929 = vector.broadcast %cst_270 : f32 to vector<3x80xf32>
    %930 = arith.addf %929, %928 : vector<3x80xf32>
    %cst_271 = arith.constant 1.000000e+00 : f32
    %931 = vector.broadcast %cst_271 : f32 to vector<3x80xf32>
    %932 = arith.divf %931, %930 : vector<3x80xf32>
    %cst_272 = arith.constant 1.06140542 : f32
    %933 = vector.broadcast %cst_272 : f32 to vector<3x80xf32>
    %934 = arith.mulf %933, %932 : vector<3x80xf32>
    %cst_273 = arith.constant -1.45315206 : f32
    %935 = vector.broadcast %cst_273 : f32 to vector<3x80xf32>
    %936 = arith.addf %934, %935 : vector<3x80xf32>
    %937 = arith.mulf %936, %932 : vector<3x80xf32>
    %cst_274 = arith.constant 1.42141378 : f32
    %938 = vector.broadcast %cst_274 : f32 to vector<3x80xf32>
    %939 = arith.addf %937, %938 : vector<3x80xf32>
    %940 = arith.mulf %939, %932 : vector<3x80xf32>
    %cst_275 = arith.constant -0.284496725 : f32
    %941 = vector.broadcast %cst_275 : f32 to vector<3x80xf32>
    %942 = arith.addf %940, %941 : vector<3x80xf32>
    %943 = arith.mulf %942, %932 : vector<3x80xf32>
    %cst_276 = arith.constant 0.254829586 : f32
    %944 = vector.broadcast %cst_276 : f32 to vector<3x80xf32>
    %945 = arith.addf %943, %944 : vector<3x80xf32>
    %946 = arith.mulf %945, %932 : vector<3x80xf32>
    %cst_277 = arith.constant 0.000000e+00 : f32
    %947 = vector.broadcast %cst_277 : f32 to vector<3x80xf32>
    %948 = arith.subf %947, %926 : vector<3x80xf32>
    %949 = arith.mulf %948, %926 : vector<3x80xf32>
    %950 = math.exp %949 : vector<3x80xf32>
    %951 = arith.mulf %946, %950 : vector<3x80xf32>
    %cst_278 = arith.constant 1.000000e+00 : f32
    %952 = vector.broadcast %cst_278 : f32 to vector<3x80xf32>
    %953 = arith.subf %952, %951 : vector<3x80xf32>
    %954 = arith.mulf %925, %953 : vector<3x80xf32>
    %cst_279 = arith.constant 1.000000e+00 : f32
    %955 = vector.broadcast %cst_279 : f32 to vector<3x80xf32>
    %956 = arith.addf %955, %954 : vector<3x80xf32>
    %957 = arith.mulf %918, %956 : vector<3x80xf32>
    %958 = arith.truncf %957 : vector<3x80xf32> to vector<3x80xbf16>
    %c2_280 = arith.constant 2 : index
    %c0_281 = arith.constant 0 : index
    %c0_282 = arith.constant 0 : index
    %959 = vector.load %arg13[%c2_280, %c0_281, %c0_282] : memref<3x80x20xbf16, #tpu.memory_space<vmem>>, vector<1x80x20xbf16>
    %960 = vector.shape_cast %959 : vector<1x80x20xbf16> to vector<80x20xbf16>
    %cst_283 = arith.constant dense<0.000000e+00> : vector<3x20xf32>
    %961 = tpu.matmul %958, %960, %cst_283 {dimension_numbers = #tpu.dot_dimension_numbers<[1], [0], [0], [1], [0, 0, 1, 1], [], []>} : vector<3x80xbf16>, vector<80x20xbf16>, vector<3x20xf32> -> vector<3x20xf32>
    %962 = vector.broadcast %712 : vector<1x20xf32> to vector<3x20xf32>
    %963 = arith.addf %961, %962 : vector<3x20xf32>
    %964 = vector.broadcast %713 : vector<1x20xf32> to vector<3x20xf32>
    %965 = arith.mulf %964, %963 : vector<3x20xf32>
    %966 = arith.addf %886, %965 : vector<3x20xf32>
    %c0_284 = arith.constant 0 : index
    %c0_285 = arith.constant 0 : index
    %967 = vector.load %arg14[%c0_284, %c0_285] : memref<2x20xf32, #tpu.memory_space<vmem>>, vector<2x20xf32>
    %968 = vector.extract_strided_slice %966 {offsets = [0, 0], sizes = [1, 20], strides = [1, 1]} : vector<3x20xf32> to vector<1x20xf32>
    %969 = vector.extract_strided_slice %967 {offsets = [0, 0], sizes = [1, 20], strides = [1, 1]} : vector<2x20xf32> to vector<1x20xf32>
    %970 = vector.extract_strided_slice %967 {offsets = [1, 0], sizes = [1, 20], strides = [1, 1]} : vector<2x20xf32> to vector<1x20xf32>
    %cst_286 = arith.constant dense<0.000000e+00> : vector<1xf32>
    %971 = vector.multi_reduction <add>, %968, %cst_286 [1] : vector<1x20xf32> to vector<1xf32>
    %972 = vector.shape_cast %971 : vector<1xf32> to vector<1x1xf32>
    %cst_287 = arith.constant 2.000000e+01 : f32
    %973 = vector.broadcast %cst_287 : f32 to vector<1x1xf32>
    %974 = arith.divf %972, %973 : vector<1x1xf32>
    %975 = vector.broadcast %974 : vector<1x1xf32> to vector<1x20xf32>
    %976 = arith.subf %968, %975 : vector<1x20xf32>
    %977 = arith.mulf %976, %976 : vector<1x20xf32>
    %cst_288 = arith.constant dense<0.000000e+00> : vector<1xf32>
    %978 = vector.multi_reduction <add>, %977, %cst_288 [1] : vector<1x20xf32> to vector<1xf32>
    %979 = vector.shape_cast %978 : vector<1xf32> to vector<1x1xf32>
    %cst_289 = arith.constant 2.000000e+01 : f32
    %980 = vector.broadcast %cst_289 : f32 to vector<1x1xf32>
    %981 = arith.divf %979, %980 : vector<1x1xf32>
    %982 = vector.broadcast %974 : vector<1x1xf32> to vector<1x20xf32>
    %983 = arith.subf %968, %982 : vector<1x20xf32>
    %cst_290 = arith.constant 9.99999974E-6 : f32
    %984 = vector.broadcast %cst_290 : f32 to vector<1x1xf32>
    %985 = arith.addf %981, %984 : vector<1x1xf32>
    %986 = math.rsqrt %985 : vector<1x1xf32>
    %987 = vector.broadcast %986 : vector<1x1xf32> to vector<1x20xf32>
    %988 = arith.mulf %983, %987 : vector<1x20xf32>
    %989 = arith.mulf %988, %969 : vector<1x20xf32>
    %990 = arith.addf %989, %970 : vector<1x20xf32>
    %991 = arith.truncf %990 : vector<1x20xf32> to vector<1x20xbf16>
    %c0_291 = arith.constant 0 : index
    %c0_292 = arith.constant 0 : index
    %992 = vector.load %arg15[%c0_291, %c0_292] : memref<20x16xbf16, #tpu.memory_space<vmem>>, vector<20x16xbf16>
    %cst_293 = arith.constant dense<0.000000e+00> : vector<1x16xf32>
    %993 = tpu.matmul %991, %992, %cst_293 {dimension_numbers = #tpu.dot_dimension_numbers<[1], [0], [0], [1], [0, 0, 1, 1], [], []>} : vector<1x20xbf16>, vector<20x16xbf16>, vector<1x16xf32> -> vector<1x16xf32>
    %c0_294 = arith.constant 0 : index
    %c0_295 = arith.constant 0 : index
    %994 = vector.load %arg16[%c0_294, %c0_295] : memref<1x16xf32, #tpu.memory_space<vmem>>, vector<1x16xf32>
    %995 = arith.addf %993, %994 : vector<1x16xf32>
    %c0_296 = arith.constant 0 : index
    %c0_297 = arith.constant 0 : index
    %c0_298 = arith.constant 0 : index
    %996 = vector.load %arg17[%c0_296, %c0_297, %c0_298] : memref<1x1x16xf32, #tpu.memory_space<vmem>>, vector<1x1x16xf32>
    %997 = vector.shape_cast %996 : vector<1x1x16xf32> to vector<1x16xf32>
    %998 = vector.shape_cast %995 : vector<1x16xf32> to vector<1x1x16xf32>
    tpu.vector_store %arg17[%c0_296, %c0_297, %c0_298], %998 {strides = array<i32>} : memref<1x1x16xf32, #tpu.memory_space<vmem>>, vector<1x1x16xf32>,
    return
  }
  func.func @transform_0(%arg0: i32) -> (i32, i32, i32) {
    %c0_i32 = arith.constant 0 : i32
    %c0_i32_0 = arith.constant 0 : i32
    %c0_i32_1 = arith.constant 0 : i32
    return %arg0, %c0_i32, %c0_i32_0 : i32, i32, i32
  }
  func.func @transform_1(%arg0: i32) -> (i32, i32) {
    %c0_i32 = arith.constant 0 : i32
    %c0_i32_0 = arith.constant 0 : i32
    %c0_i32_1 = arith.constant 0 : i32
    return %c0_i32, %c0_i32_0 : i32, i32
  }
  func.func @transform_2(%arg0: i32) -> (i32, i32, i32, i32) {
    %c0_i32 = arith.constant 0 : i32
    %c0_i32_0 = arith.constant 0 : i32
    %c0_i32_1 = arith.constant 0 : i32
    %c0_i32_2 = arith.constant 0 : i32
    %c0_i32_3 = arith.constant 0 : i32
    return %c0_i32, %c0_i32_0, %c0_i32_1, %c0_i32_2 : i32, i32, i32, i32
  }
  func.func @transform_3(%arg0: i32) -> (i32, i32) {
    %c0_i32 = arith.constant 0 : i32
    %c0_i32_0 = arith.constant 0 : i32
    %c0_i32_1 = arith.constant 0 : i32
    return %c0_i32, %c0_i32_0 : i32, i32
  }
  func.func @transform_4(%arg0: i32) -> (i32, i32) {
    %c0_i32 = arith.constant 0 : i32
    %c0_i32_0 = arith.constant 0 : i32
    %c0_i32_1 = arith.constant 0 : i32
    return %c0_i32, %c0_i32_0 : i32, i32
  }
  func.func @transform_5(%arg0: i32) -> (i32, i32) {
    %c0_i32 = arith.constant 0 : i32
    %c0_i32_0 = arith.constant 0 : i32
    %c0_i32_1 = arith.constant 0 : i32
    return %c0_i32, %c0_i32_0 : i32, i32
  }
  func.func @transform_6(%arg0: i32) -> (i32, i32) {
    %c0_i32 = arith.constant 0 : i32
    %c0_i32_0 = arith.constant 0 : i32
    %c0_i32_1 = arith.constant 0 : i32
    return %c0_i32, %c0_i32_0 : i32, i32
  }
  func.func @transform_7(%arg0: i32) -> (i32, i32) {
    %c0_i32 = arith.constant 0 : i32
    %c0_i32_0 = arith.constant 0 : i32
    %c0_i32_1 = arith.constant 0 : i32
    return %c0_i32, %c0_i32_0 : i32, i32
  }
  func.func @transform_8(%arg0: i32) -> (i32, i32, i32) {
    %c0_i32 = arith.constant 0 : i32
    %c0_i32_0 = arith.constant 0 : i32
    %c0_i32_1 = arith.constant 0 : i32
    %c0_i32_2 = arith.constant 0 : i32
    return %c0_i32, %c0_i32_0, %c0_i32_1 : i32, i32, i32
  }
  func.func @transform_9(%arg0: i32) -> (i32, i32, i32) {
    %c0_i32 = arith.constant 0 : i32
    %c0_i32_0 = arith.constant 0 : i32
    %c0_i32_1 = arith.constant 0 : i32
    %c0_i32_2 = arith.constant 0 : i32
    return %c0_i32, %c0_i32_0, %c0_i32_1 : i32, i32, i32
  }
  func.func @transform_10(%arg0: i32) -> (i32, i32, i32, i32) {
    %c0_i32 = arith.constant 0 : i32
    %c0_i32_0 = arith.constant 0 : i32
    %c0_i32_1 = arith.constant 0 : i32
    %c0_i32_2 = arith.constant 0 : i32
    %c0_i32_3 = arith.constant 0 : i32
    return %c0_i32, %c0_i32_0, %c0_i32_1, %c0_i32_2 : i32, i32, i32, i32
  }
  func.func @transform_11(%arg0: i32) -> (i32, i32, i32) {
    %c0_i32 = arith.constant 0 : i32
    %c0_i32_0 = arith.constant 0 : i32
    %c0_i32_1 = arith.constant 0 : i32
    %c0_i32_2 = arith.constant 0 : i32
    return %c0_i32, %c0_i32_0, %c0_i32_1 : i32, i32, i32
  }
  func.func @transform_12(%arg0: i32) -> (i32, i32, i32) {
    %c0_i32 = arith.constant 0 : i32
    %c0_i32_0 = arith.constant 0 : i32
    %c0_i32_1 = arith.constant 0 : i32
    %c0_i32_2 = arith.constant 0 : i32
    return %c0_i32, %c0_i32_0, %c0_i32_1 : i32, i32, i32
  }
  func.func @transform_13(%arg0: i32) -> (i32, i32) {
    %c0_i32 = arith.constant 0 : i32
    %c0_i32_0 = arith.constant 0 : i32
    %c0_i32_1 = arith.constant 0 : i32
    return %c0_i32, %c0_i32_0 : i32, i32
  }
  func.func @transform_14(%arg0: i32) -> (i32, i32) {
    %c0_i32 = arith.constant 0 : i32
    %c0_i32_0 = arith.constant 0 : i32
    %c0_i32_1 = arith.constant 0 : i32
    return %c0_i32, %c0_i32_0 : i32, i32
  }
  func.func @transform_15(%arg0: i32) -> (i32, i32) {
    %c0_i32 = arith.constant 0 : i32
    %c0_i32_0 = arith.constant 0 : i32
    %c0_i32_1 = arith.constant 0 : i32
    return %c0_i32, %c0_i32_0 : i32, i32
  }
  func.func @transform_16(%arg0: i32) -> (i32, i32, i32) {
    %c0_i32 = arith.constant 0 : i32
    %c0_i32_0 = arith.constant 0 : i32
    %c0_i32_1 = arith.constant 0 : i32
    return %arg0, %c0_i32, %c0_i32_0 : i32, i32, i32
  }
}

</mosaic_0001>

<llo_original>
// kernel: labram_forward.1
$region0: #{labram_forward.1}
  #allocation0 [shape = 'u32[]', space=smem, size = 0x4, offset = 0x4, fixed_abs, tag = 'smem constant byte address 0x4 - core index']
  #allocation1 [shape = 'u32[144,128]{1,0:T(1,128)}', space=vmem, size = 0x12000, scoped, tag = 'internal scratch']
  #allocation2 [shape = 'f32[3,20]{1,0:T(4,128)}', space=vmem, size = 0x800, scoped, tag = 'scratch operand']
  %s0 = inlined_call_operand.vmem [shape: f32[2,6,15], index: 0, kind: input, shape index: {}]
  %s1 = inlined_call_operand.vmem [shape: bf16[15,8], index: 1, kind: input, shape index: {}]
  %s2 = inlined_call_operand.vmem [shape: bf16[2,3,8,8], index: 2, kind: input, shape index: {}]
  %s3 = inlined_call_operand.vmem [shape: f32[9,8], index: 3, kind: input, shape index: {}]
  %s4 = inlined_call_operand.vmem [shape: bf16[8,20], index: 4, kind: input, shape index: {}]
  %s5 = inlined_call_operand.vmem [shape: f32[1,20], index: 5, kind: input, shape index: {}]
  %s6 = inlined_call_operand.vmem [shape: f32[1,20], index: 6, kind: input, shape index: {}]
  %s7 = inlined_call_operand.vmem [shape: f32[3,20], index: 7, kind: input, shape index: {}]
  %s8 = inlined_call_operand.vmem [shape: f32[3,12,20], index: 8, kind: input, shape index: {}]
  %s9 = inlined_call_operand.vmem [shape: f32[3,1,80], index: 9, kind: input, shape index: {}]
  %s10 = inlined_call_operand.vmem [shape: bf16[3,4,20,20], index: 10, kind: input, shape index: {}]
  %s11 = inlined_call_operand.vmem [shape: bf16[3,20,80], index: 11, kind: input, shape index: {}]
  %s12 = inlined_call_operand.vmem [shape: bf16[3,80,20], index: 12, kind: input, shape index: {}]
  %s13 = inlined_call_operand.vmem [shape: f32[2,20], index: 13, kind: input, shape index: {}]
  %s14 = inlined_call_operand.vmem [shape: bf16[20,16], index: 14, kind: input, shape index: {}]
  %s15 = inlined_call_operand.vmem [shape: f32[1,16], index: 15, kind: input, shape index: {}]
  %s16 = inlined_call_operand.hbm [shape: f32[2,1,16], index: 16, kind: output, shape index: {}]
  %s17 = sld [smem:[#allocation0]]
  $region97: #{labram_forward.1} parent=0
    _
  %s19 = ssub.s32 1, %s17
  %s20 = scalar_select 0, %s19, %s17
  $region1: #{labram_forward.1} parent=0
    #allocation3 [shape = 'u8[1024]{0}', space=vmem, size = 0x400, scoped, tag = 'output window, operand 0']
    #allocation4 [shape = 's32[2]{0}', space=sflag, size = 0x8, scoped, tag = 'scoped memory for labram_forward.1']
    %21 = vsyncpa [#allocation4], 0
    %s22 = scalar_lea.sflag [#allocation4], 1
    %23 = vsyncpa %s22, 0
    loop: start=0, step=1, limit=4
    $region2: #{labram_forward.1} parent=1 // loop_pre_header
      _
    $region3: #{labram_forward.1} parent=1 // loop_header
      %s25 = sphi 0, %s29
      %p26 = scmp.ge.s32.totalorder %s25, 4
      %s35 = sphi 0, %s37
      %s38 = sphi 0, %s35
      %s39 = sphi 0, %s38
      %s55 = sphi 0, %s39
      %s59 = sphi 0, %s59
      %s61 = sphi 0, %s59
      %s62 = sphi 0, %s61
      %s76 = sphi 0, %s62
      %s80 = sphi 0, %s80
      %s82 = sphi 0, %s80
      %s83 = sphi 0, %s82
      %s97 = sphi 0, %s83
      %s101 = sphi 0, %s101
      %s103 = sphi 0, %s101
      %s104 = sphi 0, %s103
      %s118 = sphi 0, %s104
      %s122 = sphi 0, %s122
      %s124 = sphi 0, %s122
      %s125 = sphi 0, %s124
      %s139 = sphi 0, %s125
      %s143 = sphi 0, %s143
      %s145 = sphi 0, %s143
      %s146 = sphi 0, %s145
      %s160 = sphi 0, %s146
      %s164 = sphi 0, %s164
      %s166 = sphi 0, %s164
      %s167 = sphi 0, %s166
      %s181 = sphi 0, %s167
      %s185 = sphi 0, %s185
      %s187 = sphi 0, %s185
      %s188 = sphi 0, %s187
      %s202 = sphi 0, %s188
      %s206 = sphi 0, %s206
      %s208 = sphi 0, %s206
      %s209 = sphi 0, %s208
      %s223 = sphi 0, %s209
      %s227 = sphi 0, %s227
      %s229 = sphi 0, %s227
      %s230 = sphi 0, %s229
      %s244 = sphi 0, %s230
      %s248 = sphi 0, %s248
      %s250 = sphi 0, %s248
      %s251 = sphi 0, %s250
      %s265 = sphi 0, %s251
      %s269 = sphi 0, %s269
      %s271 = sphi 0, %s269
      %s272 = sphi 0, %s271
      %s286 = sphi 0, %s272
      %s290 = sphi 0, %s290
      %s292 = sphi 0, %s290
      %s293 = sphi 0, %s292
      %s307 = sphi 0, %s293
      %s311 = sphi 0, %s311
      %s313 = sphi 0, %s311
      %s314 = sphi 0, %s313
      %s328 = sphi 0, %s314
      %s332 = sphi 0, %s332
      %s334 = sphi 0, %s332
      %s335 = sphi 0, %s334
      %s349 = sphi 0, %s335
      %s353 = sphi 0, %s353
      %s355 = sphi 0, %s353
      %s356 = sphi 0, %s355
      %s370 = sphi 0, %s356
      %s376 = sphi 0, %s378
      %s379 = sphi 0, %s376
      %s380 = sphi 0, %s379
      %s396 = sphi 0, %s380
    $region4: #{labram_forward.1} parent=1 // loop_header_branch
      %28 = sbr.rel (%p26) target = $region8
    $region5: #{labram_forward.1} parent=1 // loop_body
      %s30 = ssub.s32 %s25, 1
      %s31 = ssub.s32 %s25, 2
      %s32 = sadd.s32 %s25, 1
      %s33 = ssub.s32 %s25, %s32
      %p34 = scmp.eq.s32.totalorder %s33, 0
      %s36 = sadd.s32 %s35, 1
      %s37 = scalar_select %p34, %s35, %s36
      %p40 = pneg %p34
      %p41 = scmp.eq.s32.totalorder %s25, 1
      %p42 = por %p40, %p41
      %p43 = scmp.ne.s32.totalorder %s35, %s38
      %p44 = scmp.eq.s32.totalorder %s25, 0
      %p45 = por %p43, %p44
      %p46 = scmp.ne.s32.totalorder %s35, %s38
      %p47 = scmp.eq.s32.totalorder %s30, 1
      %p48 = por %p46, %p47
      %p49 = scmp.ne.s32.totalorder %s38, %s39
      %p50 = scmp.eq.s32.totalorder %s30, 0
      %p51 = por %p49, %p50
      %p52 = scmp.ne.s32.totalorder %s38, %s39
      %p53 = scmp.eq.s32.totalorder %s31, 1
      %p54 = por %p52, %p53
      %p56 = scmp.ne.s32.totalorder %s39, %s55
      %p57 = scmp.eq.s32.totalorder %s31, 0
      %p58 = por %p56, %p57
      %s60 = sadd.s32 %s59, 1
      %p63 = scmp.eq.s32.totalorder %s25, 1
      %p64 = scmp.ne.s32.totalorder %s59, %s61
      %p65 = scmp.eq.s32.totalorder %s25, 0
      %p66 = por %p64, %p65
      %p67 = scmp.ne.s32.totalorder %s59, %s61
      %p68 = scmp.eq.s32.totalorder %s30, 1
      %p69 = por %p67, %p68
      %p70 = scmp.ne.s32.totalorder %s61, %s62
      %p71 = scmp.eq.s32.totalorder %s30, 0
      %p72 = por %p70, %p71
      %p73 = scmp.ne.s32.totalorder %s61, %s62
      %p74 = scmp.eq.s32.totalorder %s31, 1
      %p75 = por %p73, %p74
      %p77 = scmp.ne.s32.totalorder %s62, %s76
      %p78 = scmp.eq.s32.totalorder %s31, 0
      %p79 = por %p77, %p78
      %s81 = sadd.s32 %s80, 1
      %p84 = scmp.eq.s32.totalorder %s25, 1
      %p85 = scmp.ne.s32.totalorder %s80, %s82
      %p86 = scmp.eq.s32.totalorder %s25, 0
      %p87 = por %p85, %p86
      %p88 = scmp.ne.s32.totalorder %s80, %s82
      %p89 = scmp.eq.s32.totalorder %s30, 1
      %p90 = por %p88, %p89
      %p91 = scmp.ne.s32.totalorder %s82, %s83
      %p92 = scmp.eq.s32.totalorder %s30, 0
      %p93 = por %p91, %p92
      %p94 = scmp.ne.s32.totalorder %s82, %s83
      %p95 = scmp.eq.s32.totalorder %s31, 1
      %p96 = por %p94, %p95
      %p98 = scmp.ne.s32.totalorder %s83, %s97
      %p99 = scmp.eq.s32.totalorder %s31, 0
      %p100 = por %p98, %p99
      %s102 = sadd.s32 %s101, 1
      %p105 = scmp.eq.s32.totalorder %s25, 1
      %p106 = scmp.ne.s32.totalorder %s101, %s103
      %p107 = scmp.eq.s32.totalorder %s25, 0
      %p108 = por %p106, %p107
      %p109 = scmp.ne.s32.totalorder %s101, %s103
      %p110 = scmp.eq.s32.totalorder %s30, 1
      %p111 = por %p109, %p110
      %p112 = scmp.ne.s32.totalorder %s103, %s104
      %p113 = scmp.eq.s32.totalorder %s30, 0
      %p114 = por %p112, %p113
      %p115 = scmp.ne.s32.totalorder %s103, %s104
      %p116 = scmp.eq.s32.totalorder %s31, 1
      %p117 = por %p115, %p116
      %p119 = scmp.ne.s32.totalorder %s104, %s118
      %p120 = scmp.eq.s32.totalorder %s31, 0
      %p121 = por %p119, %p120
      %s123 = sadd.s32 %s122, 1
      %p126 = scmp.eq.s32.totalorder %s25, 1
      %p127 = scmp.ne.s32.totalorder %s122, %s124
      %p128 = scmp.eq.s32.totalorder %s25, 0
      %p129 = por %p127, %p128
      %p130 = scmp.ne.s32.totalorder %s122, %s124
      %p131 = scmp.eq.s32.totalorder %s30, 1
      %p132 = por %p130, %p131
      %p133 = scmp.ne.s32.totalorder %s124, %s125
      %p134 = scmp.eq.s32.totalorder %s30, 0
      %p135 = por %p133, %p134
      %p136 = scmp.ne.s32.totalorder %s124, %s125
      %p137 = scmp.eq.s32.totalorder %s31, 1
      %p138 = por %p136, %p137
      %p140 = scmp.ne.s32.totalorder %s125, %s139
      %p141 = scmp.eq.s32.totalorder %s31, 0
      %p142 = por %p140, %p141
      %s144 = sadd.s32 %s143, 1
      %p147 = scmp.eq.s32.totalorder %s25, 1
      %p148 = scmp.ne.s32.totalorder %s143, %s145
      %p149 = scmp.eq.s32.totalorder %s25, 0
      %p150 = por %p148, %p149
      %p151 = scmp.ne.s32.totalorder %s143, %s145
      %p152 = scmp.eq.s32.totalorder %s30, 1
      %p153 = por %p151, %p152
      %p154 = scmp.ne.s32.totalorder %s145, %s146
      %p155 = scmp.eq.s32.totalorder %s30, 0
      %p156 = por %p154, %p155
      %p157 = scmp.ne.s32.totalorder %s145, %s146
      %p158 = scmp.eq.s32.totalorder %s31, 1
      %p159 = por %p157, %p158
      %p161 = scmp.ne.s32.totalorder %s146, %s160
      %p162 = scmp.eq.s32.totalorder %s31, 0
      %p163 = por %p161, %p162
      %s165 = sadd.s32 %s164, 1
      %p168 = scmp.eq.s32.totalorder %s25, 1
      %p169 = scmp.ne.s32.totalorder %s164, %s166
      %p170 = scmp.eq.s32.totalorder %s25, 0
      %p171 = por %p169, %p170
      %p172 = scmp.ne.s32.totalorder %s164, %s166
      %p173 = scmp.eq.s32.totalorder %s30, 1
      %p174 = por %p172, %p173
      %p175 = scmp.ne.s32.totalorder %s166, %s167
      %p176 = scmp.eq.s32.totalorder %s30, 0
      %p177 = por %p175, %p176
      %p178 = scmp.ne.s32.totalorder %s166, %s167
      %p179 = scmp.eq.s32.totalorder %s31, 1
      %p180 = por %p178, %p179
      %p182 = scmp.ne.s32.totalorder %s167, %s181
      %p183 = scmp.eq.s32.totalorder %s31, 0
      %p184 = por %p182, %p183
      %s186 = sadd.s32 %s185, 1
      %p189 = scmp.eq.s32.totalorder %s25, 1
      %p190 = scmp.ne.s32.totalorder %s185, %s187
      %p191 = scmp.eq.s32.totalorder %s25, 0
      %p192 = por %p190, %p191
      %p193 = scmp.ne.s32.totalorder %s185, %s187
      %p194 = scmp.eq.s32.totalorder %s30, 1
      %p195 = por %p193, %p194
      %p196 = scmp.ne.s32.totalorder %s187, %s188
      %p197 = scmp.eq.s32.totalorder %s30, 0
      %p198 = por %p196, %p197
      %p199 = scmp.ne.s32.totalorder %s187, %s188
      %p200 = scmp.eq.s32.totalorder %s31, 1
      %p201 = por %p199, %p200
      %p203 = scmp.ne.s32.totalorder %s188, %s202
      %p204 = scmp.eq.s32.totalorder %s31, 0
      %p205 = por %p203, %p204
      %s207 = sadd.s32 %s206, 1
      %p210 = scmp.eq.s32.totalorder %s25, 1
      %p211 = scmp.ne.s32.totalorder %s206, %s208
      %p212 = scmp.eq.s32.totalorder %s25, 0
      %p213 = por %p211, %p212
      %p214 = scmp.ne.s32.totalorder %s206, %s208
      %p215 = scmp.eq.s32.totalorder %s30, 1
      %p216 = por %p214, %p215
      %p217 = scmp.ne.s32.totalorder %s208, %s209
      %p218 = scmp.eq.s32.totalorder %s30, 0
      %p219 = por %p217, %p218
      %p220 = scmp.ne.s32.totalorder %s208, %s209
      %p221 = scmp.eq.s32.totalorder %s31, 1
      %p222 = por %p220, %p221
      %p224 = scmp.ne.s32.totalorder %s209, %s223
      %p225 = scmp.eq.s32.totalorder %s31, 0
      %p226 = por %p224, %p225
      %s228 = sadd.s32 %s227, 1
      %p231 = scmp.eq.s32.totalorder %s25, 1
      %p232 = scmp.ne.s32.totalorder %s227, %s229
      %p233 = scmp.eq.s32.totalorder %s25, 0
      %p234 = por %p232, %p233
      %p235 = scmp.ne.s32.totalorder %s227, %s229
      %p236 = scmp.eq.s32.totalorder %s30, 1
      %p237 = por %p235, %p236
      %p238 = scmp.ne.s32.totalorder %s229, %s230
      %p239 = scmp.eq.s32.totalorder %s30, 0
      %p240 = por %p238, %p239
      %p241 = scmp.ne.s32.totalorder %s229, %s230
      %p242 = scmp.eq.s32.totalorder %s31, 1
      %p243 = por %p241, %p242
      %p245 = scmp.ne.s32.totalorder %s230, %s244
      %p246 = scmp.eq.s32.totalorder %s31, 0
      %p247 = por %p245, %p246
      %s249 = sadd.s32 %s248, 1
      %p252 = scmp.eq.s32.totalorder %s25, 1
      %p253 = scmp.ne.s32.totalorder %s248, %s250
      %p254 = scmp.eq.s32.totalorder %s25, 0
      %p255 = por %p253, %p254
      %p256 = scmp.ne.s32.totalorder %s248, %s250
      %p257 = scmp.eq.s32.totalorder %s30, 1
      %p258 = por %p256, %p257
      %p259 = scmp.ne.s32.totalorder %s250, %s251
      %p260 = scmp.eq.s32.totalorder %s30, 0
      %p261 = por %p259, %p260
      %p262 = scmp.ne.s32.totalorder %s250, %s251
      %p263 = scmp.eq.s32.totalorder %s31, 1
      %p264 = por %p262, %p263
      %p266 = scmp.ne.s32.totalorder %s251, %s265
      %p267 = scmp.eq.s32.totalorder %s31, 0
      %p268 = por %p266, %p267
      %s270 = sadd.s32 %s269, 1
      %p273 = scmp.eq.s32.totalorder %s25, 1
      %p274 = scmp.ne.s32.totalorder %s269, %s271
      %p275 = scmp.eq.s32.totalorder %s25, 0
      %p276 = por %p274, %p275
      %p277 = scmp.ne.s32.totalorder %s269, %s271
      %p278 = scmp.eq.s32.totalorder %s30, 1
      %p279 = por %p277, %p278
      %p280 = scmp.ne.s32.totalorder %s271, %s272
      %p281 = scmp.eq.s32.totalorder %s30, 0
      %p282 = por %p280, %p281
      %p283 = scmp.ne.s32.totalorder %s271, %s272
      %p284 = scmp.eq.s32.totalorder %s31, 1
      %p285 = por %p283, %p284
      %p287 = scmp.ne.s32.totalorder %s272, %s286
      %p288 = scmp.eq.s32.totalorder %s31, 0
      %p289 = por %p287, %p288
      %s291 = sadd.s32 %s290, 1
      %p294 = scmp.eq.s32.totalorder %s25, 1
      %p295 = scmp.ne.s32.totalorder %s290, %s292
      %p296 = scmp.eq.s32.totalorder %s25, 0
      %p297 = por %p295, %p296
      %p298 = scmp.ne.s32.totalorder %s290, %s292
      %p299 = scmp.eq.s32.totalorder %s30, 1
      %p300 = por %p298, %p299
      %p301 = scmp.ne.s32.totalorder %s292, %s293
      %p302 = scmp.eq.s32.totalorder %s30, 0
      %p303 = por %p301, %p302
      %p304 = scmp.ne.s32.totalorder %s292, %s293
      %p305 = scmp.eq.s32.totalorder %s31, 1
      %p306 = por %p304, %p305
      %p308 = scmp.ne.s32.totalorder %s293, %s307
      %p309 = scmp.eq.s32.totalorder %s31, 0
      %p310 = por %p308, %p309
      %s312 = sadd.s32 %s311, 1
      %p315 = scmp.eq.s32.totalorder %s25, 1
      %p316 = scmp.ne.s32.totalorder %s311, %s313
      %p317 = scmp.eq.s32.totalorder %s25, 0
      %p318 = por %p316, %p317
      %p319 = scmp.ne.s32.totalorder %s311, %s313
      %p320 = scmp.eq.s32.totalorder %s30, 1
      %p321 = por %p319, %p320
      %p322 = scmp.ne.s32.totalorder %s313, %s314
      %p323 = scmp.eq.s32.totalorder %s30, 0
      %p324 = por %p322, %p323
      %p325 = scmp.ne.s32.totalorder %s313, %s314
      %p326 = scmp.eq.s32.totalorder %s31, 1
      %p327 = por %p325, %p326
      %p329 = scmp.ne.s32.totalorder %s314, %s328
      %p330 = scmp.eq.s32.totalorder %s31, 0
      %p331 = por %p329, %p330
      %s333 = sadd.s32 %s332, 1
      %p336 = scmp.eq.s32.totalorder %s25, 1
      %p337 = scmp.ne.s32.totalorder %s332, %s334
      %p338 = scmp.eq.s32.totalorder %s25, 0
      %p339 = por %p337, %p338
      %p340 = scmp.ne.s32.totalorder %s332, %s334
      %p341 = scmp.eq.s32.totalorder %s30, 1
      %p342 = por %p340, %p341
      %p343 = scmp.ne.s32.totalorder %s334, %s335
      %p344 = scmp.eq.s32.totalorder %s30, 0
      %p345 = por %p343, %p344
      %p346 = scmp.ne.s32.totalorder %s334, %s335
      %p347 = scmp.eq.s32.totalorder %s31, 1
      %p348 = por %p346, %p347
      %p350 = scmp.ne.s32.totalorder %s335, %s349
      %p351 = scmp.eq.s32.totalorder %s31, 0
      %p352 = por %p350, %p351
      %s354 = sadd.s32 %s353, 1
      %p357 = scmp.eq.s32.totalorder %s25, 1
      %p358 = scmp.ne.s32.totalorder %s353, %s355
      %p359 = scmp.eq.s32.totalorder %s25, 0
      %p360 = por %p358, %p359
      %p361 = scmp.ne.s32.totalorder %s353, %s355
      %p362 = scmp.eq.s32.totalorder %s30, 1
      %p363 = por %p361, %p362
      %p364 = scmp.ne.s32.totalorder %s355, %s356
      %p365 = scmp.eq.s32.totalorder %s30, 0
      %p366 = por %p364, %p365
      %p367 = scmp.ne.s32.totalorder %s355, %s356
      %p368 = scmp.eq.s32.totalorder %s31, 1
      %p369 = por %p367, %p368
      %p371 = scmp.ne.s32.totalorder %s356, %s370
      %p372 = scmp.eq.s32.totalorder %s31, 0
      %p373 = por %p371, %p372
      %s374 = ssub.s32 %s25, %s32
      %p375 = scmp.eq.s32.totalorder %s374, 0
      %s377 = sadd.s32 %s376, 1
      %s378 = scalar_select %p375, %s376, %s377
      %p381 = pneg %p375
      %p382 = scmp.eq.s32.totalorder %s25, 1
      %p383 = por %p381, %p382
      %p384 = scmp.ne.s32.totalorder %s376, %s379
      %p385 = scmp.eq.s32.totalorder %s25, 0
      %p386 = por %p384, %p385
      %p387 = scmp.ne.s32.totalorder %s376, %s379
      %p388 = scmp.eq.s32.totalorder %s30, 1
      %p389 = por %p387, %p388
      %p390 = scmp.ne.s32.totalorder %s379, %s380
      %p391 = scmp.eq.s32.totalorder %s30, 0
      %p392 = por %p390, %p391
      %p393 = scmp.ne.s32.totalorder %s379, %s380
      %p394 = scmp.eq.s32.totalorder %s31, 1
      %p395 = por %p393, %p394
      %p397 = scmp.ne.s32.totalorder %s380, %s396
      %p398 = scmp.eq.s32.totalorder %s31, 0
      %p399 = por %p397, %p398
      %p400 = scmp.le.s32.totalorder 1, %s25
      %p401 = scmp.lt.s32.totalorder %s25, 3
      %p402 = pnand %p400, %p401
      %p403 = pneg %p402
      // Predicated region
      $region9: #{labram_forward.1} parent=5 // pred_check
        _
      $region10: #{labram_forward.1} parent=5 // pred_check_branch
        %405 = sbr.rel (%p402) target = $region12
      $region11: #{labram_forward.1} parent=5 // pred_region
        %s406 = ssub.s32 %s25, 1
        // Predicated region
        $region13: #{labram_forward.1} parent=11 // pred_check
          %p407 = pneg %p72
        $region14: #{labram_forward.1} parent=11 // pred_check_branch
          %409 = sbr.rel (%p407) target = $region16
        $region15: #{labram_forward.1} parent=11 // pred_region
          _
        $region16: #{labram_forward.1} parent=11 // pred_fallthru
          _
        // Predicated region
        $region17: #{labram_forward.1} parent=11 // pred_check
          %p410 = pneg %p93
        $region18: #{labram_forward.1} parent=11 // pred_check_branch
          %412 = sbr.rel (%p410) target = $region20
        $region19: #{labram_forward.1} parent=11 // pred_region
          _
        $region20: #{labram_forward.1} parent=11 // pred_fallthru
          _
        // Predicated region
        $region21: #{labram_forward.1} parent=11 // pred_check
          %p413 = pneg %p114
        $region22: #{labram_forward.1} parent=11 // pred_check_branch
          %415 = sbr.rel (%p413) target = $region24
        $region23: #{labram_forward.1} parent=11 // pred_region
          _
        $region24: #{labram_forward.1} parent=11 // pred_fallthru
          _
        // Predicated region
        $region25: #{labram_forward.1} parent=11 // pred_check
          %p416 = pneg %p135
        $region26: #{labram_forward.1} parent=11 // pred_check_branch
          %418 = sbr.rel (%p416) target = $region28
        $region27: #{labram_forward.1} parent=11 // pred_region
          _
        $region28: #{labram_forward.1} parent=11 // pred_fallthru
          _
        // Predicated region
        $region29: #{labram_forward.1} parent=11 // pred_check
          %p419 = pneg %p156
        $region30: #{labram_forward.1} parent=11 // pred_check_branch
          %421 = sbr.rel (%p419) target = $region32
        $region31: #{labram_forward.1} parent=11 // pred_region
          _
        $region32: #{labram_forward.1} parent=11 // pred_fallthru
          _
        // Predicated region
        $region33: #{labram_forward.1} parent=11 // pred_check
          %p422 = pneg %p177
        $region34: #{labram_forward.1} parent=11 // pred_check_branch
          %424 = sbr.rel (%p422) target = $region36
        $region35: #{labram_forward.1} parent=11 // pred_region
          _
        $region36: #{labram_forward.1} parent=11 // pred_fallthru
          _
        // Predicated region
        $region37: #{labram_forward.1} parent=11 // pred_check
          %p425 = pneg %p198
        $region38: #{labram_forward.1} parent=11 // pred_check_branch
          %427 = sbr.rel (%p425) target = $region40
        $region39: #{labram_forward.1} parent=11 // pred_region
          _
        $region40: #{labram_forward.1} parent=11 // pred_fallthru
          _
        // Predicated region
        $region41: #{labram_forward.1} parent=11 // pred_check
          %p428 = pneg %p219
        $region42: #{labram_forward.1} parent=11 // pred_check_branch
          %430 = sbr.rel (%p428) target = $region44
        $region43: #{labram_forward.1} parent=11 // pred_region
          _
        $region44: #{labram_forward.1} parent=11 // pred_fallthru
          _
        // Predicated region
        $region45: #{labram_forward.1} parent=11 // pred_check
          %p431 = pneg %p240
        $region46: #{labram_forward.1} parent=11 // pred_check_branch
          %433 = sbr.rel (%p431) target = $region48
        $region47: #{labram_forward.1} parent=11 // pred_region
          _
        $region48: #{labram_forward.1} parent=11 // pred_fallthru
          _
        // Predicated region
        $region49: #{labram_forward.1} parent=11 // pred_check
          %p434 = pneg %p261
        $region50: #{labram_forward.1} parent=11 // pred_check_branch
          %436 = sbr.rel (%p434) target = $region52
        $region51: #{labram_forward.1} parent=11 // pred_region
          _
        $region52: #{labram_forward.1} parent=11 // pred_fallthru
          _
        // Predicated region
        $region53: #{labram_forward.1} parent=11 // pred_check
          %p437 = pneg %p282
        $region54: #{labram_forward.1} parent=11 // pred_check_branch
          %439 = sbr.rel (%p437) target = $region56
        $region55: #{labram_forward.1} parent=11 // pred_region
          _
        $region56: #{labram_forward.1} parent=11 // pred_fallthru
          _
        // Predicated region
        $region57: #{labram_forward.1} parent=11 // pred_check
          %p440 = pneg %p303
        $region58: #{labram_forward.1} parent=11 // pred_check_branch
          %442 = sbr.rel (%p440) target = $region60
        $region59: #{labram_forward.1} parent=11 // pred_region
          _
        $region60: #{labram_forward.1} parent=11 // pred_fallthru
          _
        // Predicated region
        $region61: #{labram_forward.1} parent=11 // pred_check
          %p443 = pneg %p324
        $region62: #{labram_forward.1} parent=11 // pred_check_branch
          %445 = sbr.rel (%p443) target = $region64
        $region63: #{labram_forward.1} parent=11 // pred_region
          _
        $region64: #{labram_forward.1} parent=11 // pred_fallthru
          _
        // Predicated region
        $region65: #{labram_forward.1} parent=11 // pred_check
          %p446 = pneg %p345
        $region66: #{labram_forward.1} parent=11 // pred_check_branch
          %448 = sbr.rel (%p446) target = $region68
        $region67: #{labram_forward.1} parent=11 // pred_region
          _
        $region68: #{labram_forward.1} parent=11 // pred_fallthru
          _
        // Predicated region
        $region69: #{labram_forward.1} parent=11 // pred_check
          %p449 = pneg %p366
        $region70: #{labram_forward.1} parent=11 // pred_check_branch
          %451 = sbr.rel (%p449) target = $region72
        $region71: #{labram_forward.1} parent=11 // pred_region
          _
        $region72: #{labram_forward.1} parent=11 // pred_fallthru
          _
      $region12: #{labram_forward.1} parent=5 // pred_fallthru
        _
      %p452 = scmp.lt.s32.totalorder %s25, 2
      // Predicated region
      $region73: #{labram_forward.1} parent=5 // pred_check
        %p453 = pneg %p452
      $region74: #{labram_forward.1} parent=5 // pred_check_branch
        %455 = sbr.rel (%p453) target = $region76
      $region75: #{labram_forward.1} parent=5 // pred_region
        // Predicated region
        $region77: #{labram_forward.1} parent=75 // pred_check
          %p456 = pneg %p45
        $region78: #{labram_forward.1} parent=75 // pred_check_branch
          %458 = sbr.rel (%p456) target = $region80
        $region79: #{labram_forward.1} parent=75 // pred_region
          %p459 = scmp.lt.s32.totalorder %s25, 1
          %s460 = scalar_select %p459, %s25, 1
          %s461 = smul.addr %s460, 8
          %s462 = scalar_lea.vmem %s0, %s461
        $region80: #{labram_forward.1} parent=75 // pred_fallthru
          _
      $region76: #{labram_forward.1} parent=5 // pred_fallthru
        _
      %p463 = scmp.le.s32.totalorder 1, %s25
      %p464 = scmp.lt.s32.totalorder %s25, 3
      %p465 = pnand %p463, %p464
      %p466 = pneg %p465
      // Predicated region
      $region81: #{labram_forward.1} parent=5 // pred_check
        _
      $region82: #{labram_forward.1} parent=5 // pred_check_branch
        %468 = sbr.rel (%p465) target = $region84
      $region83: #{labram_forward.1} parent=5 // pred_region
        %s469 = ssub.s32 %s25, 1
        %p470 = scmp.lt.s32.totalorder %s30, 1
        %s471 = scalar_select %p470, %s30, 1
        %s472 = smul.addr %s471, 8
        %s473 = scalar_lea.vmem %s0, %s472
        %p474 = pneg %p51
        %p475 = pneg %p48
        %p476 = pneg %p72
        %p477 = pneg %p69
        %p478 = pneg %p93
        %p479 = pneg %p90
        %p480 = pneg %p114
        %p481 = pneg %p111
        %p482 = pneg %p135
        %p483 = pneg %p132
        %p484 = pneg %p156
        %p485 = pneg %p153
        %p486 = pneg %p177
        %p487 = pneg %p174
        %p488 = pneg %p198
        %p489 = pneg %p195
        %p490 = pneg %p219
        %p491 = pneg %p216
        %p492 = pneg %p240
        %p493 = pneg %p237
        %p494 = pneg %p261
        %p495 = pneg %p258
        %p496 = pneg %p282
        %p497 = pneg %p279
        %p498 = pneg %p303
        %p499 = pneg %p300
        %p500 = pneg %p324
        %p501 = pneg %p321
        %p502 = pneg %p345
        %p503 = pneg %p342
        %p504 = pneg %p366
        %p505 = pneg %p363
        %p506 = pneg %p392
        %p507 = pneg %p389
        %s508 = sand.u32 %s379, 1
        %s509 = scalar_lea.sflag [#allocation4], %s508
        %s510 = sand.u32 %s379, 1
        %s511 = scalar_lea.vmem [#allocation3], %s510
        %p512 = scmp.lt.s32.totalorder %s30, 1
        %s513 = scalar_select %p512, %s30, 1
        %s514 = smul.addr %s513, 8
        %s515 = scalar_lea.vmem %s0, %s514
        %v517 = vld [vmem:[%s3] sm:$0xff]
        %v518 = vld [vmem:[%s3 + $0x8] sm:$0x1]
        %v519 = vld [vmem:[%s515] sm:$0x3f]
        %v520 = vpack.c.bf16 %v519, %v519
        %v521 = vld [vmem:[%s1] sm:$0xf]
        %v522 = vld [vmem:[%s1 + $0x4] sm:$0xf]
        %v523 = vlaneseq
        %v524 = vshrl.u32 %v523, 7
        %v525 = vsub.s32 0, %v524
        %v526 = vrot.slane %v517, %v525
        %v529 = vunpack.c.l.b16 %v521
        %v530 = vunpack.c.l.b16 %v522
        %v531 = vpack.c.b16 %v530, %v529
        %vm532 = vcmask 121856
        %v534 = vsel %vm532, %v520, 0
        %vm536 = vcmask 1046528
        %vm537 = vcmask 1047552
        %v538 = vsel %vm536, 4294967295, 65535
        %v539 = vsel %vm537, %v538, 0
        %v541 = vand.u32 %v531, %v539
        %543 = vmatprep.subr.bf16.mxu0 0
        %544 = vmatpush1.bf16.msra.mxu0 %v541
        %545 = vmatprep.subr.bf16.mxu0 0
        %546 = vmatpush1.bf16.msra.mxu0 0
        %547 = vmatprep.subr.bf16.mxu0 0
        %548 = vmatpush1.bf16.msra.mxu0 0
        %549 = vmatprep.subr.bf16.mxu0 0
        %550 = vmatpush1.bf16.msra.mxu0 0
        %551 = vmatprep.subr.bf16.mxu0 0
        %552 = vmatpush1.bf16.msra.mxu0 0
        %553 = vmatprep.subr.bf16.mxu0 0
        %554 = vmatpush1.bf16.msra.mxu0 0
        %555 = vmatprep.subr.bf16.mxu0 0
        %556 = vmatpush1.bf16.msra.mxu0 0
        %557 = vmatprep.subr.bf16.mxu0 0
        %558 = vmatpush1.bf16.msra.mxu0 0
        %559 = vmatprep.subr.bf16.mxu0 0
        %560 = vmatpush1.bf16.msra.mxu0 0
        %561 = vmatprep.subr.bf16.mxu0 0
        %562 = vmatpush1.bf16.msra.mxu0 0
        %563 = vmatprep.subr.bf16.mxu0 0
        %564 = vmatpush1.bf16.msra.mxu0 0
        %565 = vmatprep.subr.bf16.mxu0 0
        %566 = vmatpush1.bf16.msra.mxu0 0
        %567 = vmatprep.subr.bf16.mxu0 0
        %568 = vmatpush1.bf16.msra.mxu0 0
        %569 = vmatprep.subr.bf16.mxu0 0
        %570 = vmatpush1.bf16.msra.mxu0 0
        %571 = vmatprep.subr.bf16.mxu0 0
        %572 = vmatpush1.bf16.msra.mxu0 0
        %573 = vmatprep.subr.bf16.mxu0 0
        %574 = vmatpush1.bf16.msra.mxu0 0
        %575 = vmatprep.mubr.bf16.mxu0 0
        %576 = vmatmul.mubr.bf16.gmra.mrb[0].mxu0 %v534
        %v577 = vpop.f32.mrb[0].mxu0
        %v578 = vadd.f32 %v526, %v577
        %v579 = vpop.f32.mrb[0].mxu0
        %v580 = vpop.f32.mrb[0].mxu0
        %v581 = vpop.f32.mrb[0].mxu0
        %582 = vdwg.mxu0
        %vm583 = vcmask 62464
        %v584 = vsel %vm583, %v578, 0.0
        %585 = vadd.xlane.f32.xlu0 %v584
        %v586 = vpop.xlane.xlu0 %585
        %v587 = vrcp.pop 8.0
        %v588 = vmul.f32 %v586, %v587
        %v589 = vsub.f32 %v578, %v588
        %v590 = vmul.f32 %v589, %v589
        %v591 = vsel %vm583, %v590, 0.0
        %592 = vadd.xlane.f32.xlu0 %v591
        %v593 = vpop.xlane.xlu0 %592
        %v594 = vmul.f32 %v593, %v587
        %v595 = vadd.f32 %v594, 1e-05
        %v596 = vrsqrt.pop %v595
        %v597 = vmul.f32 %v589, %v596
        %v598 = vlaneseq
        %v599 = vshrl.u32 %v598, 7
        %v600 = vsub.s32 1, %v599
        %v601 = vrot.slane %v517, %v600
        %v602 = vmul.f32 %v597, %v601
        %v603 = vlaneseq
        %v604 = vshrl.u32 %v603, 7
        %v605 = vsub.s32 2, %v604
        %v606 = vrot.slane %v517, %v605
        %v607 = vadd.f32 %v602, %v606
        %v608 = vld [vmem:[%s2] sm:$0xf]
        %v609 = vld [vmem:[%s2 + $0x4] sm:$0xf]
        %v610 = vld [vmem:[%s2 + $0x8] sm:$0xf]
        %v611 = vld [vmem:[%s2 + $0xc] sm:$0xf]
        %v612 = vld [vmem:[%s2 + $0x10] sm:$0xf]
        %v613 = vld [vmem:[%s2 + $0x14] sm:$0xf]
        %v614 = vpack.c.bf16 %v607, %v607
        %v616 = vshrl.u32 %v614, 16
        %v618 = vshll.u32 %v614, 16
        %v620 = vrot.slane %v618, 1
        %v621 = vor.u32 %v616, %v620
        %vm622 = vcmask 64512
        %v624 = vsel %vm622, %v621, 0
        %vm626 = vcmask 1043456
        %v628 = vsel %vm626, %v609, 0
        %630 = vmatprep.subr.bf16.mxu0 0
        %631 = vmatpush1.bf16.msra.mxu0 %v628
        %632 = vmatprep.subr.bf16.mxu0 0
        %633 = vmatpush1.bf16.msra.mxu0 0
        %634 = vmatprep.subr.bf16.mxu0 0
        %635 = vmatpush1.bf16.msra.mxu0 0
        %636 = vmatprep.subr.bf16.mxu0 0
        %637 = vmatpush1.bf16.msra.mxu0 0
        %638 = vmatprep.subr.bf16.mxu0 0
        %639 = vmatpush1.bf16.msra.mxu0 0
        %640 = vmatprep.subr.bf16.mxu0 0
        %641 = vmatpush1.bf16.msra.mxu0 0
        %642 = vmatprep.subr.bf16.mxu0 0
        %643 = vmatpush1.bf16.msra.mxu0 0
        %644 = vmatprep.subr.bf16.mxu0 0
        %645 = vmatpush1.bf16.msra.mxu0 0
        %646 = vmatprep.subr.bf16.mxu0 0
        %647 = vmatpush1.bf16.msra.mxu0 0
        %648 = vmatprep.subr.bf16.mxu0 0
        %649 = vmatpush1.bf16.msra.mxu0 0
        %650 = vmatprep.subr.bf16.mxu0 0
        %651 = vmatpush1.bf16.msra.mxu0 0
        %652 = vmatprep.subr.bf16.mxu0 0
        %653 = vmatpush1.bf16.msra.mxu0 0
        %654 = vmatprep.subr.bf16.mxu0 0
        %655 = vmatpush1.bf16.msra.mxu0 0
        %656 = vmatprep.subr.bf16.mxu0 0
        %657 = vmatpush1.bf16.msra.mxu0 0
        %658 = vmatprep.subr.bf16.mxu0 0
        %659 = vmatpush1.bf16.msra.mxu0 0
        %660 = vmatprep.subr.bf16.mxu0 0
        %661 = vmatpush1.bf16.msra.mxu0 0
        %662 = vmatprep.mubr.bf16.mxu0 0
        %663 = vmatmul.mubr.bf16.gmra.mrb[0].mxu0 %v624
        %v664 = vpop.f32.mrb[0].mxu0
        %v665 = vadd.f32 0.0, %v664
        %v666 = vpop.f32.mrb[0].mxu0
        %v667 = vpop.f32.mrb[0].mxu0
        %v668 = vpop.f32.mrb[0].mxu0
        %669 = vdwg.mxu0
        %v670 = vsel %vm622, %v614, 0
        %v673 = vsel %vm626, %v608, 0
        %675 = vmatprep.subr.bf16.mxu0 0
        %676 = vmatpush1.bf16.msra.mxu0 %v673
        %677 = vmatprep.subr.bf16.mxu0 0
        %678 = vmatpush1.bf16.msra.mxu0 0
        %679 = vmatprep.subr.bf16.mxu0 0
        %680 = vmatpush1.bf16.msra.mxu0 0
        %681 = vmatprep.subr.bf16.mxu0 0
        %682 = vmatpush1.bf16.msra.mxu0 0
        %683 = vmatprep.subr.bf16.mxu0 0
        %684 = vmatpush1.bf16.msra.mxu0 0
        %685 = vmatprep.subr.bf16.mxu0 0
        %686 = vmatpush1.bf16.msra.mxu0 0
        %687 = vmatprep.subr.bf16.mxu0 0
        %688 = vmatpush1.bf16.msra.mxu0 0
        %689 = vmatprep.subr.bf16.mxu0 0
        %690 = vmatpush1.bf16.msra.mxu0 0
        %691 = vmatprep.subr.bf16.mxu0 0
        %692 = vmatpush1.bf16.msra.mxu0 0
        %693 = vmatprep.subr.bf16.mxu0 0
        %694 = vmatpush1.bf16.msra.mxu0 0
        %695 = vmatprep.subr.bf16.mxu0 0
        %696 = vmatpush1.bf16.msra.mxu0 0
        %697 = vmatprep.subr.bf16.mxu0 0
        %698 = vmatpush1.bf16.msra.mxu0 0
        %699 = vmatprep.subr.bf16.mxu0 0
        %700 = vmatpush1.bf16.msra.mxu0 0
        %701 = vmatprep.subr.bf16.mxu0 0
        %702 = vmatpush1.bf16.msra.mxu0 0
        %703 = vmatprep.subr.bf16.mxu0 0
        %704 = vmatpush1.bf16.msra.mxu0 0
        %705 = vmatprep.subr.bf16.mxu0 0
        %706 = vmatpush1.bf16.msra.mxu0 0
        %707 = vmatprep.mubr.bf16.mxu0 0
        %708 = vmatmul.mubr.bf16.gmra.mrb[0].mxu0 %v670
        %v709 = vpop.f32.mrb[0].mxu0
        %v710 = vadd.f32 %v665, %v709
        %v711 = vpop.f32.mrb[0].mxu0
        %v712 = vpop.f32.mrb[0].mxu0
        %v713 = vpop.f32.mrb[0].mxu0
        %714 = vdwg.mxu0
        %v716 = vrot.slane %v614, 1
        %v718 = vsel %vm622, %v716, 0
        %v721 = vsel %vm626, %v610, 0
        %723 = vmatprep.subr.bf16.mxu0 0
        %724 = vmatpush1.bf16.msra.mxu0 %v721
        %725 = vmatprep.subr.bf16.mxu0 0
        %726 = vmatpush1.bf16.msra.mxu0 0
        %727 = vmatprep.subr.bf16.mxu0 0
        %728 = vmatpush1.bf16.msra.mxu0 0
        %729 = vmatprep.subr.bf16.mxu0 0
        %730 = vmatpush1.bf16.msra.mxu0 0
        %731 = vmatprep.subr.bf16.mxu0 0
        %732 = vmatpush1.bf16.msra.mxu0 0
        %733 = vmatprep.subr.bf16.mxu0 0
        %734 = vmatpush1.bf16.msra.mxu0 0
        %735 = vmatprep.subr.bf16.mxu0 0
        %736 = vmatpush1.bf16.msra.mxu0 0
        %737 = vmatprep.subr.bf16.mxu0 0
        %738 = vmatpush1.bf16.msra.mxu0 0
        %739 = vmatprep.subr.bf16.mxu0 0
        %740 = vmatpush1.bf16.msra.mxu0 0
        %741 = vmatprep.subr.bf16.mxu0 0
        %742 = vmatpush1.bf16.msra.mxu0 0
        %743 = vmatprep.subr.bf16.mxu0 0
        %744 = vmatpush1.bf16.msra.mxu0 0
        %745 = vmatprep.subr.bf16.mxu0 0
        %746 = vmatpush1.bf16.msra.mxu0 0
        %747 = vmatprep.subr.bf16.mxu0 0
        %748 = vmatpush1.bf16.msra.mxu0 0
        %749 = vmatprep.subr.bf16.mxu0 0
        %750 = vmatpush1.bf16.msra.mxu0 0
        %751 = vmatprep.subr.bf16.mxu0 0
        %752 = vmatpush1.bf16.msra.mxu0 0
        %753 = vmatprep.subr.bf16.mxu0 0
        %754 = vmatpush1.bf16.msra.mxu0 0
        %755 = vmatprep.mubr.bf16.mxu0 0
        %756 = vmatmul.mubr.bf16.gmra.mrb[0].mxu0 %v718
        %v757 = vpop.f32.mrb[0].mxu0
        %v758 = vadd.f32 0.0, %v757
        %v759 = vpop.f32.mrb[0].mxu0
        %v760 = vpop.f32.mrb[0].mxu0
        %v761 = vpop.f32.mrb[0].mxu0
        %762 = vdwg.mxu0
        %v763 = vadd.f32 %v710, %v758
        %v764 = vlaneseq
        %v765 = vshrl.u32 %v764, 7
        %v766 = vsub.s32 3, %v765
        %v767 = vrot.slane %v517, %v766
        %v768 = vadd.f32 %v763, %v767
        %vm769 = vcmask 60416
        %v770 = vsel %vm769, %v768, 0.0
        %771 = vadd.xlane.f32.xlu0 %v770
        %v772 = vpop.xlane.xlu0 %771
        %v773 = vmul.f32 %v772, %v587
        %v774 = vsub.f32 %v768, %v773
        %v775 = vmul.f32 %v774, %v774
        %v776 = vsel %vm769, %v775, 0.0
        %777 = vadd.xlane.f32.xlu0 %v776
        %v778 = vpop.xlane.xlu0 %777
        %v779 = vmul.f32 %v778, %v587
        %v780 = vadd.f32 %v779, 1e-05
        %v781 = vrsqrt.pop %v780
        %v782 = vmul.f32 %v774, %v781
        %v783 = vlaneseq
        %v784 = vshrl.u32 %v783, 7
        %v785 = vsub.s32 4, %v784
        %v786 = vrot.slane %v517, %v785
        %v787 = vmul.f32 %v782, %v786
        %v788 = vlaneseq
        %v789 = vshrl.u32 %v788, 7
        %v790 = vsub.s32 5, %v789
        %v791 = vrot.slane %v517, %v790
        %v792 = vadd.f32 %v787, %v791
        %v793 = vpack.c.bf16 %v792, %v792
        %v795 = vshrl.u32 %v793, 16
        %v797 = vshll.u32 %v793, 16
        %v799 = vrot.slane %v797, 1
        %v800 = vor.u32 %v795, %v799
        %v802 = vsel %vm622, %v800, 0
        %v805 = vsel %vm626, %v612, 0
        %807 = vmatprep.subr.bf16.mxu0 0
        %808 = vmatpush1.bf16.msra.mxu0 %v805
        %809 = vmatprep.subr.bf16.mxu0 0
        %810 = vmatpush1.bf16.msra.mxu0 0
        %811 = vmatprep.subr.bf16.mxu0 0
        %812 = vmatpush1.bf16.msra.mxu0 0
        %813 = vmatprep.subr.bf16.mxu0 0
        %814 = vmatpush1.bf16.msra.mxu0 0
        %815 = vmatprep.subr.bf16.mxu0 0
        %816 = vmatpush1.bf16.msra.mxu0 0
        %817 = vmatprep.subr.bf16.mxu0 0
        %818 = vmatpush1.bf16.msra.mxu0 0
        %819 = vmatprep.subr.bf16.mxu0 0
        %820 = vmatpush1.bf16.msra.mxu0 0
        %821 = vmatprep.subr.bf16.mxu0 0
        %822 = vmatpush1.bf16.msra.mxu0 0
        %823 = vmatprep.subr.bf16.mxu0 0
        %824 = vmatpush1.bf16.msra.mxu0 0
        %825 = vmatprep.subr.bf16.mxu0 0
        %826 = vmatpush1.bf16.msra.mxu0 0
        %827 = vmatprep.subr.bf16.mxu0 0
        %828 = vmatpush1.bf16.msra.mxu0 0
        %829 = vmatprep.subr.bf16.mxu0 0
        %830 = vmatpush1.bf16.msra.mxu0 0
        %831 = vmatprep.subr.bf16.mxu0 0
        %832 = vmatpush1.bf16.msra.mxu0 0
        %833 = vmatprep.subr.bf16.mxu0 0
        %834 = vmatpush1.bf16.msra.mxu0 0
        %835 = vmatprep.subr.bf16.mxu0 0
        %836 = vmatpush1.bf16.msra.mxu0 0
        %837 = vmatprep.subr.bf16.mxu0 0
        %838 = vmatpush1.bf16.msra.mxu0 0
        %839 = vmatprep.mubr.bf16.mxu0 0
        %840 = vmatmul.mubr.bf16.gmra.mrb[0].mxu0 %v802
        %v841 = vpop.f32.mrb[0].mxu0
        %v842 = vadd.f32 0.0, %v841
        %v843 = vpop.f32.mrb[0].mxu0
        %v844 = vpop.f32.mrb[0].mxu0
        %v845 = vpop.f32.mrb[0].mxu0
        %846 = vdwg.mxu0
        %v847 = vsel %vm622, %v793, 0
        %v850 = vsel %vm626, %v611, 0
        %852 = vmatprep.subr.bf16.mxu0 0
        %853 = vmatpush1.bf16.msra.mxu0 %v850
        %854 = vmatprep.subr.bf16.mxu0 0
        %855 = vmatpush1.bf16.msra.mxu0 0
        %856 = vmatprep.subr.bf16.mxu0 0
        %857 = vmatpush1.bf16.msra.mxu0 0
        %858 = vmatprep.subr.bf16.mxu0 0
        %859 = vmatpush1.bf16.msra.mxu0 0
        %860 = vmatprep.subr.bf16.mxu0 0
        %861 = vmatpush1.bf16.msra.mxu0 0
        %862 = vmatprep.subr.bf16.mxu0 0
        %863 = vmatpush1.bf16.msra.mxu0 0
        %864 = vmatprep.subr.bf16.mxu0 0
        %865 = vmatpush1.bf16.msra.mxu0 0
        %866 = vmatprep.subr.bf16.mxu0 0
        %867 = vmatpush1.bf16.msra.mxu0 0
        %868 = vmatprep.subr.bf16.mxu0 0
        %869 = vmatpush1.bf16.msra.mxu0 0
        %870 = vmatprep.subr.bf16.mxu0 0
        %871 = vmatpush1.bf16.msra.mxu0 0
        %872 = vmatprep.subr.bf16.mxu0 0
        %873 = vmatpush1.bf16.msra.mxu0 0
        %874 = vmatprep.subr.bf16.mxu0 0
        %875 = vmatpush1.bf16.msra.mxu0 0
        %876 = vmatprep.subr.bf16.mxu0 0
        %877 = vmatpush1.bf16.msra.mxu0 0
        %878 = vmatprep.subr.bf16.mxu0 0
        %879 = vmatpush1.bf16.msra.mxu0 0
        %880 = vmatprep.subr.bf16.mxu0 0
        %881 = vmatpush1.bf16.msra.mxu0 0
        %882 = vmatprep.subr.bf16.mxu0 0
        %883 = vmatpush1.bf16.msra.mxu0 0
        %884 = vmatprep.mubr.bf16.mxu0 0
        %885 = vmatmul.mubr.bf16.gmra.mrb[0].mxu0 %v847
        %v886 = vpop.f32.mrb[0].mxu0
        %v887 = vadd.f32 %v842, %v886
        %v888 = vpop.f32.mrb[0].mxu0
        %v889 = vpop.f32.mrb[0].mxu0
        %v890 = vpop.f32.mrb[0].mxu0
        %891 = vdwg.mxu0
        %v893 = vrot.slane %v793, 1
        %v895 = vsel %vm622, %v893, 0
        %v898 = vsel %vm626, %v613, 0
        %900 = vmatprep.subr.bf16.mxu0 0
        %901 = vmatpush1.bf16.msra.mxu0 %v898
        %902 = vmatprep.subr.bf16.mxu0 0
        %903 = vmatpush1.bf16.msra.mxu0 0
        %904 = vmatprep.subr.bf16.mxu0 0
        %905 = vmatpush1.bf16.msra.mxu0 0
        %906 = vmatprep.subr.bf16.mxu0 0
        %907 = vmatpush1.bf16.msra.mxu0 0
        %908 = vmatprep.subr.bf16.mxu0 0
        %909 = vmatpush1.bf16.msra.mxu0 0
        %910 = vmatprep.subr.bf16.mxu0 0
        %911 = vmatpush1.bf16.msra.mxu0 0
        %912 = vmatprep.subr.bf16.mxu0 0
        %913 = vmatpush1.bf16.msra.mxu0 0
        %914 = vmatprep.subr.bf16.mxu0 0
        %915 = vmatpush1.bf16.msra.mxu0 0
        %916 = vmatprep.subr.bf16.mxu0 0
        %917 = vmatpush1.bf16.msra.mxu0 0
        %918 = vmatprep.subr.bf16.mxu0 0
        %919 = vmatpush1.bf16.msra.mxu0 0
        %920 = vmatprep.subr.bf16.mxu0 0
        %921 = vmatpush1.bf16.msra.mxu0 0
        %922 = vmatprep.subr.bf16.mxu0 0
        %923 = vmatpush1.bf16.msra.mxu0 0
        %924 = vmatprep.subr.bf16.mxu0 0
        %925 = vmatpush1.bf16.msra.mxu0 0
        %926 = vmatprep.subr.bf16.mxu0 0
        %927 = vmatpush1.bf16.msra.mxu0 0
        %928 = vmatprep.subr.bf16.mxu0 0
        %929 = vmatpush1.bf16.msra.mxu0 0
        %930 = vmatprep.subr.bf16.mxu0 0
        %931 = vmatpush1.bf16.msra.mxu0 0
        %932 = vmatprep.mubr.bf16.mxu0 0
        %933 = vmatmul.mubr.bf16.gmra.mrb[0].mxu0 %v895
        %v934 = vpop.f32.mrb[0].mxu0
        %v935 = vadd.f32 0.0, %v934
        %v936 = vpop.f32.mrb[0].mxu0
        %v937 = vpop.f32.mrb[0].mxu0
        %v938 = vpop.f32.mrb[0].mxu0
        %939 = vdwg.mxu0
        %v940 = vadd.f32 %v887, %v935
        %v941 = vlaneseq
        %v942 = vshrl.u32 %v941, 7
        %v943 = vsub.s32 6, %v942
        %v944 = vrot.slane %v517, %v943
        %v945 = vadd.f32 %v940, %v944
        %vm946 = vcmask 58368
        %v947 = vsel %vm946, %v945, 0.0
        %948 = vadd.xlane.f32.xlu0 %v947
        %v949 = vpop.xlane.xlu0 %948
        %v950 = vmul.f32 %v949, %v587
        %v951 = vsub.f32 %v945, %v950
        %v952 = vmul.f32 %v951, %v951
        %v953 = vsel %vm946, %v952, 0.0
        %954 = vadd.xlane.f32.xlu0 %v953
        %v955 = vpop.xlane.xlu0 %954
        %v956 = vmul.f32 %v955, %v587
        %v957 = vadd.f32 %v956, 1e-05
        %v958 = vrsqrt.pop %v957
        %v959 = vmul.f32 %v951, %v958
        %v960 = vlaneseq
        %v961 = vshrl.u32 %v960, 7
        %v962 = vsub.s32 7, %v961
        %v963 = vrot.slane %v517, %v962
        %v964 = vmul.f32 %v959, %v963
        %v965 = vlaneseq
        %v966 = vshrl.u32 %v965, 7
        %v967 = vsub.s32 0, %v966
        %v968 = vrot.slane %v518, %v967
        %v969 = vadd.f32 %v964, %v968
        %v970 = vpack.c.bf16 %v969, %v969
        %v971 = vld [vmem:[%s4] sm:$0xf]
        %v972 = vld [vmem:[%s5] sm:$0x1]
        %v974 = vlaneseq
        %v975 = vshrl.u32 %v974, 7
        %v976 = vsub.s32 0, %v975
        %v977 = vrot.slane %v972, %v976
        %v980 = vsel %vm622, %v970, 0
        %v983 = vsel %vm626, %v971, 0
        %985 = vmatprep.subr.bf16.mxu0 0
        %986 = vmatpush1.bf16.msra.mxu0 %v983
        %987 = vmatprep.subr.bf16.mxu0 0
        %988 = vmatpush1.bf16.msra.mxu0 0
        %989 = vmatprep.subr.bf16.mxu0 0
        %990 = vmatpush1.bf16.msra.mxu0 0
        %991 = vmatprep.subr.bf16.mxu0 0
        %992 = vmatpush1.bf16.msra.mxu0 0
        %993 = vmatprep.subr.bf16.mxu0 0
        %994 = vmatpush1.bf16.msra.mxu0 0
        %995 = vmatprep.subr.bf16.mxu0 0
        %996 = vmatpush1.bf16.msra.mxu0 0
        %997 = vmatprep.subr.bf16.mxu0 0
        %998 = vmatpush1.bf16.msra.mxu0 0
        %999 = vmatprep.subr.bf16.mxu0 0
        %1000 = vmatpush1.bf16.msra.mxu0 0
        %1001 = vmatprep.subr.bf16.mxu0 0
        %1002 = vmatpush1.bf16.msra.mxu0 0
        %1003 = vmatprep.subr.bf16.mxu0 0
        %1004 = vmatpush1.bf16.msra.mxu0 0
        %1005 = vmatprep.subr.bf16.mxu0 0
        %1006 = vmatpush1.bf16.msra.mxu0 0
        %1007 = vmatprep.subr.bf16.mxu0 0
        %1008 = vmatpush1.bf16.msra.mxu0 0
        %1009 = vmatprep.subr.bf16.mxu0 0
        %1010 = vmatpush1.bf16.msra.mxu0 0
        %1011 = vmatprep.subr.bf16.mxu0 0
        %1012 = vmatpush1.bf16.msra.mxu0 0
        %1013 = vmatprep.subr.bf16.mxu0 0
        %1014 = vmatpush1.bf16.msra.mxu0 0
        %1015 = vmatprep.subr.bf16.mxu0 0
        %1016 = vmatpush1.bf16.msra.mxu0 0
        %1017 = vmatprep.mubr.bf16.mxu0 0
        %1018 = vmatmul.mubr.bf16.gmra.mrb[0].mxu0 %v980
        %v1019 = vpop.f32.mrb[0].mxu0
        %v1020 = vadd.f32 %v977, %v1019
        %v1021 = vpop.f32.mrb[0].mxu0
        %v1022 = vpop.f32.mrb[0].mxu0
        %v1023 = vpop.f32.mrb[0].mxu0
        %1024 = vdwg.mxu0
        %v1025 = vld [vmem:[%s7] sm:$0x7]
        %v1026 = vld [vmem:[%s6] sm:$0x1]
        %v1027 = vadd.f32 %v1026, %v1025
        %vm1028 = vcmask 155648
        %1029 = vst.msk [vmem:[#allocation2] sm:$0x1] %vm1028, %v1027
        %v1031 = vrot.slane %v1025, 1
        %v1033 = vadd.f32 %v1020, %v1031
        %vm1034 = vcmask 156672
        %1035 = vst.msk [vmem:[#allocation2 + $0x1] sm:$0x3] %vm1034, %v1033
        %v1036 = vld [vmem:[#allocation2] sm:$0x7]
        %v1037 = vlaneseq
        %v1038 = vand.u32 %v1037, 127
        %vm1039 = vcmp.ge.s32.totalorder %v1038, 0
        %vm1040 = vcmp.lt.s32.totalorder %v1038, 5
        %vm1041 = vmand %vm1039, %vm1040
        %v1042 = vsel %vm1041, 1, 0
        %v1043 = vcvt.s32.f32 %v1042
        %vm1044 = vcmp.ge.s32.totalorder %v1038, 5
        %vm1045 = vcmp.lt.s32.totalorder %v1038, 10
        %vm1046 = vmand %vm1044, %vm1045
        %v1047 = vsel %vm1046, 1, 0
        %v1048 = vcvt.s32.f32 %v1047
        %vm1049 = vcmp.ge.s32.totalorder %v1038, 10
        %vm1050 = vcmp.lt.s32.totalorder %v1038, 15
        %vm1051 = vmand %vm1049, %vm1050
        %v1052 = vsel %vm1051, 1, 0
        %v1053 = vcvt.s32.f32 %v1052
        %vm1054 = vcmp.ge.s32.totalorder %v1038, 15
        %vm1055 = vcmp.lt.s32.totalorder %v1038, 20
        %vm1056 = vmand %vm1054, %vm1055
        %v1057 = vsel %vm1056, 1, 0
        %v1058 = vcvt.s32.f32 %v1057
        %v1059 = vld [vmem:[%s8] sm:$0xff]
        %v1060 = vld [vmem:[%s8 + $0x8] sm:$0xf]
        %v1061 = vld [vmem:[%s10] sm:$0xf]
        %v1062 = vld [vmem:[%s10 + $0x4] sm:$0xf]
        %v1063 = vld [vmem:[%s10 + $0x8] sm:$0x3]
        %v1064 = vld [vmem:[%s10 + $0xc] sm:$0xf]
        %v1065 = vld [vmem:[%s10 + $0x10] sm:$0xf]
        %v1066 = vld [vmem:[%s10 + $0x14] sm:$0x3]
        %v1067 = vld [vmem:[%s10 + $0x18] sm:$0xf]
        %v1068 = vld [vmem:[%s10 + $0x1c] sm:$0xf]
        %v1069 = vld [vmem:[%s10 + $0x20] sm:$0x3]
        %v1070 = vld [vmem:[%s10 + $0x24] sm:$0xf]
        %v1071 = vld [vmem:[%s10 + $0x28] sm:$0xf]
        %v1072 = vld [vmem:[%s10 + $0x2c] sm:$0x3]
        %vm1073 = vcmask 157696
        %v1074 = vsel %vm1073, %v1036, 0.0
        %1075 = vadd.xlane.f32.xlu0 %v1074
        %v1076 = vpop.xlane.xlu0 %1075
        %v1077 = vrcp.pop 20.0
        %v1078 = vmul.f32 %v1076, %v1077
        %v1079 = vsub.f32 %v1036, %v1078
        %v1080 = vmul.f32 %v1079, %v1079
        %v1081 = vsel %vm1073, %v1080, 0.0
        %1082 = vadd.xlane.f32.xlu0 %v1081
        %v1083 = vpop.xlane.xlu0 %1082
        %v1084 = vmul.f32 %v1083, %v1077
        %v1085 = vadd.f32 %v1084, 1e-05
        %v1086 = vrsqrt.pop %v1085
        %v1087 = vmul.f32 %v1079, %v1086
        %v1088 = vlaneseq
        %v1089 = vshrl.u32 %v1088, 7
        %v1090 = vsub.s32 0, %v1089
        %v1091 = vrot.slane %v1059, %v1090
        %v1092 = vmul.f32 %v1087, %v1091
        %v1093 = vlaneseq
        %v1094 = vshrl.u32 %v1093, 7
        %v1095 = vsub.s32 1, %v1094
        %v1096 = vrot.slane %v1059, %v1095
        %v1097 = vadd.f32 %v1092, %v1096
        %v1098 = vpack.c.bf16 %v1097, %v1097
        %v1102 = vunpack.c.l.b16 %v1061
        %v1103 = vunpack.c.l.b16 %v1062
        %v1104 = vunpack.c.l.b16 %v1063
        %v1105 = vpack.c.b16 %v1103, %v1102
        %v1106 = vpack.c.b16 %v1104, %v1104
        %vm1108 = vcmask 162816
        %v1110 = vsel %vm1108, %v1098, 0
        %vm1112 = vcmask 1041408
        %v1114 = vsel %vm1112, %v1106, 0
        %1116 = vmatprep.subr.bf16.mxu0 0
        %1117 = vmatpush1.bf16.msra.mxu0 %v1105
        %1118 = vmatprep.subr.bf16.mxu0 0
        %1119 = vmatpush1.bf16.msra.mxu0 %v1114
        %1120 = vmatprep.subr.bf16.mxu0 0
        %1121 = vmatpush1.bf16.msra.mxu0 0
        %1122 = vmatprep.subr.bf16.mxu0 0
        %1123 = vmatpush1.bf16.msra.mxu0 0
        %1124 = vmatprep.subr.bf16.mxu0 0
        %1125 = vmatpush1.bf16.msra.mxu0 0
        %1126 = vmatprep.subr.bf16.mxu0 0
        %1127 = vmatpush1.bf16.msra.mxu0 0
        %1128 = vmatprep.subr.bf16.mxu0 0
        %1129 = vmatpush1.bf16.msra.mxu0 0
        %1130 = vmatprep.subr.bf16.mxu0 0
        %1131 = vmatpush1.bf16.msra.mxu0 0
        %1132 = vmatprep.subr.bf16.mxu0 0
        %1133 = vmatpush1.bf16.msra.mxu0 0
        %1134 = vmatprep.subr.bf16.mxu0 0
        %1135 = vmatpush1.bf16.msra.mxu0 0
        %1136 = vmatprep.subr.bf16.mxu0 0
        %1137 = vmatpush1.bf16.msra.mxu0 0
        %1138 = vmatprep.subr.bf16.mxu0 0
        %1139 = vmatpush1.bf16.msra.mxu0 0
        %1140 = vmatprep.subr.bf16.mxu0 0
        %1141 = vmatpush1.bf16.msra.mxu0 0
        %1142 = vmatprep.subr.bf16.mxu0 0
        %1143 = vmatpush1.bf16.msra.mxu0 0
        %1144 = vmatprep.subr.bf16.mxu0 0
        %1145 = vmatpush1.bf16.msra.mxu0 0
        %1146 = vmatprep.subr.bf16.mxu0 0
        %1147 = vmatpush1.bf16.msra.mxu0 0
        %1148 = vmatprep.mubr.bf16.mxu0 0
        %1149 = vmatmul.mubr.bf16.gmra.mrb[0].mxu0 %v1110
        %v1150 = vpop.f32.mrb[0].mxu0
        %v1151 = vadd.f32 0.0, %v1150
        %v1152 = vpop.f32.mrb[0].mxu0
        %v1153 = vpop.f32.mrb[0].mxu0
        %v1154 = vpop.f32.mrb[0].mxu0
        %1155 = vdwg.mxu0
        %v1156 = vsel %vm1073, %v1151, 0.0
        %1157 = vadd.xlane.f32.xlu0 %v1156
        %v1158 = vpop.xlane.xlu0 %1157
        %v1159 = vmul.f32 %v1158, %v1077
        %v1160 = vsub.f32 %v1151, %v1159
        %v1161 = vmul.f32 %v1160, %v1160
        %v1162 = vsel %vm1073, %v1161, 0.0
        %1163 = vadd.xlane.f32.xlu0 %v1162
        %v1164 = vpop.xlane.xlu0 %1163
        %v1165 = vmul.f32 %v1164, %v1077
        %v1166 = vadd.f32 %v1165, 1e-05
        %v1167 = vrsqrt.pop %v1166
        %v1168 = vmul.f32 %v1160, %v1167
        %v1169 = vlaneseq
        %v1170 = vshrl.u32 %v1169, 7
        %v1171 = vsub.s32 2, %v1170
        %v1172 = vrot.slane %v1059, %v1171
        %v1173 = vmul.f32 %v1168, %v1172
        %v1174 = vlaneseq
        %v1175 = vshrl.u32 %v1174, 7
        %v1176 = vsub.s32 3, %v1175
        %v1177 = vrot.slane %v1059, %v1176
        %v1178 = vadd.f32 %v1173, %v1177
        %v1182 = vunpack.c.l.b16 %v1064
        %v1183 = vunpack.c.l.b16 %v1065
        %v1184 = vunpack.c.l.b16 %v1066
        %v1185 = vpack.c.b16 %v1183, %v1182
        %v1186 = vpack.c.b16 %v1184, %v1184
        %v1189 = vsel %vm1112, %v1186, 0
        %1191 = vmatprep.subr.bf16.mxu0 0
        %1192 = vmatpush1.bf16.msra.mxu0 %v1185
        %1193 = vmatprep.subr.bf16.mxu0 0
        %1194 = vmatpush1.bf16.msra.mxu0 %v1189
        %1195 = vmatprep.subr.bf16.mxu0 0
        %1196 = vmatpush1.bf16.msra.mxu0 0
        %1197 = vmatprep.subr.bf16.mxu0 0
        %1198 = vmatpush1.bf16.msra.mxu0 0
        %1199 = vmatprep.subr.bf16.mxu0 0
        %1200 = vmatpush1.bf16.msra.mxu0 0
        %1201 = vmatprep.subr.bf16.mxu0 0
        %1202 = vmatpush1.bf16.msra.mxu0 0
        %1203 = vmatprep.subr.bf16.mxu0 0
        %1204 = vmatpush1.bf16.msra.mxu0 0
        %1205 = vmatprep.subr.bf16.mxu0 0
        %1206 = vmatpush1.bf16.msra.mxu0 0
        %1207 = vmatprep.subr.bf16.mxu0 0
        %1208 = vmatpush1.bf16.msra.mxu0 0
        %1209 = vmatprep.subr.bf16.mxu0 0
        %1210 = vmatpush1.bf16.msra.mxu0 0
        %1211 = vmatprep.subr.bf16.mxu0 0
        %1212 = vmatpush1.bf16.msra.mxu0 0
        %1213 = vmatprep.subr.bf16.mxu0 0
        %1214 = vmatpush1.bf16.msra.mxu0 0
        %1215 = vmatprep.subr.bf16.mxu0 0
        %1216 = vmatpush1.bf16.msra.mxu0 0
        %1217 = vmatprep.subr.bf16.mxu0 0
        %1218 = vmatpush1.bf16.msra.mxu0 0
        %1219 = vmatprep.subr.bf16.mxu0 0
        %1220 = vmatpush1.bf16.msra.mxu0 0
        %1221 = vmatprep.subr.bf16.mxu0 0
        %1222 = vmatpush1.bf16.msra.mxu0 0
        %1223 = vmatprep.mubr.bf16.mxu0 0
        %1224 = vmatmul.mubr.bf16.gmra.mrb[0].mxu0 %v1110
        %v1225 = vpop.f32.mrb[0].mxu0
        %v1226 = vadd.f32 0.0, %v1225
        %v1227 = vpop.f32.mrb[0].mxu0
        %v1228 = vpop.f32.mrb[0].mxu0
        %v1229 = vpop.f32.mrb[0].mxu0
        %1230 = vdwg.mxu0
        %v1231 = vsel %vm1073, %v1226, 0.0
        %1232 = vadd.xlane.f32.xlu0 %v1231
        %v1233 = vpop.xlane.xlu0 %1232
        %v1234 = vmul.f32 %v1233, %v1077
        %v1235 = vsub.f32 %v1226, %v1234
        %v1236 = vmul.f32 %v1235, %v1235
        %v1237 = vsel %vm1073, %v1236, 0.0
        %1238 = vadd.xlane.f32.xlu0 %v1237
        %v1239 = vpop.xlane.xlu0 %1238
        %v1240 = vmul.f32 %v1239, %v1077
        %v1241 = vadd.f32 %v1240, 1e-05
        %v1242 = vrsqrt.pop %v1241
        %v1243 = vmul.f32 %v1235, %v1242
        %v1244 = vlaneseq
        %v1245 = vshrl.u32 %v1244, 7
        %v1246 = vsub.s32 4, %v1245
        %v1247 = vrot.slane %v1059, %v1246
        %v1248 = vmul.f32 %v1243, %v1247
        %v1249 = vlaneseq
        %v1250 = vshrl.u32 %v1249, 7
        %v1251 = vsub.s32 5, %v1250
        %v1252 = vrot.slane %v1059, %v1251
        %v1253 = vadd.f32 %v1248, %v1252
        %v1257 = vunpack.c.l.b16 %v1067
        %v1258 = vunpack.c.l.b16 %v1068
        %v1259 = vunpack.c.l.b16 %v1069
        %v1260 = vpack.c.b16 %v1258, %v1257
        %v1261 = vpack.c.b16 %v1259, %v1259
        %v1264 = vsel %vm1112, %v1261, 0
        %1266 = vmatprep.subr.bf16.mxu0 0
        %1267 = vmatpush1.bf16.msra.mxu0 %v1260
        %1268 = vmatprep.subr.bf16.mxu0 0
        %1269 = vmatpush1.bf16.msra.mxu0 %v1264
        %1270 = vmatprep.subr.bf16.mxu0 0
        %1271 = vmatpush1.bf16.msra.mxu0 0
        %1272 = vmatprep.subr.bf16.mxu0 0
        %1273 = vmatpush1.bf16.msra.mxu0 0
        %1274 = vmatprep.subr.bf16.mxu0 0
        %1275 = vmatpush1.bf16.msra.mxu0 0
        %1276 = vmatprep.subr.bf16.mxu0 0
        %1277 = vmatpush1.bf16.msra.mxu0 0
        %1278 = vmatprep.subr.bf16.mxu0 0
        %1279 = vmatpush1.bf16.msra.mxu0 0
        %1280 = vmatprep.subr.bf16.mxu0 0
        %1281 = vmatpush1.bf16.msra.mxu0 0
        %1282 = vmatprep.subr.bf16.mxu0 0
        %1283 = vmatpush1.bf16.msra.mxu0 0
        %1284 = vmatprep.subr.bf16.mxu0 0
        %1285 = vmatpush1.bf16.msra.mxu0 0
        %1286 = vmatprep.subr.bf16.mxu0 0
        %1287 = vmatpush1.bf16.msra.mxu0 0
        %1288 = vmatprep.subr.bf16.mxu0 0
        %1289 = vmatpush1.bf16.msra.mxu0 0
        %1290 = vmatprep.subr.bf16.mxu0 0
        %1291 = vmatpush1.bf16.msra.mxu0 0
        %1292 = vmatprep.subr.bf16.mxu0 0
        %1293 = vmatpush1.bf16.msra.mxu0 0
        %1294 = vmatprep.subr.bf16.mxu0 0
        %1295 = vmatpush1.bf16.msra.mxu0 0
        %1296 = vmatprep.subr.bf16.mxu0 0
        %1297 = vmatpush1.bf16.msra.mxu0 0
        %1298 = vmatprep.mubr.bf16.mxu0 0
        %1299 = vmatmul.mubr.bf16.gmra.mrb[0].mxu0 %v1110
        %v1300 = vpop.f32.mrb[0].mxu0
        %v1301 = vadd.f32 0.0, %v1300
        %v1302 = vpop.f32.mrb[0].mxu0
        %v1303 = vpop.f32.mrb[0].mxu0
        %v1304 = vpop.f32.mrb[0].mxu0
        %1305 = vdwg.mxu0
        %v1306 = vpack.c.bf16 %v1253, %v1253
        %v1307 = vmul.f32 %v1178, %v1043
        %v1308 = vpack.c.bf16 %v1307, %v1307
        %v1310 = vsel %vm1108, %v1308, 0
        %v1313 = vsel %vm1108, %v1306, 0
        %1315 = vmatprep.subr.bf16.mxu0 0
        %1316 = vmatpush1.bf16.xpose.msra.mxu0 %v1313
        %1317 = vmatprep.subr.bf16.mxu0 0
        %1318 = vmatpush1.bf16.xpose.msra.mxu0 0
        %1319 = vmatprep.subr.bf16.mxu0 0
        %1320 = vmatpush1.bf16.xpose.msra.mxu0 0
        %1321 = vmatprep.subr.bf16.mxu0 0
        %1322 = vmatpush1.bf16.xpose.msra.mxu0 0
        %1323 = vmatprep.subr.bf16.mxu0 0
        %1324 = vmatpush1.bf16.xpose.msra.mxu0 0
        %1325 = vmatprep.subr.bf16.mxu0 0
        %1326 = vmatpush1.bf16.xpose.msra.mxu0 0
        %1327 = vmatprep.subr.bf16.mxu0 0
        %1328 = vmatpush1.bf16.xpose.msra.mxu0 0
        %1329 = vmatprep.subr.bf16.mxu0 0
        %1330 = vmatpush1.bf16.xpose.msra.mxu0 0
        %1331 = vmatprep.subr.bf16.mxu0 0
        %1332 = vmatpush1.bf16.xpose.msra.mxu0 0
        %1333 = vmatprep.subr.bf16.mxu0 0
        %1334 = vmatpush1.bf16.xpose.msra.mxu0 0
        %1335 = vmatprep.subr.bf16.mxu0 0
        %1336 = vmatpush1.bf16.xpose.msra.mxu0 0
        %1337 = vmatprep.subr.bf16.mxu0 0
        %1338 = vmatpush1.bf16.xpose.msra.mxu0 0
        %1339 = vmatprep.subr.bf16.mxu0 0
        %1340 = vmatpush1.bf16.xpose.msra.mxu0 0
        %1341 = vmatprep.subr.bf16.mxu0 0
        %1342 = vmatpush1.bf16.xpose.msra.mxu0 0
        %1343 = vmatprep.subr.bf16.mxu0 0
        %1344 = vmatpush1.bf16.xpose.msra.mxu0 0
        %1345 = vmatprep.subr.bf16.mxu0 0
        %1346 = vmatpush1.bf16.xpose.msra.mxu0 0
        %1347 = vmatprep.mubr.bf16.mxu0 0
        %1348 = vmatmul.mubr.bf16.gmra.mrb[0].mxu0 %v1310
        %v1349 = vpop.f32.mrb[0].mxu0
        %v1350 = vadd.f32 0.0, %v1349
        %v1351 = vpop.f32.mrb[0].mxu0
        %v1352 = vpop.f32.mrb[0].mxu0
        %v1353 = vpop.f32.mrb[0].mxu0
        %1354 = vdwg.mxu0
        %v1355 = vmul.f32 %v1350, 0.4472136
        %vm1356 = vcmask 18432
        %v1357 = vsel %vm1356, %v1355, -inf
        %1358 = vmax.xlane.f32.xlu0 %v1357
        %v1359 = vpop.xlane.xlu0 %1358
        %v1360 = vsub.f32 %v1355, %v1359
        %v1361 = vmul.f32 %v1360, 1.442695
        %v1362 = vpow.pop %v1361
        %v1363 = vsel %vm1356, %v1362, 0.0
        %1364 = vadd.xlane.f32.xlu0 %v1363
        %v1365 = vpop.xlane.xlu0 %1364
        %v1366 = vrcp.pop %v1365
        %v1367 = vmul.f32 %v1362, %v1366
        %v1368 = vmul.f32 %v1301, %v1043
        %v1369 = vpack.c.bf16 %v1368, %v1368
        %v1370 = vpack.c.bf16 %v1367, %v1367
        %v1371 = vmul.f32 %v1178, %v1048
        %v1372 = vpack.c.bf16 %v1371, %v1371
        %v1374 = vsel %vm1108, %v1372, 0
        %1376 = vmatprep.subr.bf16.mxu0 0
        %1377 = vmatpush1.bf16.xpose.msra.mxu0 %v1313
        %1378 = vmatprep.subr.bf16.mxu0 0
        %1379 = vmatpush1.bf16.xpose.msra.mxu0 0
        %1380 = vmatprep.subr.bf16.mxu0 0
        %1381 = vmatpush1.bf16.xpose.msra.mxu0 0
        %1382 = vmatprep.subr.bf16.mxu0 0
        %1383 = vmatpush1.bf16.xpose.msra.mxu0 0
        %1384 = vmatprep.subr.bf16.mxu0 0
        %1385 = vmatpush1.bf16.xpose.msra.mxu0 0
        %1386 = vmatprep.subr.bf16.mxu0 0
        %1387 = vmatpush1.bf16.xpose.msra.mxu0 0
        %1388 = vmatprep.subr.bf16.mxu0 0
        %1389 = vmatpush1.bf16.xpose.msra.mxu0 0
        %1390 = vmatprep.subr.bf16.mxu0 0
        %1391 = vmatpush1.bf16.xpose.msra.mxu0 0
        %1392 = vmatprep.subr.bf16.mxu0 0
        %1393 = vmatpush1.bf16.xpose.msra.mxu0 0
        %1394 = vmatprep.subr.bf16.mxu0 0
        %1395 = vmatpush1.bf16.xpose.msra.mxu0 0
        %1396 = vmatprep.subr.bf16.mxu0 0
        %1397 = vmatpush1.bf16.xpose.msra.mxu0 0
        %1398 = vmatprep.subr.bf16.mxu0 0
        %1399 = vmatpush1.bf16.xpose.msra.mxu0 0
        %1400 = vmatprep.subr.bf16.mxu0 0
        %1401 = vmatpush1.bf16.xpose.msra.mxu0 0
        %1402 = vmatprep.subr.bf16.mxu0 0
        %1403 = vmatpush1.bf16.xpose.msra.mxu0 0
        %1404 = vmatprep.subr.bf16.mxu0 0
        %1405 = vmatpush1.bf16.xpose.msra.mxu0 0
        %1406 = vmatprep.subr.bf16.mxu0 0
        %1407 = vmatpush1.bf16.xpose.msra.mxu0 0
        %1408 = vmatprep.mubr.bf16.mxu0 0
        %1409 = vmatmul.mubr.bf16.gmra.mrb[0].mxu0 %v1374
        %v1410 = vpop.f32.mrb[0].mxu0
        %v1411 = vadd.f32 0.0, %v1410
        %v1412 = vpop.f32.mrb[0].mxu0
        %v1413 = vpop.f32.mrb[0].mxu0
        %v1414 = vpop.f32.mrb[0].mxu0
        %1415 = vdwg.mxu0
        %v1416 = vmul.f32 %v1411, 0.4472136
        %v1417 = vsel %vm1356, %v1416, -inf
        %1418 = vmax.xlane.f32.xlu0 %v1417
        %v1419 = vpop.xlane.xlu0 %1418
        %v1420 = vsub.f32 %v1416, %v1419
        %v1421 = vmul.f32 %v1420, 1.442695
        %v1422 = vpow.pop %v1421
        %v1423 = vsel %vm1356, %v1422, 0.0
        %1424 = vadd.xlane.f32.xlu0 %v1423
        %v1425 = vpop.xlane.xlu0 %1424
        %v1426 = vrcp.pop %v1425
        %v1427 = vmul.f32 %v1422, %v1426
        %v1428 = vmul.f32 %v1301, %v1048
        %v1429 = vpack.c.bf16 %v1428, %v1428
        %v1430 = vpack.c.bf16 %v1427, %v1427
        %vm1431 = vcmask 23552
        %v1433 = vsel %vm1431, %v1430, 0
        %vm1435 = vcmask 1040384
        %v1436 = vsel %vm1435, 4294967295, 65535
        %v1437 = vsel %vm1112, %v1436, 0
        %v1439 = vand.u32 %v1429, %v1437
        %1441 = vmatprep.subr.bf16.mxu0 0
        %1442 = vmatpush1.bf16.msra.mxu0 %v1439
        %1443 = vmatprep.subr.bf16.mxu0 0
        %1444 = vmatpush1.bf16.msra.mxu0 0
        %1445 = vmatprep.subr.bf16.mxu0 0
        %1446 = vmatpush1.bf16.msra.mxu0 0
        %1447 = vmatprep.subr.bf16.mxu0 0
        %1448 = vmatpush1.bf16.msra.mxu0 0
        %1449 = vmatprep.subr.bf16.mxu0 0
        %1450 = vmatpush1.bf16.msra.mxu0 0
        %1451 = vmatprep.subr.bf16.mxu0 0
        %1452 = vmatpush1.bf16.msra.mxu0 0
        %1453 = vmatprep.subr.bf16.mxu0 0
        %1454 = vmatpush1.bf16.msra.mxu0 0
        %1455 = vmatprep.subr.bf16.mxu0 0
        %1456 = vmatpush1.bf16.msra.mxu0 0
        %1457 = vmatprep.subr.bf16.mxu0 0
        %1458 = vmatpush1.bf16.msra.mxu0 0
        %1459 = vmatprep.subr.bf16.mxu0 0
        %1460 = vmatpush1.bf16.msra.mxu0 0
        %1461 = vmatprep.subr.bf16.mxu0 0
        %1462 = vmatpush1.bf16.msra.mxu0 0
        %1463 = vmatprep.subr.bf16.mxu0 0
        %1464 = vmatpush1.bf16.msra.mxu0 0
        %1465 = vmatprep.subr.bf16.mxu0 0
        %1466 = vmatpush1.bf16.msra.mxu0 0
        %1467 = vmatprep.subr.bf16.mxu0 0
        %1468 = vmatpush1.bf16.msra.mxu0 0
        %1469 = vmatprep.subr.bf16.mxu0 0
        %1470 = vmatpush1.bf16.msra.mxu0 0
        %1471 = vmatprep.subr.bf16.mxu0 0
        %1472 = vmatpush1.bf16.msra.mxu0 0
        %1473 = vmatprep.mubr.bf16.mxu0 0
        %1474 = vmatmul.mubr.bf16.gmra.mrb[0].mxu0 %v1433
        %v1475 = vpop.f32.mrb[0].mxu0
        %v1476 = vadd.f32 0.0, %v1475
        %v1477 = vpop.f32.mrb[0].mxu0
        %v1478 = vpop.f32.mrb[0].mxu0
        %v1479 = vpop.f32.mrb[0].mxu0
        %1480 = vdwg.mxu0
        %v1482 = vsel %vm1431, %v1370, 0
        %v1485 = vand.u32 %v1369, %v1437
        %1487 = vmatprep.subr.bf16.mxu0 0
        %1488 = vmatpush1.bf16.msra.mxu0 %v1485
        %1489 = vmatprep.subr.bf16.mxu0 0
        %1490 = vmatpush1.bf16.msra.mxu0 0
        %1491 = vmatprep.subr.bf16.mxu0 0
        %1492 = vmatpush1.bf16.msra.mxu0 0
        %1493 = vmatprep.subr.bf16.mxu0 0
        %1494 = vmatpush1.bf16.msra.mxu0 0
        %1495 = vmatprep.subr.bf16.mxu0 0
        %1496 = vmatpush1.bf16.msra.mxu0 0
        %1497 = vmatprep.subr.bf16.mxu0 0
        %1498 = vmatpush1.bf16.msra.mxu0 0
        %1499 = vmatprep.subr.bf16.mxu0 0
        %1500 = vmatpush1.bf16.msra.mxu0 0
        %1501 = vmatprep.subr.bf16.mxu0 0
        %1502 = vmatpush1.bf16.msra.mxu0 0
        %1503 = vmatprep.subr.bf16.mxu0 0
        %1504 = vmatpush1.bf16.msra.mxu0 0
        %1505 = vmatprep.subr.bf16.mxu0 0
        %1506 = vmatpush1.bf16.msra.mxu0 0
        %1507 = vmatprep.subr.bf16.mxu0 0
        %1508 = vmatpush1.bf16.msra.mxu0 0
        %1509 = vmatprep.subr.bf16.mxu0 0
        %1510 = vmatpush1.bf16.msra.mxu0 0
        %1511 = vmatprep.subr.bf16.mxu0 0
        %1512 = vmatpush1.bf16.msra.mxu0 0
        %1513 = vmatprep.subr.bf16.mxu0 0
        %1514 = vmatpush1.bf16.msra.mxu0 0
        %1515 = vmatprep.subr.bf16.mxu0 0
        %1516 = vmatpush1.bf16.msra.mxu0 0
        %1517 = vmatprep.subr.bf16.mxu0 0
        %1518 = vmatpush1.bf16.msra.mxu0 0
        %1519 = vmatprep.mubr.bf16.mxu0 0
        %1520 = vmatmul.mubr.bf16.gmra.mrb[0].mxu0 %v1482
        %v1521 = vpop.f32.mrb[0].mxu0
        %v1522 = vadd.f32 %v1476, %v1521
        %v1523 = vpop.f32.mrb[0].mxu0
        %v1524 = vpop.f32.mrb[0].mxu0
        %v1525 = vpop.f32.mrb[0].mxu0
        %1526 = vdwg.mxu0
        %v1527 = vmul.f32 %v1178, %v1053
        %v1528 = vpack.c.bf16 %v1527, %v1527
        %v1530 = vsel %vm1108, %v1528, 0
        %1532 = vmatprep.subr.bf16.mxu0 0
        %1533 = vmatpush1.bf16.xpose.msra.mxu0 %v1313
        %1534 = vmatprep.subr.bf16.mxu0 0
        %1535 = vmatpush1.bf16.xpose.msra.mxu0 0
        %1536 = vmatprep.subr.bf16.mxu0 0
        %1537 = vmatpush1.bf16.xpose.msra.mxu0 0
        %1538 = vmatprep.subr.bf16.mxu0 0
        %1539 = vmatpush1.bf16.xpose.msra.mxu0 0
        %1540 = vmatprep.subr.bf16.mxu0 0
        %1541 = vmatpush1.bf16.xpose.msra.mxu0 0
        %1542 = vmatprep.subr.bf16.mxu0 0
        %1543 = vmatpush1.bf16.xpose.msra.mxu0 0
        %1544 = vmatprep.subr.bf16.mxu0 0
        %1545 = vmatpush1.bf16.xpose.msra.mxu0 0
        %1546 = vmatprep.subr.bf16.mxu0 0
        %1547 = vmatpush1.bf16.xpose.msra.mxu0 0
        %1548 = vmatprep.subr.bf16.mxu0 0
        %1549 = vmatpush1.bf16.xpose.msra.mxu0 0
        %1550 = vmatprep.subr.bf16.mxu0 0
        %1551 = vmatpush1.bf16.xpose.msra.mxu0 0
        %1552 = vmatprep.subr.bf16.mxu0 0
        %1553 = vmatpush1.bf16.xpose.msra.mxu0 0
        %1554 = vmatprep.subr.bf16.mxu0 0
        %1555 = vmatpush1.bf16.xpose.msra.mxu0 0
        %1556 = vmatprep.subr.bf16.mxu0 0
        %1557 = vmatpush1.bf16.xpose.msra.mxu0 0
        %1558 = vmatprep.subr.bf16.mxu0 0
        %1559 = vmatpush1.bf16.xpose.msra.mxu0 0
        %1560 = vmatprep.subr.bf16.mxu0 0
        %1561 = vmatpush1.bf16.xpose.msra.mxu0 0
        %1562 = vmatprep.subr.bf16.mxu0 0
        %1563 = vmatpush1.bf16.xpose.msra.mxu0 0
        %1564 = vmatprep.mubr.bf16.mxu0 0
        %1565 = vmatmul.mubr.bf16.gmra.mrb[0].mxu0 %v1530
        %v1566 = vpop.f32.mrb[0].mxu0
        %v1567 = vadd.f32 0.0, %v1566
        %v1568 = vpop.f32.mrb[0].mxu0
        %v1569 = vpop.f32.mrb[0].mxu0
        %v1570 = vpop.f32.mrb[0].mxu0
        %1571 = vdwg.mxu0
        %v1572 = vmul.f32 %v1567, 0.4472136
        %v1573 = vsel %vm1356, %v1572, -inf
        %1574 = vmax.xlane.f32.xlu0 %v1573
        %v1575 = vpop.xlane.xlu0 %1574
        %v1576 = vsub.f32 %v1572, %v1575
        %v1577 = vmul.f32 %v1576, 1.442695
        %v1578 = vpow.pop %v1577
        %v1579 = vsel %vm1356, %v1578, 0.0
        %1580 = vadd.xlane.f32.xlu0 %v1579
        %v1581 = vpop.xlane.xlu0 %1580
        %v1582 = vrcp.pop %v1581
        %v1583 = vmul.f32 %v1578, %v1582
        %v1584 = vmul.f32 %v1301, %v1053
        %v1585 = vpack.c.bf16 %v1584, %v1584
        %v1586 = vpack.c.bf16 %v1583, %v1583
        %v1588 = vsel %vm1431, %v1586, 0
        %v1591 = vand.u32 %v1585, %v1437
        %1593 = vmatprep.subr.bf16.mxu0 0
        %1594 = vmatpush1.bf16.msra.mxu0 %v1591
        %1595 = vmatprep.subr.bf16.mxu0 0
        %1596 = vmatpush1.bf16.msra.mxu0 0
        %1597 = vmatprep.subr.bf16.mxu0 0
        %1598 = vmatpush1.bf16.msra.mxu0 0
        %1599 = vmatprep.subr.bf16.mxu0 0
        %1600 = vmatpush1.bf16.msra.mxu0 0
        %1601 = vmatprep.subr.bf16.mxu0 0
        %1602 = vmatpush1.bf16.msra.mxu0 0
        %1603 = vmatprep.subr.bf16.mxu0 0
        %1604 = vmatpush1.bf16.msra.mxu0 0
        %1605 = vmatprep.subr.bf16.mxu0 0
        %1606 = vmatpush1.bf16.msra.mxu0 0
        %1607 = vmatprep.subr.bf16.mxu0 0
        %1608 = vmatpush1.bf16.msra.mxu0 0
        %1609 = vmatprep.subr.bf16.mxu0 0
        %1610 = vmatpush1.bf16.msra.mxu0 0
        %1611 = vmatprep.subr.bf16.mxu0 0
        %1612 = vmatpush1.bf16.msra.mxu0 0
        %1613 = vmatprep.subr.bf16.mxu0 0
        %1614 = vmatpush1.bf16.msra.mxu0 0
        %1615 = vmatprep.subr.bf16.mxu0 0
        %1616 = vmatpush1.bf16.msra.mxu0 0
        %1617 = vmatprep.subr.bf16.mxu0 0
        %1618 = vmatpush1.bf16.msra.mxu0 0
        %1619 = vmatprep.subr.bf16.mxu0 0
        %1620 = vmatpush1.bf16.msra.mxu0 0
        %1621 = vmatprep.subr.bf16.mxu0 0
        %1622 = vmatpush1.bf16.msra.mxu0 0
        %1623 = vmatprep.subr.bf16.mxu0 0
        %1624 = vmatpush1.bf16.msra.mxu0 0
        %1625 = vmatprep.mubr.bf16.mxu0 0
        %1626 = vmatmul.mubr.bf16.gmra.mrb[0].mxu0 %v1588
        %v1627 = vpop.f32.mrb[0].mxu0
        %v1628 = vadd.f32 0.0, %v1627
        %v1629 = vpop.f32.mrb[0].mxu0
        %v1630 = vpop.f32.mrb[0].mxu0
        %v1631 = vpop.f32.mrb[0].mxu0
        %1632 = vdwg.mxu0
        %v1633 = vadd.f32 %v1522, %v1628
        %v1634 = vmul.f32 %v1178, %v1058
        %v1635 = vpack.c.bf16 %v1634, %v1634
        %v1637 = vsel %vm1108, %v1635, 0
        %1639 = vmatprep.subr.bf16.mxu0 0
        %1640 = vmatpush1.bf16.xpose.msra.mxu0 %v1313
        %1641 = vmatprep.subr.bf16.mxu0 0
        %1642 = vmatpush1.bf16.xpose.msra.mxu0 0
        %1643 = vmatprep.subr.bf16.mxu0 0
        %1644 = vmatpush1.bf16.xpose.msra.mxu0 0
        %1645 = vmatprep.subr.bf16.mxu0 0
        %1646 = vmatpush1.bf16.xpose.msra.mxu0 0
        %1647 = vmatprep.subr.bf16.mxu0 0
        %1648 = vmatpush1.bf16.xpose.msra.mxu0 0
        %1649 = vmatprep.subr.bf16.mxu0 0
        %1650 = vmatpush1.bf16.xpose.msra.mxu0 0
        %1651 = vmatprep.subr.bf16.mxu0 0
        %1652 = vmatpush1.bf16.xpose.msra.mxu0 0
        %1653 = vmatprep.subr.bf16.mxu0 0
        %1654 = vmatpush1.bf16.xpose.msra.mxu0 0
        %1655 = vmatprep.subr.bf16.mxu0 0
        %1656 = vmatpush1.bf16.xpose.msra.mxu0 0
        %1657 = vmatprep.subr.bf16.mxu0 0
        %1658 = vmatpush1.bf16.xpose.msra.mxu0 0
        %1659 = vmatprep.subr.bf16.mxu0 0
        %1660 = vmatpush1.bf16.xpose.msra.mxu0 0
        %1661 = vmatprep.subr.bf16.mxu0 0
        %1662 = vmatpush1.bf16.xpose.msra.mxu0 0
        %1663 = vmatprep.subr.bf16.mxu0 0
        %1664 = vmatpush1.bf16.xpose.msra.mxu0 0
        %1665 = vmatprep.subr.bf16.mxu0 0
        %1666 = vmatpush1.bf16.xpose.msra.mxu0 0
        %1667 = vmatprep.subr.bf16.mxu0 0
        %1668 = vmatpush1.bf16.xpose.msra.mxu0 0
        %1669 = vmatprep.subr.bf16.mxu0 0
        %1670 = vmatpush1.bf16.xpose.msra.mxu0 0
        %1671 = vmatprep.mubr.bf16.mxu0 0
        %1672 = vmatmul.mubr.bf16.gmra.mrb[0].mxu0 %v1637
        %v1673 = vpop.f32.mrb[0].mxu0
        %v1674 = vadd.f32 0.0, %v1673
        %v1675 = vpop.f32.mrb[0].mxu0
        %v1676 = vpop.f32.mrb[0].mxu0
        %v1677 = vpop.f32.mrb[0].mxu0
        %1678 = vdwg.mxu0
        %v1679 = vmul.f32 %v1674, 0.4472136
        %v1680 = vsel %vm1356, %v1679, -inf
        %1681 = vmax.xlane.f32.xlu0 %v1680
        %v1682 = vpop.xlane.xlu0 %1681
        %v1683 = vsub.f32 %v1679, %v1682
        %v1684 = vmul.f32 %v1683, 1.442695
        %v1685 = vpow.pop %v1684
        %v1686 = vsel %vm1356, %v1685, 0.0
        %1687 = vadd.xlane.f32.xlu0 %v1686
        %v1688 = vpop.xlane.xlu0 %1687
        %v1689 = vrcp.pop %v1688
        %v1690 = vmul.f32 %v1685, %v1689
        %v1691 = vmul.f32 %v1301, %v1058
        %v1692 = vpack.c.bf16 %v1691, %v1691
        %v1693 = vpack.c.bf16 %v1690, %v1690
        %v1695 = vsel %vm1431, %v1693, 0
        %v1698 = vand.u32 %v1692, %v1437
        %1700 = vmatprep.subr.bf16.mxu0 0
        %1701 = vmatpush1.bf16.msra.mxu0 %v1698
        %1702 = vmatprep.subr.bf16.mxu0 0
        %1703 = vmatpush1.bf16.msra.mxu0 0
        %1704 = vmatprep.subr.bf16.mxu0 0
        %1705 = vmatpush1.bf16.msra.mxu0 0
        %1706 = vmatprep.subr.bf16.mxu0 0
        %1707 = vmatpush1.bf16.msra.mxu0 0
        %1708 = vmatprep.subr.bf16.mxu0 0
        %1709 = vmatpush1.bf16.msra.mxu0 0
        %1710 = vmatprep.subr.bf16.mxu0 0
        %1711 = vmatpush1.bf16.msra.mxu0 0
        %1712 = vmatprep.subr.bf16.mxu0 0
        %1713 = vmatpush1.bf16.msra.mxu0 0
        %1714 = vmatprep.subr.bf16.mxu0 0
        %1715 = vmatpush1.bf16.msra.mxu0 0
        %1716 = vmatprep.subr.bf16.mxu0 0
        %1717 = vmatpush1.bf16.msra.mxu0 0
        %1718 = vmatprep.subr.bf16.mxu0 0
        %1719 = vmatpush1.bf16.msra.mxu0 0
        %1720 = vmatprep.subr.bf16.mxu0 0
        %1721 = vmatpush1.bf16.msra.mxu0 0
        %1722 = vmatprep.subr.bf16.mxu0 0
        %1723 = vmatpush1.bf16.msra.mxu0 0
        %1724 = vmatprep.subr.bf16.mxu0 0
        %1725 = vmatpush1.bf16.msra.mxu0 0
        %1726 = vmatprep.subr.bf16.mxu0 0
        %1727 = vmatpush1.bf16.msra.mxu0 0
        %1728 = vmatprep.subr.bf16.mxu0 0
        %1729 = vmatpush1.bf16.msra.mxu0 0
        %1730 = vmatprep.subr.bf16.mxu0 0
        %1731 = vmatpush1.bf16.msra.mxu0 0
        %1732 = vmatprep.mubr.bf16.mxu0 0
        %1733 = vmatmul.mubr.bf16.gmra.mrb[0].mxu0 %v1695
        %v1734 = vpop.f32.mrb[0].mxu0
        %v1735 = vadd.f32 0.0, %v1734
        %v1736 = vpop.f32.mrb[0].mxu0
        %v1737 = vpop.f32.mrb[0].mxu0
        %v1738 = vpop.f32.mrb[0].mxu0
        %1739 = vdwg.mxu0
        %v1740 = vadd.f32 %v1633, %v1735
        %v1741 = vpack.c.bf16 %v1740, %v1740
        %v1742 = vlaneseq
        %v1743 = vshrl.u32 %v1742, 7
        %v1744 = vsub.s32 6, %v1743
        %v1745 = vrot.slane %v1059, %v1744
        %v1749 = vunpack.c.l.b16 %v1070
        %v1750 = vunpack.c.l.b16 %v1071
        %v1751 = vunpack.c.l.b16 %v1072
        %v1752 = vpack.c.b16 %v1750, %v1749
        %v1753 = vpack.c.b16 %v1751, %v1751
        %v1756 = vsel %vm1108, %v1741, 0
        %v1759 = vsel %vm1112, %v1753, 0
        %1761 = vmatprep.subr.bf16.mxu0 0
        %1762 = vmatpush1.bf16.msra.mxu0 %v1752
        %1763 = vmatprep.subr.bf16.mxu0 0
        %1764 = vmatpush1.bf16.msra.mxu0 %v1759
        %1765 = vmatprep.subr.bf16.mxu0 0
        %1766 = vmatpush1.bf16.msra.mxu0 0
        %1767 = vmatprep.subr.bf16.mxu0 0
        %1768 = vmatpush1.bf16.msra.mxu0 0
        %1769 = vmatprep.subr.bf16.mxu0 0
        %1770 = vmatpush1.bf16.msra.mxu0 0
        %1771 = vmatprep.subr.bf16.mxu0 0
        %1772 = vmatpush1.bf16.msra.mxu0 0
        %1773 = vmatprep.subr.bf16.mxu0 0
        %1774 = vmatpush1.bf16.msra.mxu0 0
        %1775 = vmatprep.subr.bf16.mxu0 0
        %1776 = vmatpush1.bf16.msra.mxu0 0
        %1777 = vmatprep.subr.bf16.mxu0 0
        %1778 = vmatpush1.bf16.msra.mxu0 0
        %1779 = vmatprep.subr.bf16.mxu0 0
        %1780 = vmatpush1.bf16.msra.mxu0 0
        %1781 = vmatprep.subr.bf16.mxu0 0
        %1782 = vmatpush1.bf16.msra.mxu0 0
        %1783 = vmatprep.subr.bf16.mxu0 0
        %1784 = vmatpush1.bf16.msra.mxu0 0
        %1785 = vmatprep.subr.bf16.mxu0 0
        %1786 = vmatpush1.bf16.msra.mxu0 0
        %1787 = vmatprep.subr.bf16.mxu0 0
        %1788 = vmatpush1.bf16.msra.mxu0 0
        %1789 = vmatprep.subr.bf16.mxu0 0
        %1790 = vmatpush1.bf16.msra.mxu0 0
        %1791 = vmatprep.subr.bf16.mxu0 0
        %1792 = vmatpush1.bf16.msra.mxu0 0
        %1793 = vmatprep.mubr.bf16.mxu0 0
        %1794 = vmatmul.mubr.bf16.gmra.mrb[0].mxu0 %v1756
        %v1795 = vpop.f32.mrb[0].mxu0
        %v1796 = vadd.f32 %v1745, %v1795
        %v1797 = vpop.f32.mrb[0].mxu0
        %v1798 = vpop.f32.mrb[0].mxu0
        %v1799 = vpop.f32.mrb[0].mxu0
        %1800 = vdwg.mxu0
        %v1801 = vlaneseq
        %v1802 = vshrl.u32 %v1801, 7
        %v1803 = vsub.s32 7, %v1802
        %v1804 = vrot.slane %v1059, %v1803
        %v1805 = vmul.f32 %v1804, %v1796
        %v1806 = vadd.f32 %v1036, %v1805
        %v1807 = vsel %vm1073, %v1806, 0.0
        %1808 = vadd.xlane.f32.xlu0 %v1807
        %v1809 = vpop.xlane.xlu0 %1808
        %v1810 = vmul.f32 %v1809, %v1077
        %v1811 = vsub.f32 %v1806, %v1810
        %v1812 = vmul.f32 %v1811, %v1811
        %v1813 = vsel %vm1073, %v1812, 0.0
        %1814 = vadd.xlane.f32.xlu0 %v1813
        %v1815 = vpop.xlane.xlu0 %1814
        %v1816 = vmul.f32 %v1815, %v1077
        %v1817 = vadd.f32 %v1816, 1e-05
        %v1818 = vrsqrt.pop %v1817
        %v1819 = vmul.f32 %v1811, %v1818
        %v1820 = vlaneseq
        %v1821 = vshrl.u32 %v1820, 7
        %v1822 = vsub.s32 0, %v1821
        %v1823 = vrot.slane %v1060, %v1822
        %v1824 = vmul.f32 %v1819, %v1823
        %v1825 = vlaneseq
        %v1826 = vshrl.u32 %v1825, 7
        %v1827 = vsub.s32 1, %v1826
        %v1828 = vrot.slane %v1060, %v1827
        %v1829 = vadd.f32 %v1824, %v1828
        %v1830 = vpack.c.bf16 %v1829, %v1829
        %v1831 = vld [vmem:[%s11] sm:$0xf]
        %v1832 = vld [vmem:[%s11 + $0x4] sm:$0xf]
        %v1833 = vld [vmem:[%s11 + $0x8] sm:$0x3]
        %v1834 = vld [vmem:[%s9] sm:$0x1]
        %v1836 = vlaneseq
        %v1837 = vshrl.u32 %v1836, 7
        %v1838 = vsub.s32 0, %v1837
        %v1839 = vrot.slane %v1834, %v1838
        %v1844 = vunpack.c.l.b16 %v1831
        %v1845 = vunpack.c.l.b16 %v1832
        %v1846 = vunpack.c.l.b16 %v1833
        %v1847 = vpack.c.b16 %v1845, %v1844
        %v1848 = vpack.c.b16 %v1846, %v1846
        %v1851 = vsel %vm1108, %v1830, 0
        %v1854 = vsel %vm1112, %v1848, 0
        %1856 = vmatprep.subr.bf16.mxu0 0
        %1857 = vmatpush1.bf16.msra.mxu0 %v1847
        %1858 = vmatprep.subr.bf16.mxu0 0
        %1859 = vmatpush1.bf16.msra.mxu0 %v1854
        %1860 = vmatprep.subr.bf16.mxu0 0
        %1861 = vmatpush1.bf16.msra.mxu0 0
        %1862 = vmatprep.subr.bf16.mxu0 0
        %1863 = vmatpush1.bf16.msra.mxu0 0
        %1864 = vmatprep.subr.bf16.mxu0 0
        %1865 = vmatpush1.bf16.msra.mxu0 0
        %1866 = vmatprep.subr.bf16.mxu0 0
        %1867 = vmatpush1.bf16.msra.mxu0 0
        %1868 = vmatprep.subr.bf16.mxu0 0
        %1869 = vmatpush1.bf16.msra.mxu0 0
        %1870 = vmatprep.subr.bf16.mxu0 0
        %1871 = vmatpush1.bf16.msra.mxu0 0
        %1872 = vmatprep.subr.bf16.mxu0 0
        %1873 = vmatpush1.bf16.msra.mxu0 0
        %1874 = vmatprep.subr.bf16.mxu0 0
        %1875 = vmatpush1.bf16.msra.mxu0 0
        %1876 = vmatprep.subr.bf16.mxu0 0
        %1877 = vmatpush1.bf16.msra.mxu0 0
        %1878 = vmatprep.subr.bf16.mxu0 0
        %1879 = vmatpush1.bf16.msra.mxu0 0
        %1880 = vmatprep.subr.bf16.mxu0 0
        %1881 = vmatpush1.bf16.msra.mxu0 0
        %1882 = vmatprep.subr.bf16.mxu0 0
        %1883 = vmatpush1.bf16.msra.mxu0 0
        %1884 = vmatprep.subr.bf16.mxu0 0
        %1885 = vmatpush1.bf16.msra.mxu0 0
        %1886 = vmatprep.subr.bf16.mxu0 0
        %1887 = vmatpush1.bf16.msra.mxu0 0
        %1888 = vmatprep.mubr.bf16.mxu0 0
        %1889 = vmatmul.mubr.bf16.gmra.mrb[0].mxu0 %v1851
        %v1890 = vpop.f32.mrb[0].mxu0
        %v1891 = vadd.f32 %v1839, %v1890
        %v1892 = vpop.f32.mrb[0].mxu0
        %v1893 = vpop.f32.mrb[0].mxu0
        %v1894 = vpop.f32.mrb[0].mxu0
        %1895 = vdwg.mxu0
        %v1896 = vmul.f32 %v1891, 0.5
        %v1897 = vmul.f32 %v1891, 0.70710677
        %vm1898 = vcmp.ge.f32.partialorder %v1897, 0.0
        %v1899 = vsel %vm1898, 1.0, -1.0
        %v1900 = vand.u32 2147483647, %v1897
        %v1901 = vmul.f32 %v1900, 0.3275911
        %v1902 = vadd.f32 %v1901, 1.0
        %v1903 = vrcp.pop %v1902
        %v1904 = vmul.f32 1.0, %v1903
        %v1905 = vmul.f32 %v1904, 1.0614054
        %v1906 = vadd.f32 %v1905, -1.4531521
        %v1907 = vmul.f32 %v1906, %v1904
        %v1908 = vadd.f32 %v1907, 1.4214138
        %v1909 = vmul.f32 %v1908, %v1904
        %v1910 = vadd.f32 %v1909, -0.28449672
        %v1911 = vmul.f32 %v1910, %v1904
        %v1912 = vadd.f32 %v1911, 0.2548296
        %v1913 = vmul.f32 %v1912, %v1904
        %v1914 = vsub.f32 0.0, %v1900
        %v1915 = vmul.f32 %v1914, %v1900
        %v1916 = vmul.f32 %v1915, 1.442695
        %v1917 = vpow.pop %v1916
        %v1918 = vmul.f32 %v1913, %v1917
        %v1919 = vsub.f32 1.0, %v1918
        %v1920 = vmul.f32 %v1899, %v1919
        %v1921 = vadd.f32 %v1920, 1.0
        %v1922 = vmul.f32 %v1896, %v1921
        %v1923 = vpack.c.bf16 %v1922, %v1922
        %v1924 = vld [vmem:[%s12] sm:$0xf]
        %v1925 = vld [vmem:[%s12 + $0x4] sm:$0xf]
        %v1926 = vld [vmem:[%s12 + $0x8] sm:$0xf]
        %v1927 = vld [vmem:[%s12 + $0xc] sm:$0xf]
        %v1928 = vld [vmem:[%s12 + $0x10] sm:$0xf]
        %v1929 = vld [vmem:[%s12 + $0x14] sm:$0xf]
        %v1930 = vld [vmem:[%s12 + $0x18] sm:$0xf]
        %v1931 = vld [vmem:[%s12 + $0x1c] sm:$0xf]
        %v1932 = vld [vmem:[%s12 + $0x20] sm:$0xf]
        %v1933 = vld [vmem:[%s12 + $0x24] sm:$0xf]
        %v1934 = vlaneseq
        %v1935 = vshrl.u32 %v1934, 7
        %v1936 = vsub.s32 2, %v1935
        %v1937 = vrot.slane %v1060, %v1936
        %v1948 = vunpack.c.l.b16 %v1924
        %v1949 = vunpack.c.l.b16 %v1925
        %v1950 = vunpack.c.l.b16 %v1926
        %v1951 = vunpack.c.l.b16 %v1927
        %v1952 = vunpack.c.l.b16 %v1928
        %v1953 = vunpack.c.l.b16 %v1929
        %v1954 = vunpack.c.l.b16 %v1930
        %v1955 = vunpack.c.l.b16 %v1931
        %v1956 = vunpack.c.l.b16 %v1932
        %v1957 = vunpack.c.l.b16 %v1933
        %v1958 = vpack.c.b16 %v1949, %v1948
        %v1959 = vpack.c.b16 %v1951, %v1950
        %v1960 = vpack.c.b16 %v1953, %v1952
        %v1961 = vpack.c.b16 %v1955, %v1954
        %v1962 = vpack.c.b16 %v1957, %v1956
        %vm1968 = vcmask 654336
        %v1970 = vsel %vm1968, %v1923, 0
        %1972 = vmatprep.subr.bf16.mxu0 0
        %1973 = vmatpush1.bf16.msra.mxu0 %v1958
        %1974 = vmatprep.subr.bf16.mxu0 0
        %1975 = vmatpush1.bf16.msra.mxu0 %v1959
        %1976 = vmatprep.subr.bf16.mxu0 0
        %1977 = vmatpush1.bf16.msra.mxu0 %v1960
        %1978 = vmatprep.subr.bf16.mxu0 0
        %1979 = vmatpush1.bf16.msra.mxu0 %v1961
        %1980 = vmatprep.subr.bf16.mxu0 0
        %1981 = vmatpush1.bf16.msra.mxu0 %v1962
        %1982 = vmatprep.subr.bf16.mxu0 0
        %1983 = vmatpush1.bf16.msra.mxu0 0
        %1984 = vmatprep.subr.bf16.mxu0 0
        %1985 = vmatpush1.bf16.msra.mxu0 0
        %1986 = vmatprep.subr.bf16.mxu0 0
        %1987 = vmatpush1.bf16.msra.mxu0 0
        %1988 = vmatprep.subr.bf16.mxu0 0
        %1989 = vmatpush1.bf16.msra.mxu0 0
        %1990 = vmatprep.subr.bf16.mxu0 0
        %1991 = vmatpush1.bf16.msra.mxu0 0
        %1992 = vmatprep.subr.bf16.mxu0 0
        %1993 = vmatpush1.bf16.msra.mxu0 0
        %1994 = vmatprep.subr.bf16.mxu0 0
        %1995 = vmatpush1.bf16.msra.mxu0 0
        %1996 = vmatprep.subr.bf16.mxu0 0
        %1997 = vmatpush1.bf16.msra.mxu0 0
        %1998 = vmatprep.subr.bf16.mxu0 0
        %1999 = vmatpush1.bf16.msra.mxu0 0
        %2000 = vmatprep.subr.bf16.mxu0 0
        %2001 = vmatpush1.bf16.msra.mxu0 0
        %2002 = vmatprep.subr.bf16.mxu0 0
        %2003 = vmatpush1.bf16.msra.mxu0 0
        %2004 = vmatprep.mubr.bf16.mxu0 0
        %2005 = vmatmul.mubr.bf16.gmra.mrb[0].mxu0 %v1970
        %v2006 = vpop.f32.mrb[0].mxu0
        %v2007 = vadd.f32 %v1937, %v2006
        %v2008 = vpop.f32.mrb[0].mxu0
        %v2009 = vpop.f32.mrb[0].mxu0
        %v2010 = vpop.f32.mrb[0].mxu0
        %2011 = vdwg.mxu0
        %v2012 = vlaneseq
        %v2013 = vshrl.u32 %v2012, 7
        %v2014 = vsub.s32 3, %v2013
        %v2015 = vrot.slane %v1060, %v2014
        %v2016 = vmul.f32 %v2015, %v2007
        %v2017 = vadd.f32 %v1806, %v2016
        %s2018 = scalar_lea.vmem %s8, 16
        %v2019 = vld [vmem:[%s2018] sm:$0xff]
        %v2020 = vld [vmem:[%s2018 + $0x8] sm:$0xf]
        %s2021 = scalar_lea.vmem %s10, 48
        %v2022 = vld [vmem:[%s2021] sm:$0xf]
        %v2023 = vld [vmem:[%s2021 + $0x4] sm:$0xf]
        %v2024 = vld [vmem:[%s2021 + $0x8] sm:$0x3]
        %v2025 = vld [vmem:[%s2021 + $0xc] sm:$0xf]
        %v2026 = vld [vmem:[%s2021 + $0x10] sm:$0xf]
        %v2027 = vld [vmem:[%s2021 + $0x14] sm:$0x3]
        %v2028 = vld [vmem:[%s2021 + $0x18] sm:$0xf]
        %v2029 = vld [vmem:[%s2021 + $0x1c] sm:$0xf]
        %v2030 = vld [vmem:[%s2021 + $0x20] sm:$0x3]
        %v2031 = vld [vmem:[%s2021 + $0x24] sm:$0xf]
        %v2032 = vld [vmem:[%s2021 + $0x28] sm:$0xf]
        %v2033 = vld [vmem:[%s2021 + $0x2c] sm:$0x3]
        %v2034 = vsel %vm1073, %v2017, 0.0
        %2035 = vadd.xlane.f32.xlu0 %v2034
        %v2036 = vpop.xlane.xlu0 %2035
        %v2037 = vmul.f32 %v2036, %v1077
        %v2038 = vsub.f32 %v2017, %v2037
        %v2039 = vmul.f32 %v2038, %v2038
        %v2040 = vsel %vm1073, %v2039, 0.0
        %2041 = vadd.xlane.f32.xlu0 %v2040
        %v2042 = vpop.xlane.xlu0 %2041
        %v2043 = vmul.f32 %v2042, %v1077
        %v2044 = vadd.f32 %v2043, 1e-05
        %v2045 = vrsqrt.pop %v2044
        %v2046 = vmul.f32 %v2038, %v2045
        %v2047 = vlaneseq
        %v2048 = vshrl.u32 %v2047, 7
        %v2049 = vsub.s32 0, %v2048
        %v2050 = vrot.slane %v2019, %v2049
        %v2051 = vmul.f32 %v2046, %v2050
        %v2052 = vlaneseq
        %v2053 = vshrl.u32 %v2052, 7
        %v2054 = vsub.s32 1, %v2053
        %v2055 = vrot.slane %v2019, %v2054
        %v2056 = vadd.f32 %v2051, %v2055
        %v2057 = vpack.c.bf16 %v2056, %v2056
        %v2061 = vunpack.c.l.b16 %v2022
        %v2062 = vunpack.c.l.b16 %v2023
        %v2063 = vunpack.c.l.b16 %v2024
        %v2064 = vpack.c.b16 %v2062, %v2061
        %v2065 = vpack.c.b16 %v2063, %v2063
        %v2068 = vsel %vm1108, %v2057, 0
        %v2071 = vsel %vm1112, %v2065, 0
        %2073 = vmatprep.subr.bf16.mxu0 0
        %2074 = vmatpush1.bf16.msra.mxu0 %v2064
        %2075 = vmatprep.subr.bf16.mxu0 0
        %2076 = vmatpush1.bf16.msra.mxu0 %v2071
        %2077 = vmatprep.subr.bf16.mxu0 0
        %2078 = vmatpush1.bf16.msra.mxu0 0
        %2079 = vmatprep.subr.bf16.mxu0 0
        %2080 = vmatpush1.bf16.msra.mxu0 0
        %2081 = vmatprep.subr.bf16.mxu0 0
        %2082 = vmatpush1.bf16.msra.mxu0 0
        %2083 = vmatprep.subr.bf16.mxu0 0
        %2084 = vmatpush1.bf16.msra.mxu0 0
        %2085 = vmatprep.subr.bf16.mxu0 0
        %2086 = vmatpush1.bf16.msra.mxu0 0
        %2087 = vmatprep.subr.bf16.mxu0 0
        %2088 = vmatpush1.bf16.msra.mxu0 0
        %2089 = vmatprep.subr.bf16.mxu0 0
        %2090 = vmatpush1.bf16.msra.mxu0 0
        %2091 = vmatprep.subr.bf16.mxu0 0
        %2092 = vmatpush1.bf16.msra.mxu0 0
        %2093 = vmatprep.subr.bf16.mxu0 0
        %2094 = vmatpush1.bf16.msra.mxu0 0
        %2095 = vmatprep.subr.bf16.mxu0 0
        %2096 = vmatpush1.bf16.msra.mxu0 0
        %2097 = vmatprep.subr.bf16.mxu0 0
        %2098 = vmatpush1.bf16.msra.mxu0 0
        %2099 = vmatprep.subr.bf16.mxu0 0
        %2100 = vmatpush1.bf16.msra.mxu0 0
        %2101 = vmatprep.subr.bf16.mxu0 0
        %2102 = vmatpush1.bf16.msra.mxu0 0
        %2103 = vmatprep.subr.bf16.mxu0 0
        %2104 = vmatpush1.bf16.msra.mxu0 0
        %2105 = vmatprep.mubr.bf16.mxu0 0
        %2106 = vmatmul.mubr.bf16.gmra.mrb[0].mxu0 %v2068
        %v2107 = vpop.f32.mrb[0].mxu0
        %v2108 = vadd.f32 0.0, %v2107
        %v2109 = vpop.f32.mrb[0].mxu0
        %v2110 = vpop.f32.mrb[0].mxu0
        %v2111 = vpop.f32.mrb[0].mxu0
        %2112 = vdwg.mxu0
        %v2113 = vsel %vm1073, %v2108, 0.0
        %2114 = vadd.xlane.f32.xlu0 %v2113
        %v2115 = vpop.xlane.xlu0 %2114
        %v2116 = vmul.f32 %v2115, %v1077
        %v2117 = vsub.f32 %v2108, %v2116
        %v2118 = vmul.f32 %v2117, %v2117
        %v2119 = vsel %vm1073, %v2118, 0.0
        %2120 = vadd.xlane.f32.xlu0 %v2119
        %v2121 = vpop.xlane.xlu0 %2120
        %v2122 = vmul.f32 %v2121, %v1077
        %v2123 = vadd.f32 %v2122, 1e-05
        %v2124 = vrsqrt.pop %v2123
        %v2125 = vmul.f32 %v2117, %v2124
        %v2126 = vlaneseq
        %v2127 = vshrl.u32 %v2126, 7
        %v2128 = vsub.s32 2, %v2127
        %v2129 = vrot.slane %v2019, %v2128
        %v2130 = vmul.f32 %v2125, %v2129
        %v2131 = vlaneseq
        %v2132 = vshrl.u32 %v2131, 7
        %v2133 = vsub.s32 3, %v2132
        %v2134 = vrot.slane %v2019, %v2133
        %v2135 = vadd.f32 %v2130, %v2134
        %v2139 = vunpack.c.l.b16 %v2025
        %v2140 = vunpack.c.l.b16 %v2026
        %v2141 = vunpack.c.l.b16 %v2027
        %v2142 = vpack.c.b16 %v2140, %v2139
        %v2143 = vpack.c.b16 %v2141, %v2141
        %v2146 = vsel %vm1112, %v2143, 0
        %2148 = vmatprep.subr.bf16.mxu0 0
        %2149 = vmatpush1.bf16.msra.mxu0 %v2142
        %2150 = vmatprep.subr.bf16.mxu0 0
        %2151 = vmatpush1.bf16.msra.mxu0 %v2146
        %2152 = vmatprep.subr.bf16.mxu0 0
        %2153 = vmatpush1.bf16.msra.mxu0 0
        %2154 = vmatprep.subr.bf16.mxu0 0
        %2155 = vmatpush1.bf16.msra.mxu0 0
        %2156 = vmatprep.subr.bf16.mxu0 0
        %2157 = vmatpush1.bf16.msra.mxu0 0
        %2158 = vmatprep.subr.bf16.mxu0 0
        %2159 = vmatpush1.bf16.msra.mxu0 0
        %2160 = vmatprep.subr.bf16.mxu0 0
        %2161 = vmatpush1.bf16.msra.mxu0 0
        %2162 = vmatprep.subr.bf16.mxu0 0
        %2163 = vmatpush1.bf16.msra.mxu0 0
        %2164 = vmatprep.subr.bf16.mxu0 0
        %2165 = vmatpush1.bf16.msra.mxu0 0
        %2166 = vmatprep.subr.bf16.mxu0 0
        %2167 = vmatpush1.bf16.msra.mxu0 0
        %2168 = vmatprep.subr.bf16.mxu0 0
        %2169 = vmatpush1.bf16.msra.mxu0 0
        %2170 = vmatprep.subr.bf16.mxu0 0
        %2171 = vmatpush1.bf16.msra.mxu0 0
        %2172 = vmatprep.subr.bf16.mxu0 0
        %2173 = vmatpush1.bf16.msra.mxu0 0
        %2174 = vmatprep.subr.bf16.mxu0 0
        %2175 = vmatpush1.bf16.msra.mxu0 0
        %2176 = vmatprep.subr.bf16.mxu0 0
        %2177 = vmatpush1.bf16.msra.mxu0 0
        %2178 = vmatprep.subr.bf16.mxu0 0
        %2179 = vmatpush1.bf16.msra.mxu0 0
        %2180 = vmatprep.mubr.bf16.mxu0 0
        %2181 = vmatmul.mubr.bf16.gmra.mrb[0].mxu0 %v2068
        %v2182 = vpop.f32.mrb[0].mxu0
        %v2183 = vadd.f32 0.0, %v2182
        %v2184 = vpop.f32.mrb[0].mxu0
        %v2185 = vpop.f32.mrb[0].mxu0
        %v2186 = vpop.f32.mrb[0].mxu0
        %2187 = vdwg.mxu0
        %v2188 = vsel %vm1073, %v2183, 0.0
        %2189 = vadd.xlane.f32.xlu0 %v2188
        %v2190 = vpop.xlane.xlu0 %2189
        %v2191 = vmul.f32 %v2190, %v1077
        %v2192 = vsub.f32 %v2183, %v2191
        %v2193 = vmul.f32 %v2192, %v2192
        %v2194 = vsel %vm1073, %v2193, 0.0
        %2195 = vadd.xlane.f32.xlu0 %v2194
        %v2196 = vpop.xlane.xlu0 %2195
        %v2197 = vmul.f32 %v2196, %v1077
        %v2198 = vadd.f32 %v2197, 1e-05
        %v2199 = vrsqrt.pop %v2198
        %v2200 = vmul.f32 %v2192, %v2199
        %v2201 = vlaneseq
        %v2202 = vshrl.u32 %v2201, 7
        %v2203 = vsub.s32 4, %v2202
        %v2204 = vrot.slane %v2019, %v2203
        %v2205 = vmul.f32 %v2200, %v2204
        %v2206 = vlaneseq
        %v2207 = vshrl.u32 %v2206, 7
        %v2208 = vsub.s32 5, %v2207
        %v2209 = vrot.slane %v2019, %v2208
        %v2210 = vadd.f32 %v2205, %v2209
        %v2214 = vunpack.c.l.b16 %v2028
        %v2215 = vunpack.c.l.b16 %v2029
        %v2216 = vunpack.c.l.b16 %v2030
        %v2217 = vpack.c.b16 %v2215, %v2214
        %v2218 = vpack.c.b16 %v2216, %v2216
        %v2221 = vsel %vm1112, %v2218, 0
        %2223 = vmatprep.subr.bf16.mxu0 0
        %2224 = vmatpush1.bf16.msra.mxu0 %v2217
        %2225 = vmatprep.subr.bf16.mxu0 0
        %2226 = vmatpush1.bf16.msra.mxu0 %v2221
        %2227 = vmatprep.subr.bf16.mxu0 0
        %2228 = vmatpush1.bf16.msra.mxu0 0
        %2229 = vmatprep.subr.bf16.mxu0 0
        %2230 = vmatpush1.bf16.msra.mxu0 0
        %2231 = vmatprep.subr.bf16.mxu0 0
        %2232 = vmatpush1.bf16.msra.mxu0 0
        %2233 = vmatprep.subr.bf16.mxu0 0
        %2234 = vmatpush1.bf16.msra.mxu0 0
        %2235 = vmatprep.subr.bf16.mxu0 0
        %2236 = vmatpush1.bf16.msra.mxu0 0
        %2237 = vmatprep.subr.bf16.mxu0 0
        %2238 = vmatpush1.bf16.msra.mxu0 0
        %2239 = vmatprep.subr.bf16.mxu0 0
        %2240 = vmatpush1.bf16.msra.mxu0 0
        %2241 = vmatprep.subr.bf16.mxu0 0
        %2242 = vmatpush1.bf16.msra.mxu0 0
        %2243 = vmatprep.subr.bf16.mxu0 0
        %2244 = vmatpush1.bf16.msra.mxu0 0
        %2245 = vmatprep.subr.bf16.mxu0 0
        %2246 = vmatpush1.bf16.msra.mxu0 0
        %2247 = vmatprep.subr.bf16.mxu0 0
        %2248 = vmatpush1.bf16.msra.mxu0 0
        %2249 = vmatprep.subr.bf16.mxu0 0
        %2250 = vmatpush1.bf16.msra.mxu0 0
        %2251 = vmatprep.subr.bf16.mxu0 0
        %2252 = vmatpush1.bf16.msra.mxu0 0
        %2253 = vmatprep.subr.bf16.mxu0 0
        %2254 = vmatpush1.bf16.msra.mxu0 0
        %2255 = vmatprep.mubr.bf16.mxu0 0
        %2256 = vmatmul.mubr.bf16.gmra.mrb[0].mxu0 %v2068
        %v2257 = vpop.f32.mrb[0].mxu0
        %v2258 = vadd.f32 0.0, %v2257
        %v2259 = vpop.f32.mrb[0].mxu0
        %v2260 = vpop.f32.mrb[0].mxu0
        %v2261 = vpop.f32.mrb[0].mxu0
        %2262 = vdwg.mxu0
        %v2263 = vpack.c.bf16 %v2210, %v2210
        %v2264 = vmul.f32 %v2135, %v1043
        %v2265 = vpack.c.bf16 %v2264, %v2264
        %v2267 = vsel %vm1108, %v2265, 0
        %v2270 = vsel %vm1108, %v2263, 0
        %2272 = vmatprep.subr.bf16.mxu0 0
        %2273 = vmatpush1.bf16.xpose.msra.mxu0 %v2270
        %2274 = vmatprep.subr.bf16.mxu0 0
        %2275 = vmatpush1.bf16.xpose.msra.mxu0 0
        %2276 = vmatprep.subr.bf16.mxu0 0
        %2277 = vmatpush1.bf16.xpose.msra.mxu0 0
        %2278 = vmatprep.subr.bf16.mxu0 0
        %2279 = vmatpush1.bf16.xpose.msra.mxu0 0
        %2280 = vmatprep.subr.bf16.mxu0 0
        %2281 = vmatpush1.bf16.xpose.msra.mxu0 0
        %2282 = vmatprep.subr.bf16.mxu0 0
        %2283 = vmatpush1.bf16.xpose.msra.mxu0 0
        %2284 = vmatprep.subr.bf16.mxu0 0
        %2285 = vmatpush1.bf16.xpose.msra.mxu0 0
        %2286 = vmatprep.subr.bf16.mxu0 0
        %2287 = vmatpush1.bf16.xpose.msra.mxu0 0
        %2288 = vmatprep.subr.bf16.mxu0 0
        %2289 = vmatpush1.bf16.xpose.msra.mxu0 0
        %2290 = vmatprep.subr.bf16.mxu0 0
        %2291 = vmatpush1.bf16.xpose.msra.mxu0 0
        %2292 = vmatprep.subr.bf16.mxu0 0
        %2293 = vmatpush1.bf16.xpose.msra.mxu0 0
        %2294 = vmatprep.subr.bf16.mxu0 0
        %2295 = vmatpush1.bf16.xpose.msra.mxu0 0
        %2296 = vmatprep.subr.bf16.mxu0 0
        %2297 = vmatpush1.bf16.xpose.msra.mxu0 0
        %2298 = vmatprep.subr.bf16.mxu0 0
        %2299 = vmatpush1.bf16.xpose.msra.mxu0 0
        %2300 = vmatprep.subr.bf16.mxu0 0
        %2301 = vmatpush1.bf16.xpose.msra.mxu0 0
        %2302 = vmatprep.subr.bf16.mxu0 0
        %2303 = vmatpush1.bf16.xpose.msra.mxu0 0
        %2304 = vmatprep.mubr.bf16.mxu0 0
        %2305 = vmatmul.mubr.bf16.gmra.mrb[0].mxu0 %v2267
        %v2306 = vpop.f32.mrb[0].mxu0
        %v2307 = vadd.f32 0.0, %v2306
        %v2308 = vpop.f32.mrb[0].mxu0
        %v2309 = vpop.f32.mrb[0].mxu0
        %v2310 = vpop.f32.mrb[0].mxu0
        %2311 = vdwg.mxu0
        %v2312 = vmul.f32 %v2307, 0.4472136
        %v2313 = vsel %vm1356, %v2312, -inf
        %2314 = vmax.xlane.f32.xlu0 %v2313
        %v2315 = vpop.xlane.xlu0 %2314
        %v2316 = vsub.f32 %v2312, %v2315
        %v2317 = vmul.f32 %v2316, 1.442695
        %v2318 = vpow.pop %v2317
        %v2319 = vsel %vm1356, %v2318, 0.0
        %2320 = vadd.xlane.f32.xlu0 %v2319
        %v2321 = vpop.xlane.xlu0 %2320
        %v2322 = vrcp.pop %v2321
        %v2323 = vmul.f32 %v2318, %v2322
        %v2324 = vmul.f32 %v2258, %v1043
        %v2325 = vpack.c.bf16 %v2324, %v2324
        %v2326 = vpack.c.bf16 %v2323, %v2323
        %v2327 = vmul.f32 %v2135, %v1048
        %v2328 = vpack.c.bf16 %v2327, %v2327
        %v2330 = vsel %vm1108, %v2328, 0
        %2332 = vmatprep.subr.bf16.mxu0 0
        %2333 = vmatpush1.bf16.xpose.msra.mxu0 %v2270
        %2334 = vmatprep.subr.bf16.mxu0 0
        %2335 = vmatpush1.bf16.xpose.msra.mxu0 0
        %2336 = vmatprep.subr.bf16.mxu0 0
        %2337 = vmatpush1.bf16.xpose.msra.mxu0 0
        %2338 = vmatprep.subr.bf16.mxu0 0
        %2339 = vmatpush1.bf16.xpose.msra.mxu0 0
        %2340 = vmatprep.subr.bf16.mxu0 0
        %2341 = vmatpush1.bf16.xpose.msra.mxu0 0
        %2342 = vmatprep.subr.bf16.mxu0 0
        %2343 = vmatpush1.bf16.xpose.msra.mxu0 0
        %2344 = vmatprep.subr.bf16.mxu0 0
        %2345 = vmatpush1.bf16.xpose.msra.mxu0 0
        %2346 = vmatprep.subr.bf16.mxu0 0
        %2347 = vmatpush1.bf16.xpose.msra.mxu0 0
        %2348 = vmatprep.subr.bf16.mxu0 0
        %2349 = vmatpush1.bf16.xpose.msra.mxu0 0
        %2350 = vmatprep.subr.bf16.mxu0 0
        %2351 = vmatpush1.bf16.xpose.msra.mxu0 0
        %2352 = vmatprep.subr.bf16.mxu0 0
        %2353 = vmatpush1.bf16.xpose.msra.mxu0 0
        %2354 = vmatprep.subr.bf16.mxu0 0
        %2355 = vmatpush1.bf16.xpose.msra.mxu0 0
        %2356 = vmatprep.subr.bf16.mxu0 0
        %2357 = vmatpush1.bf16.xpose.msra.mxu0 0
        %2358 = vmatprep.subr.bf16.mxu0 0
        %2359 = vmatpush1.bf16.xpose.msra.mxu0 0
        %2360 = vmatprep.subr.bf16.mxu0 0
        %2361 = vmatpush1.bf16.xpose.msra.mxu0 0
        %2362 = vmatprep.subr.bf16.mxu0 0
        %2363 = vmatpush1.bf16.xpose.msra.mxu0 0
        %2364 = vmatprep.mubr.bf16.mxu0 0
        %2365 = vmatmul.mubr.bf16.gmra.mrb[0].mxu0 %v2330
        %v2366 = vpop.f32.mrb[0].mxu0
        %v2367 = vadd.f32 0.0, %v2366
        %v2368 = vpop.f32.mrb[0].mxu0
        %v2369 = vpop.f32.mrb[0].mxu0
        %v2370 = vpop.f32.mrb[0].mxu0
        %2371 = vdwg.mxu0
        %v2372 = vmul.f32 %v2367, 0.4472136
        %v2373 = vsel %vm1356, %v2372, -inf
        %2374 = vmax.xlane.f32.xlu0 %v2373
        %v2375 = vpop.xlane.xlu0 %2374
        %v2376 = vsub.f32 %v2372, %v2375
        %v2377 = vmul.f32 %v2376, 1.442695
        %v2378 = vpow.pop %v2377
        %v2379 = vsel %vm1356, %v2378, 0.0
        %2380 = vadd.xlane.f32.xlu0 %v2379
        %v2381 = vpop.xlane.xlu0 %2380
        %v2382 = vrcp.pop %v2381
        %v2383 = vmul.f32 %v2378, %v2382
        %v2384 = vmul.f32 %v2258, %v1048
        %v2385 = vpack.c.bf16 %v2384, %v2384
        %v2386 = vpack.c.bf16 %v2383, %v2383
        %v2388 = vsel %vm1431, %v2386, 0
        %v2391 = vand.u32 %v2385, %v1437
        %2393 = vmatprep.subr.bf16.mxu0 0
        %2394 = vmatpush1.bf16.msra.mxu0 %v2391
        %2395 = vmatprep.subr.bf16.mxu0 0
        %2396 = vmatpush1.bf16.msra.mxu0 0
        %2397 = vmatprep.subr.bf16.mxu0 0
        %2398 = vmatpush1.bf16.msra.mxu0 0
        %2399 = vmatprep.subr.bf16.mxu0 0
        %2400 = vmatpush1.bf16.msra.mxu0 0
        %2401 = vmatprep.subr.bf16.mxu0 0
        %2402 = vmatpush1.bf16.msra.mxu0 0
        %2403 = vmatprep.subr.bf16.mxu0 0
        %2404 = vmatpush1.bf16.msra.mxu0 0
        %2405 = vmatprep.subr.bf16.mxu0 0
        %2406 = vmatpush1.bf16.msra.mxu0 0
        %2407 = vmatprep.subr.bf16.mxu0 0
        %2408 = vmatpush1.bf16.msra.mxu0 0
        %2409 = vmatprep.subr.bf16.mxu0 0
        %2410 = vmatpush1.bf16.msra.mxu0 0
        %2411 = vmatprep.subr.bf16.mxu0 0
        %2412 = vmatpush1.bf16.msra.mxu0 0
        %2413 = vmatprep.subr.bf16.mxu0 0
        %2414 = vmatpush1.bf16.msra.mxu0 0
        %2415 = vmatprep.subr.bf16.mxu0 0
        %2416 = vmatpush1.bf16.msra.mxu0 0
        %2417 = vmatprep.subr.bf16.mxu0 0
        %2418 = vmatpush1.bf16.msra.mxu0 0
        %2419 = vmatprep.subr.bf16.mxu0 0
        %2420 = vmatpush1.bf16.msra.mxu0 0
        %2421 = vmatprep.subr.bf16.mxu0 0
        %2422 = vmatpush1.bf16.msra.mxu0 0
        %2423 = vmatprep.subr.bf16.mxu0 0
        %2424 = vmatpush1.bf16.msra.mxu0 0
        %2425 = vmatprep.mubr.bf16.mxu0 0
        %2426 = vmatmul.mubr.bf16.gmra.mrb[0].mxu0 %v2388
        %v2427 = vpop.f32.mrb[0].mxu0
        %v2428 = vadd.f32 0.0, %v2427
        %v2429 = vpop.f32.mrb[0].mxu0
        %v2430 = vpop.f32.mrb[0].mxu0
        %v2431 = vpop.f32.mrb[0].mxu0
        %2432 = vdwg.mxu0
        %v2434 = vsel %vm1431, %v2326, 0
        %v2437 = vand.u32 %v2325, %v1437
        %2439 = vmatprep.subr.bf16.mxu0 0
        %2440 = vmatpush1.bf16.msra.mxu0 %v2437
        %2441 = vmatprep.subr.bf16.mxu0 0
        %2442 = vmatpush1.bf16.msra.mxu0 0
        %2443 = vmatprep.subr.bf16.mxu0 0
        %2444 = vmatpush1.bf16.msra.mxu0 0
        %2445 = vmatprep.subr.bf16.mxu0 0
        %2446 = vmatpush1.bf16.msra.mxu0 0
        %2447 = vmatprep.subr.bf16.mxu0 0
        %2448 = vmatpush1.bf16.msra.mxu0 0
        %2449 = vmatprep.subr.bf16.mxu0 0
        %2450 = vmatpush1.bf16.msra.mxu0 0
        %2451 = vmatprep.subr.bf16.mxu0 0
        %2452 = vmatpush1.bf16.msra.mxu0 0
        %2453 = vmatprep.subr.bf16.mxu0 0
        %2454 = vmatpush1.bf16.msra.mxu0 0
        %2455 = vmatprep.subr.bf16.mxu0 0
        %2456 = vmatpush1.bf16.msra.mxu0 0
        %2457 = vmatprep.subr.bf16.mxu0 0
        %2458 = vmatpush1.bf16.msra.mxu0 0
        %2459 = vmatprep.subr.bf16.mxu0 0
        %2460 = vmatpush1.bf16.msra.mxu0 0
        %2461 = vmatprep.subr.bf16.mxu0 0
        %2462 = vmatpush1.bf16.msra.mxu0 0
        %2463 = vmatprep.subr.bf16.mxu0 0
        %2464 = vmatpush1.bf16.msra.mxu0 0
        %2465 = vmatprep.subr.bf16.mxu0 0
        %2466 = vmatpush1.bf16.msra.mxu0 0
        %2467 = vmatprep.subr.bf16.mxu0 0
        %2468 = vmatpush1.bf16.msra.mxu0 0
        %2469 = vmatprep.subr.bf16.mxu0 0
        %2470 = vmatpush1.bf16.msra.mxu0 0
        %2471 = vmatprep.mubr.bf16.mxu0 0
        %2472 = vmatmul.mubr.bf16.gmra.mrb[0].mxu0 %v2434
        %v2473 = vpop.f32.mrb[0].mxu0
        %v2474 = vadd.f32 %v2428, %v2473
        %v2475 = vpop.f32.mrb[0].mxu0
        %v2476 = vpop.f32.mrb[0].mxu0
        %v2477 = vpop.f32.mrb[0].mxu0
        %2478 = vdwg.mxu0
        %v2479 = vmul.f32 %v2135, %v1053
        %v2480 = vpack.c.bf16 %v2479, %v2479
        %v2482 = vsel %vm1108, %v2480, 0
        %2484 = vmatprep.subr.bf16.mxu0 0
        %2485 = vmatpush1.bf16.xpose.msra.mxu0 %v2270
        %2486 = vmatprep.subr.bf16.mxu0 0
        %2487 = vmatpush1.bf16.xpose.msra.mxu0 0
        %2488 = vmatprep.subr.bf16.mxu0 0
        %2489 = vmatpush1.bf16.xpose.msra.mxu0 0
        %2490 = vmatprep.subr.bf16.mxu0 0
        %2491 = vmatpush1.bf16.xpose.msra.mxu0 0
        %2492 = vmatprep.subr.bf16.mxu0 0
        %2493 = vmatpush1.bf16.xpose.msra.mxu0 0
        %2494 = vmatprep.subr.bf16.mxu0 0
        %2495 = vmatpush1.bf16.xpose.msra.mxu0 0
        %2496 = vmatprep.subr.bf16.mxu0 0
        %2497 = vmatpush1.bf16.xpose.msra.mxu0 0
        %2498 = vmatprep.subr.bf16.mxu0 0
        %2499 = vmatpush1.bf16.xpose.msra.mxu0 0
        %2500 = vmatprep.subr.bf16.mxu0 0
        %2501 = vmatpush1.bf16.xpose.msra.mxu0 0
        %2502 = vmatprep.subr.bf16.mxu0 0
        %2503 = vmatpush1.bf16.xpose.msra.mxu0 0
        %2504 = vmatprep.subr.bf16.mxu0 0
        %2505 = vmatpush1.bf16.xpose.msra.mxu0 0
        %2506 = vmatprep.subr.bf16.mxu0 0
        %2507 = vmatpush1.bf16.xpose.msra.mxu0 0
        %2508 = vmatprep.subr.bf16.mxu0 0
        %2509 = vmatpush1.bf16.xpose.msra.mxu0 0
        %2510 = vmatprep.subr.bf16.mxu0 0
        %2511 = vmatpush1.bf16.xpose.msra.mxu0 0
        %2512 = vmatprep.subr.bf16.mxu0 0
        %2513 = vmatpush1.bf16.xpose.msra.mxu0 0
        %2514 = vmatprep.subr.bf16.mxu0 0
        %2515 = vmatpush1.bf16.xpose.msra.mxu0 0
        %2516 = vmatprep.mubr.bf16.mxu0 0
        %2517 = vmatmul.mubr.bf16.gmra.mrb[0].mxu0 %v2482
        %v2518 = vpop.f32.mrb[0].mxu0
        %v2519 = vadd.f32 0.0, %v2518
        %v2520 = vpop.f32.mrb[0].mxu0
        %v2521 = vpop.f32.mrb[0].mxu0
        %v2522 = vpop.f32.mrb[0].mxu0
        %2523 = vdwg.mxu0
        %v2524 = vmul.f32 %v2519, 0.4472136
        %v2525 = vsel %vm1356, %v2524, -inf
        %2526 = vmax.xlane.f32.xlu0 %v2525
        %v2527 = vpop.xlane.xlu0 %2526
        %v2528 = vsub.f32 %v2524, %v2527
        %v2529 = vmul.f32 %v2528, 1.442695
        %v2530 = vpow.pop %v2529
        %v2531 = vsel %vm1356, %v2530, 0.0
        %2532 = vadd.xlane.f32.xlu0 %v2531
        %v2533 = vpop.xlane.xlu0 %2532
        %v2534 = vrcp.pop %v2533
        %v2535 = vmul.f32 %v2530, %v2534
        %v2536 = vmul.f32 %v2258, %v1053
        %v2537 = vpack.c.bf16 %v2536, %v2536
        %v2538 = vpack.c.bf16 %v2535, %v2535
        %v2540 = vsel %vm1431, %v2538, 0
        %v2543 = vand.u32 %v2537, %v1437
        %2545 = vmatprep.subr.bf16.mxu0 0
        %2546 = vmatpush1.bf16.msra.mxu0 %v2543
        %2547 = vmatprep.subr.bf16.mxu0 0
        %2548 = vmatpush1.bf16.msra.mxu0 0
        %2549 = vmatprep.subr.bf16.mxu0 0
        %2550 = vmatpush1.bf16.msra.mxu0 0
        %2551 = vmatprep.subr.bf16.mxu0 0
        %2552 = vmatpush1.bf16.msra.mxu0 0
        %2553 = vmatprep.subr.bf16.mxu0 0
        %2554 = vmatpush1.bf16.msra.mxu0 0
        %2555 = vmatprep.subr.bf16.mxu0 0
        %2556 = vmatpush1.bf16.msra.mxu0 0
        %2557 = vmatprep.subr.bf16.mxu0 0
        %2558 = vmatpush1.bf16.msra.mxu0 0
        %2559 = vmatprep.subr.bf16.mxu0 0
        %2560 = vmatpush1.bf16.msra.mxu0 0
        %2561 = vmatprep.subr.bf16.mxu0 0
        %2562 = vmatpush1.bf16.msra.mxu0 0
        %2563 = vmatprep.subr.bf16.mxu0 0
        %2564 = vmatpush1.bf16.msra.mxu0 0
        %2565 = vmatprep.subr.bf16.mxu0 0
        %2566 = vmatpush1.bf16.msra.mxu0 0
        %2567 = vmatprep.subr.bf16.mxu0 0
        %2568 = vmatpush1.bf16.msra.mxu0 0
        %2569 = vmatprep.subr.bf16.mxu0 0
        %2570 = vmatpush1.bf16.msra.mxu0 0
        %2571 = vmatprep.subr.bf16.mxu0 0
        %2572 = vmatpush1.bf16.msra.mxu0 0
        %2573 = vmatprep.subr.bf16.mxu0 0
        %2574 = vmatpush1.bf16.msra.mxu0 0
        %2575 = vmatprep.subr.bf16.mxu0 0
        %2576 = vmatpush1.bf16.msra.mxu0 0
        %2577 = vmatprep.mubr.bf16.mxu0 0
        %2578 = vmatmul.mubr.bf16.gmra.mrb[0].mxu0 %v2540
        %v2579 = vpop.f32.mrb[0].mxu0
        %v2580 = vadd.f32 0.0, %v2579
        %v2581 = vpop.f32.mrb[0].mxu0
        %v2582 = vpop.f32.mrb[0].mxu0
        %v2583 = vpop.f32.mrb[0].mxu0
        %2584 = vdwg.mxu0
        %v2585 = vadd.f32 %v2474, %v2580
        %v2586 = vmul.f32 %v2135, %v1058
        %v2587 = vpack.c.bf16 %v2586, %v2586
        %v2589 = vsel %vm1108, %v2587, 0
        %2591 = vmatprep.subr.bf16.mxu0 0
        %2592 = vmatpush1.bf16.xpose.msra.mxu0 %v2270
        %2593 = vmatprep.subr.bf16.mxu0 0
        %2594 = vmatpush1.bf16.xpose.msra.mxu0 0
        %2595 = vmatprep.subr.bf16.mxu0 0
        %2596 = vmatpush1.bf16.xpose.msra.mxu0 0
        %2597 = vmatprep.subr.bf16.mxu0 0
        %2598 = vmatpush1.bf16.xpose.msra.mxu0 0
        %2599 = vmatprep.subr.bf16.mxu0 0
        %2600 = vmatpush1.bf16.xpose.msra.mxu0 0
        %2601 = vmatprep.subr.bf16.mxu0 0
        %2602 = vmatpush1.bf16.xpose.msra.mxu0 0
        %2603 = vmatprep.subr.bf16.mxu0 0
        %2604 = vmatpush1.bf16.xpose.msra.mxu0 0
        %2605 = vmatprep.subr.bf16.mxu0 0
        %2606 = vmatpush1.bf16.xpose.msra.mxu0 0
        %2607 = vmatprep.subr.bf16.mxu0 0
        %2608 = vmatpush1.bf16.xpose.msra.mxu0 0
        %2609 = vmatprep.subr.bf16.mxu0 0
        %2610 = vmatpush1.bf16.xpose.msra.mxu0 0
        %2611 = vmatprep.subr.bf16.mxu0 0
        %2612 = vmatpush1.bf16.xpose.msra.mxu0 0
        %2613 = vmatprep.subr.bf16.mxu0 0
        %2614 = vmatpush1.bf16.xpose.msra.mxu0 0
        %2615 = vmatprep.subr.bf16.mxu0 0
        %2616 = vmatpush1.bf16.xpose.msra.mxu0 0
        %2617 = vmatprep.subr.bf16.mxu0 0
        %2618 = vmatpush1.bf16.xpose.msra.mxu0 0
        %2619 = vmatprep.subr.bf16.mxu0 0
        %2620 = vmatpush1.bf16.xpose.msra.mxu0 0
        %2621 = vmatprep.subr.bf16.mxu0 0
        %2622 = vmatpush1.bf16.xpose.msra.mxu0 0
        %2623 = vmatprep.mubr.bf16.mxu0 0
        %2624 = vmatmul.mubr.bf16.gmra.mrb[0].mxu0 %v2589
        %v2625 = vpop.f32.mrb[0].mxu0
        %v2626 = vadd.f32 0.0, %v2625
        %v2627 = vpop.f32.mrb[0].mxu0
        %v2628 = vpop.f32.mrb[0].mxu0
        %v2629 = vpop.f32.mrb[0].mxu0
        %2630 = vdwg.mxu0
        %v2631 = vmul.f32 %v2626, 0.4472136
        %v2632 = vsel %vm1356, %v2631, -inf
        %2633 = vmax.xlane.f32.xlu0 %v2632
        %v2634 = vpop.xlane.xlu0 %2633
        %v2635 = vsub.f32 %v2631, %v2634
        %v2636 = vmul.f32 %v2635, 1.442695
        %v2637 = vpow.pop %v2636
        %v2638 = vsel %vm1356, %v2637, 0.0
        %2639 = vadd.xlane.f32.xlu0 %v2638
        %v2640 = vpop.xlane.xlu0 %2639
        %v2641 = vrcp.pop %v2640
        %v2642 = vmul.f32 %v2637, %v2641
        %v2643 = vmul.f32 %v2258, %v1058
        %v2644 = vpack.c.bf16 %v2643, %v2643
        %v2645 = vpack.c.bf16 %v2642, %v2642
        %v2647 = vsel %vm1431, %v2645, 0
        %v2650 = vand.u32 %v2644, %v1437
        %2652 = vmatprep.subr.bf16.mxu0 0
        %2653 = vmatpush1.bf16.msra.mxu0 %v2650
        %2654 = vmatprep.subr.bf16.mxu0 0
        %2655 = vmatpush1.bf16.msra.mxu0 0
        %2656 = vmatprep.subr.bf16.mxu0 0
        %2657 = vmatpush1.bf16.msra.mxu0 0
        %2658 = vmatprep.subr.bf16.mxu0 0
        %2659 = vmatpush1.bf16.msra.mxu0 0
        %2660 = vmatprep.subr.bf16.mxu0 0
        %2661 = vmatpush1.bf16.msra.mxu0 0
        %2662 = vmatprep.subr.bf16.mxu0 0
        %2663 = vmatpush1.bf16.msra.mxu0 0
        %2664 = vmatprep.subr.bf16.mxu0 0
        %2665 = vmatpush1.bf16.msra.mxu0 0
        %2666 = vmatprep.subr.bf16.mxu0 0
        %2667 = vmatpush1.bf16.msra.mxu0 0
        %2668 = vmatprep.subr.bf16.mxu0 0
        %2669 = vmatpush1.bf16.msra.mxu0 0
        %2670 = vmatprep.subr.bf16.mxu0 0
        %2671 = vmatpush1.bf16.msra.mxu0 0
        %2672 = vmatprep.subr.bf16.mxu0 0
        %2673 = vmatpush1.bf16.msra.mxu0 0
        %2674 = vmatprep.subr.bf16.mxu0 0
        %2675 = vmatpush1.bf16.msra.mxu0 0
        %2676 = vmatprep.subr.bf16.mxu0 0
        %2677 = vmatpush1.bf16.msra.mxu0 0
        %2678 = vmatprep.subr.bf16.mxu0 0
        %2679 = vmatpush1.bf16.msra.mxu0 0
        %2680 = vmatprep.subr.bf16.mxu0 0
        %2681 = vmatpush1.bf16.msra.mxu0 0
        %2682 = vmatprep.subr.bf16.mxu0 0
        %2683 = vmatpush1.bf16.msra.mxu0 0
        %2684 = vmatprep.mubr.bf16.mxu0 0
        %2685 = vmatmul.mubr.bf16.gmra.mrb[0].mxu0 %v2647
        %v2686 = vpop.f32.mrb[0].mxu0
        %v2687 = vadd.f32 0.0, %v2686
        %v2688 = vpop.f32.mrb[0].mxu0
        %v2689 = vpop.f32.mrb[0].mxu0
        %v2690 = vpop.f32.mrb[0].mxu0
        %2691 = vdwg.mxu0
        %v2692 = vadd.f32 %v2585, %v2687
        %v2693 = vpack.c.bf16 %v2692, %v2692
        %v2694 = vlaneseq
        %v2695 = vshrl.u32 %v2694, 7
        %v2696 = vsub.s32 6, %v2695
        %v2697 = vrot.slane %v2019, %v2696
        %v2701 = vunpack.c.l.b16 %v2031
        %v2702 = vunpack.c.l.b16 %v2032
        %v2703 = vunpack.c.l.b16 %v2033
        %v2704 = vpack.c.b16 %v2702, %v2701
        %v2705 = vpack.c.b16 %v2703, %v2703
        %v2708 = vsel %vm1108, %v2693, 0
        %v2711 = vsel %vm1112, %v2705, 0
        %2713 = vmatprep.subr.bf16.mxu0 0
        %2714 = vmatpush1.bf16.msra.mxu0 %v2704
        %2715 = vmatprep.subr.bf16.mxu0 0
        %2716 = vmatpush1.bf16.msra.mxu0 %v2711
        %2717 = vmatprep.subr.bf16.mxu0 0
        %2718 = vmatpush1.bf16.msra.mxu0 0
        %2719 = vmatprep.subr.bf16.mxu0 0
        %2720 = vmatpush1.bf16.msra.mxu0 0
        %2721 = vmatprep.subr.bf16.mxu0 0
        %2722 = vmatpush1.bf16.msra.mxu0 0
        %2723 = vmatprep.subr.bf16.mxu0 0
        %2724 = vmatpush1.bf16.msra.mxu0 0
        %2725 = vmatprep.subr.bf16.mxu0 0
        %2726 = vmatpush1.bf16.msra.mxu0 0
        %2727 = vmatprep.subr.bf16.mxu0 0
        %2728 = vmatpush1.bf16.msra.mxu0 0
        %2729 = vmatprep.subr.bf16.mxu0 0
        %2730 = vmatpush1.bf16.msra.mxu0 0
        %2731 = vmatprep.subr.bf16.mxu0 0
        %2732 = vmatpush1.bf16.msra.mxu0 0
        %2733 = vmatprep.subr.bf16.mxu0 0
        %2734 = vmatpush1.bf16.msra.mxu0 0
        %2735 = vmatprep.subr.bf16.mxu0 0
        %2736 = vmatpush1.bf16.msra.mxu0 0
        %2737 = vmatprep.subr.bf16.mxu0 0
        %2738 = vmatpush1.bf16.msra.mxu0 0
        %2739 = vmatprep.subr.bf16.mxu0 0
        %2740 = vmatpush1.bf16.msra.mxu0 0
        %2741 = vmatprep.subr.bf16.mxu0 0
        %2742 = vmatpush1.bf16.msra.mxu0 0
        %2743 = vmatprep.subr.bf16.mxu0 0
        %2744 = vmatpush1.bf16.msra.mxu0 0
        %2745 = vmatprep.mubr.bf16.mxu0 0
        %2746 = vmatmul.mubr.bf16.gmra.mrb[0].mxu0 %v2708
        %v2747 = vpop.f32.mrb[0].mxu0
        %v2748 = vadd.f32 %v2697, %v2747
        %v2749 = vpop.f32.mrb[0].mxu0
        %v2750 = vpop.f32.mrb[0].mxu0
        %v2751 = vpop.f32.mrb[0].mxu0
        %2752 = vdwg.mxu0
        %v2753 = vlaneseq
        %v2754 = vshrl.u32 %v2753, 7
        %v2755 = vsub.s32 7, %v2754
        %v2756 = vrot.slane %v2019, %v2755
        %v2757 = vmul.f32 %v2756, %v2748
        %v2758 = vadd.f32 %v2017, %v2757
        %v2759 = vsel %vm1073, %v2758, 0.0
        %2760 = vadd.xlane.f32.xlu0 %v2759
        %v2761 = vpop.xlane.xlu0 %2760
        %v2762 = vmul.f32 %v2761, %v1077
        %v2763 = vsub.f32 %v2758, %v2762
        %v2764 = vmul.f32 %v2763, %v2763
        %v2765 = vsel %vm1073, %v2764, 0.0
        %2766 = vadd.xlane.f32.xlu0 %v2765
        %v2767 = vpop.xlane.xlu0 %2766
        %v2768 = vmul.f32 %v2767, %v1077
        %v2769 = vadd.f32 %v2768, 1e-05
        %v2770 = vrsqrt.pop %v2769
        %v2771 = vmul.f32 %v2763, %v2770
        %v2772 = vlaneseq
        %v2773 = vshrl.u32 %v2772, 7
        %v2774 = vsub.s32 0, %v2773
        %v2775 = vrot.slane %v2020, %v2774
        %v2776 = vmul.f32 %v2771, %v2775
        %v2777 = vlaneseq
        %v2778 = vshrl.u32 %v2777, 7
        %v2779 = vsub.s32 1, %v2778
        %v2780 = vrot.slane %v2020, %v2779
        %v2781 = vadd.f32 %v2776, %v2780
        %v2782 = vpack.c.bf16 %v2781, %v2781
        %s2783 = scalar_lea.vmem %s11, 12
        %v2784 = vld [vmem:[%s2783] sm:$0xf]
        %v2785 = vld [vmem:[%s2783 + $0x4] sm:$0xf]
        %v2786 = vld [vmem:[%s2783 + $0x8] sm:$0x3]
        %s2787 = scalar_lea.vmem %s9, 1
        %v2788 = vld [vmem:[%s2787] sm:$0x1]
        %v2790 = vlaneseq
        %v2791 = vshrl.u32 %v2790, 7
        %v2792 = vsub.s32 0, %v2791
        %v2793 = vrot.slane %v2788, %v2792
        %v2798 = vunpack.c.l.b16 %v2784
        %v2799 = vunpack.c.l.b16 %v2785
        %v2800 = vunpack.c.l.b16 %v2786
        %v2801 = vpack.c.b16 %v2799, %v2798
        %v2802 = vpack.c.b16 %v2800, %v2800
        %v2805 = vsel %vm1108, %v2782, 0
        %v2808 = vsel %vm1112, %v2802, 0
        %2810 = vmatprep.subr.bf16.mxu0 0
        %2811 = vmatpush1.bf16.msra.mxu0 %v2801
        %2812 = vmatprep.subr.bf16.mxu0 0
        %2813 = vmatpush1.bf16.msra.mxu0 %v2808
        %2814 = vmatprep.subr.bf16.mxu0 0
        %2815 = vmatpush1.bf16.msra.mxu0 0
        %2816 = vmatprep.subr.bf16.mxu0 0
        %2817 = vmatpush1.bf16.msra.mxu0 0
        %2818 = vmatprep.subr.bf16.mxu0 0
        %2819 = vmatpush1.bf16.msra.mxu0 0
        %2820 = vmatprep.subr.bf16.mxu0 0
        %2821 = vmatpush1.bf16.msra.mxu0 0
        %2822 = vmatprep.subr.bf16.mxu0 0
        %2823 = vmatpush1.bf16.msra.mxu0 0
        %2824 = vmatprep.subr.bf16.mxu0 0
        %2825 = vmatpush1.bf16.msra.mxu0 0
        %2826 = vmatprep.subr.bf16.mxu0 0
        %2827 = vmatpush1.bf16.msra.mxu0 0
        %2828 = vmatprep.subr.bf16.mxu0 0
        %2829 = vmatpush1.bf16.msra.mxu0 0
        %2830 = vmatprep.subr.bf16.mxu0 0
        %2831 = vmatpush1.bf16.msra.mxu0 0
        %2832 = vmatprep.subr.bf16.mxu0 0
        %2833 = vmatpush1.bf16.msra.mxu0 0
        %2834 = vmatprep.subr.bf16.mxu0 0
        %2835 = vmatpush1.bf16.msra.mxu0 0
        %2836 = vmatprep.subr.bf16.mxu0 0
        %2837 = vmatpush1.bf16.msra.mxu0 0
        %2838 = vmatprep.subr.bf16.mxu0 0
        %2839 = vmatpush1.bf16.msra.mxu0 0
        %2840 = vmatprep.subr.bf16.mxu0 0
        %2841 = vmatpush1.bf16.msra.mxu0 0
        %2842 = vmatprep.mubr.bf16.mxu0 0
        %2843 = vmatmul.mubr.bf16.gmra.mrb[0].mxu0 %v2805
        %v2844 = vpop.f32.mrb[0].mxu0
        %v2845 = vadd.f32 %v2793, %v2844
        %v2846 = vpop.f32.mrb[0].mxu0
        %v2847 = vpop.f32.mrb[0].mxu0
        %v2848 = vpop.f32.mrb[0].mxu0
        %2849 = vdwg.mxu0
        %v2850 = vmul.f32 %v2845, 0.5
        %v2851 = vmul.f32 %v2845, 0.70710677
        %vm2852 = vcmp.ge.f32.partialorder %v2851, 0.0
        %v2853 = vsel %vm2852, 1.0, -1.0
        %v2854 = vand.u32 2147483647, %v2851
        %v2855 = vmul.f32 %v2854, 0.3275911
        %v2856 = vadd.f32 %v2855, 1.0
        %v2857 = vrcp.pop %v2856
        %v2858 = vmul.f32 1.0, %v2857
        %v2859 = vmul.f32 %v2858, 1.0614054
        %v2860 = vadd.f32 %v2859, -1.4531521
        %v2861 = vmul.f32 %v2860, %v2858
        %v2862 = vadd.f32 %v2861, 1.4214138
        %v2863 = vmul.f32 %v2862, %v2858
        %v2864 = vadd.f32 %v2863, -0.28449672
        %v2865 = vmul.f32 %v2864, %v2858
        %v2866 = vadd.f32 %v2865, 0.2548296
        %v2867 = vmul.f32 %v2866, %v2858
        %v2868 = vsub.f32 0.0, %v2854
        %v2869 = vmul.f32 %v2868, %v2854
        %v2870 = vmul.f32 %v2869, 1.442695
        %v2871 = vpow.pop %v2870
        %v2872 = vmul.f32 %v2867, %v2871
        %v2873 = vsub.f32 1.0, %v2872
        %v2874 = vmul.f32 %v2853, %v2873
        %v2875 = vadd.f32 %v2874, 1.0
        %v2876 = vmul.f32 %v2850, %v2875
        %v2877 = vpack.c.bf16 %v2876, %v2876
        %s2878 = scalar_lea.vmem %s12, 40
        %v2879 = vld [vmem:[%s2878] sm:$0xf]
        %v2880 = vld [vmem:[%s2878 + $0x4] sm:$0xf]
        %v2881 = vld [vmem:[%s2878 + $0x8] sm:$0xf]
        %v2882 = vld [vmem:[%s2878 + $0xc] sm:$0xf]
        %v2883 = vld [vmem:[%s2878 + $0x10] sm:$0xf]
        %v2884 = vld [vmem:[%s2878 + $0x14] sm:$0xf]
        %v2885 = vld [vmem:[%s2878 + $0x18] sm:$0xf]
        %v2886 = vld [vmem:[%s2878 + $0x1c] sm:$0xf]
        %v2887 = vld [vmem:[%s2878 + $0x20] sm:$0xf]
        %v2888 = vld [vmem:[%s2878 + $0x24] sm:$0xf]
        %v2889 = vlaneseq
        %v2890 = vshrl.u32 %v2889, 7
        %v2891 = vsub.s32 2, %v2890
        %v2892 = vrot.slane %v2020, %v2891
        %v2903 = vunpack.c.l.b16 %v2879
        %v2904 = vunpack.c.l.b16 %v2880
        %v2905 = vunpack.c.l.b16 %v2881
        %v2906 = vunpack.c.l.b16 %v2882
        %v2907 = vunpack.c.l.b16 %v2883
        %v2908 = vunpack.c.l.b16 %v2884
        %v2909 = vunpack.c.l.b16 %v2885
        %v2910 = vunpack.c.l.b16 %v2886
        %v2911 = vunpack.c.l.b16 %v2887
        %v2912 = vunpack.c.l.b16 %v2888
        %v2913 = vpack.c.b16 %v2904, %v2903
        %v2914 = vpack.c.b16 %v2906, %v2905
        %v2915 = vpack.c.b16 %v2908, %v2907
        %v2916 = vpack.c.b16 %v2910, %v2909
        %v2917 = vpack.c.b16 %v2912, %v2911
        %v2924 = vsel %vm1968, %v2877, 0
        %2926 = vmatprep.subr.bf16.mxu0 0
        %2927 = vmatpush1.bf16.msra.mxu0 %v2913
        %2928 = vmatprep.subr.bf16.mxu0 0
        %2929 = vmatpush1.bf16.msra.mxu0 %v2914
        %2930 = vmatprep.subr.bf16.mxu0 0
        %2931 = vmatpush1.bf16.msra.mxu0 %v2915
        %2932 = vmatprep.subr.bf16.mxu0 0
        %2933 = vmatpush1.bf16.msra.mxu0 %v2916
        %2934 = vmatprep.subr.bf16.mxu0 0
        %2935 = vmatpush1.bf16.msra.mxu0 %v2917
        %2936 = vmatprep.subr.bf16.mxu0 0
        %2937 = vmatpush1.bf16.msra.mxu0 0
        %2938 = vmatprep.subr.bf16.mxu0 0
        %2939 = vmatpush1.bf16.msra.mxu0 0
        %2940 = vmatprep.subr.bf16.mxu0 0
        %2941 = vmatpush1.bf16.msra.mxu0 0
        %2942 = vmatprep.subr.bf16.mxu0 0
        %2943 = vmatpush1.bf16.msra.mxu0 0
        %2944 = vmatprep.subr.bf16.mxu0 0
        %2945 = vmatpush1.bf16.msra.mxu0 0
        %2946 = vmatprep.subr.bf16.mxu0 0
        %2947 = vmatpush1.bf16.msra.mxu0 0
        %2948 = vmatprep.subr.bf16.mxu0 0
        %2949 = vmatpush1.bf16.msra.mxu0 0
        %2950 = vmatprep.subr.bf16.mxu0 0
        %2951 = vmatpush1.bf16.msra.mxu0 0
        %2952 = vmatprep.subr.bf16.mxu0 0
        %2953 = vmatpush1.bf16.msra.mxu0 0
        %2954 = vmatprep.subr.bf16.mxu0 0
        %2955 = vmatpush1.bf16.msra.mxu0 0
        %2956 = vmatprep.subr.bf16.mxu0 0
        %2957 = vmatpush1.bf16.msra.mxu0 0
        %2958 = vmatprep.mubr.bf16.mxu0 0
        %2959 = vmatmul.mubr.bf16.gmra.mrb[0].mxu0 %v2924
        %v2960 = vpop.f32.mrb[0].mxu0
        %v2961 = vadd.f32 %v2892, %v2960
        %v2962 = vpop.f32.mrb[0].mxu0
        %v2963 = vpop.f32.mrb[0].mxu0
        %v2964 = vpop.f32.mrb[0].mxu0
        %2965 = vdwg.mxu0
        %v2966 = vlaneseq
        %v2967 = vshrl.u32 %v2966, 7
        %v2968 = vsub.s32 3, %v2967
        %v2969 = vrot.slane %v2020, %v2968
        %v2970 = vmul.f32 %v2969, %v2961
        %v2971 = vadd.f32 %v2758, %v2970
        %s2972 = scalar_lea.vmem %s8, 32
        %v2973 = vld [vmem:[%s2972] sm:$0xff]
        %v2974 = vld [vmem:[%s2972 + $0x8] sm:$0xf]
        %s2975 = scalar_lea.vmem %s10, 96
        %v2976 = vld [vmem:[%s2975] sm:$0xf]
        %v2977 = vld [vmem:[%s2975 + $0x4] sm:$0xf]
        %v2978 = vld [vmem:[%s2975 + $0x8] sm:$0x3]
        %v2979 = vld [vmem:[%s2975 + $0xc] sm:$0xf]
        %v2980 = vld [vmem:[%s2975 + $0x10] sm:$0xf]
        %v2981 = vld [vmem:[%s2975 + $0x14] sm:$0x3]
        %v2982 = vld [vmem:[%s2975 + $0x18] sm:$0xf]
        %v2983 = vld [vmem:[%s2975 + $0x1c] sm:$0xf]
        %v2984 = vld [vmem:[%s2975 + $0x20] sm:$0x3]
        %v2985 = vld [vmem:[%s2975 + $0x24] sm:$0xf]
        %v2986 = vld [vmem:[%s2975 + $0x28] sm:$0xf]
        %v2987 = vld [vmem:[%s2975 + $0x2c] sm:$0x3]
        %v2988 = vsel %vm1073, %v2971, 0.0
        %2989 = vadd.xlane.f32.xlu0 %v2988
        %v2990 = vpop.xlane.xlu0 %2989
        %v2991 = vmul.f32 %v2990, %v1077
        %v2992 = vsub.f32 %v2971, %v2991
        %v2993 = vmul.f32 %v2992, %v2992
        %v2994 = vsel %vm1073, %v2993, 0.0
        %2995 = vadd.xlane.f32.xlu0 %v2994
        %v2996 = vpop.xlane.xlu0 %2995
        %v2997 = vmul.f32 %v2996, %v1077
        %v2998 = vadd.f32 %v2997, 1e-05
        %v2999 = vrsqrt.pop %v2998
        %v3000 = vmul.f32 %v2992, %v2999
        %v3001 = vlaneseq
        %v3002 = vshrl.u32 %v3001, 7
        %v3003 = vsub.s32 0, %v3002
        %v3004 = vrot.slane %v2973, %v3003
        %v3005 = vmul.f32 %v3000, %v3004
        %v3006 = vlaneseq
        %v3007 = vshrl.u32 %v3006, 7
        %v3008 = vsub.s32 1, %v3007
        %v3009 = vrot.slane %v2973, %v3008
        %v3010 = vadd.f32 %v3005, %v3009
        %v3011 = vpack.c.bf16 %v3010, %v3010
        %v3015 = vunpack.c.l.b16 %v2976
        %v3016 = vunpack.c.l.b16 %v2977
        %v3017 = vunpack.c.l.b16 %v2978
        %v3018 = vpack.c.b16 %v3016, %v3015
        %v3019 = vpack.c.b16 %v3017, %v3017
        %v3022 = vsel %vm1108, %v3011, 0
        %v3025 = vsel %vm1112, %v3019, 0
        %3027 = vmatprep.subr.bf16.mxu0 0
        %3028 = vmatpush1.bf16.msra.mxu0 %v3018
        %3029 = vmatprep.subr.bf16.mxu0 0
        %3030 = vmatpush1.bf16.msra.mxu0 %v3025
        %3031 = vmatprep.subr.bf16.mxu0 0
        %3032 = vmatpush1.bf16.msra.mxu0 0
        %3033 = vmatprep.subr.bf16.mxu0 0
        %3034 = vmatpush1.bf16.msra.mxu0 0
        %3035 = vmatprep.subr.bf16.mxu0 0
        %3036 = vmatpush1.bf16.msra.mxu0 0
        %3037 = vmatprep.subr.bf16.mxu0 0
        %3038 = vmatpush1.bf16.msra.mxu0 0
        %3039 = vmatprep.subr.bf16.mxu0 0
        %3040 = vmatpush1.bf16.msra.mxu0 0
        %3041 = vmatprep.subr.bf16.mxu0 0
        %3042 = vmatpush1.bf16.msra.mxu0 0
        %3043 = vmatprep.subr.bf16.mxu0 0
        %3044 = vmatpush1.bf16.msra.mxu0 0
        %3045 = vmatprep.subr.bf16.mxu0 0
        %3046 = vmatpush1.bf16.msra.mxu0 0
        %3047 = vmatprep.subr.bf16.mxu0 0
        %3048 = vmatpush1.bf16.msra.mxu0 0
        %3049 = vmatprep.subr.bf16.mxu0 0
        %3050 = vmatpush1.bf16.msra.mxu0 0
        %3051 = vmatprep.subr.bf16.mxu0 0
        %3052 = vmatpush1.bf16.msra.mxu0 0
        %3053 = vmatprep.subr.bf16.mxu0 0
        %3054 = vmatpush1.bf16.msra.mxu0 0
        %3055 = vmatprep.subr.bf16.mxu0 0
        %3056 = vmatpush1.bf16.msra.mxu0 0
        %3057 = vmatprep.subr.bf16.mxu0 0
        %3058 = vmatpush1.bf16.msra.mxu0 0
        %3059 = vmatprep.mubr.bf16.mxu0 0
        %3060 = vmatmul.mubr.bf16.gmra.mrb[0].mxu0 %v3022
        %v3061 = vpop.f32.mrb[0].mxu0
        %v3062 = vadd.f32 0.0, %v3061
        %v3063 = vpop.f32.mrb[0].mxu0
        %v3064 = vpop.f32.mrb[0].mxu0
        %v3065 = vpop.f32.mrb[0].mxu0
        %3066 = vdwg.mxu0
        %v3067 = vsel %vm1073, %v3062, 0.0
        %3068 = vadd.xlane.f32.xlu0 %v3067
        %v3069 = vpop.xlane.xlu0 %3068
        %v3070 = vmul.f32 %v3069, %v1077
        %v3071 = vsub.f32 %v3062, %v3070
        %v3072 = vmul.f32 %v3071, %v3071
        %v3073 = vsel %vm1073, %v3072, 0.0
        %3074 = vadd.xlane.f32.xlu0 %v3073
        %v3075 = vpop.xlane.xlu0 %3074
        %v3076 = vmul.f32 %v3075, %v1077
        %v3077 = vadd.f32 %v3076, 1e-05
        %v3078 = vrsqrt.pop %v3077
        %v3079 = vmul.f32 %v3071, %v3078
        %v3080 = vlaneseq
        %v3081 = vshrl.u32 %v3080, 7
        %v3082 = vsub.s32 2, %v3081
        %v3083 = vrot.slane %v2973, %v3082
        %v3084 = vmul.f32 %v3079, %v3083
        %v3085 = vlaneseq
        %v3086 = vshrl.u32 %v3085, 7
        %v3087 = vsub.s32 3, %v3086
        %v3088 = vrot.slane %v2973, %v3087
        %v3089 = vadd.f32 %v3084, %v3088
        %v3093 = vunpack.c.l.b16 %v2979
        %v3094 = vunpack.c.l.b16 %v2980
        %v3095 = vunpack.c.l.b16 %v2981
        %v3096 = vpack.c.b16 %v3094, %v3093
        %v3097 = vpack.c.b16 %v3095, %v3095
        %v3100 = vsel %vm1112, %v3097, 0
        %3102 = vmatprep.subr.bf16.mxu0 0
        %3103 = vmatpush1.bf16.msra.mxu0 %v3096
        %3104 = vmatprep.subr.bf16.mxu0 0
        %3105 = vmatpush1.bf16.msra.mxu0 %v3100
        %3106 = vmatprep.subr.bf16.mxu0 0
        %3107 = vmatpush1.bf16.msra.mxu0 0
        %3108 = vmatprep.subr.bf16.mxu0 0
        %3109 = vmatpush1.bf16.msra.mxu0 0
        %3110 = vmatprep.subr.bf16.mxu0 0
        %3111 = vmatpush1.bf16.msra.mxu0 0
        %3112 = vmatprep.subr.bf16.mxu0 0
        %3113 = vmatpush1.bf16.msra.mxu0 0
        %3114 = vmatprep.subr.bf16.mxu0 0
        %3115 = vmatpush1.bf16.msra.mxu0 0
        %3116 = vmatprep.subr.bf16.mxu0 0
        %3117 = vmatpush1.bf16.msra.mxu0 0
        %3118 = vmatprep.subr.bf16.mxu0 0
        %3119 = vmatpush1.bf16.msra.mxu0 0
        %3120 = vmatprep.subr.bf16.mxu0 0
        %3121 = vmatpush1.bf16.msra.mxu0 0
        %3122 = vmatprep.subr.bf16.mxu0 0
        %3123 = vmatpush1.bf16.msra.mxu0 0
        %3124 = vmatprep.subr.bf16.mxu0 0
        %3125 = vmatpush1.bf16.msra.mxu0 0
        %3126 = vmatprep.subr.bf16.mxu0 0
        %3127 = vmatpush1.bf16.msra.mxu0 0
        %3128 = vmatprep.subr.bf16.mxu0 0
        %3129 = vmatpush1.bf16.msra.mxu0 0
        %3130 = vmatprep.subr.bf16.mxu0 0
        %3131 = vmatpush1.bf16.msra.mxu0 0
        %3132 = vmatprep.subr.bf16.mxu0 0
        %3133 = vmatpush1.bf16.msra.mxu0 0
        %3134 = vmatprep.mubr.bf16.mxu0 0
        %3135 = vmatmul.mubr.bf16.gmra.mrb[0].mxu0 %v3022
        %v3136 = vpop.f32.mrb[0].mxu0
        %v3137 = vadd.f32 0.0, %v3136
        %v3138 = vpop.f32.mrb[0].mxu0
        %v3139 = vpop.f32.mrb[0].mxu0
        %v3140 = vpop.f32.mrb[0].mxu0
        %3141 = vdwg.mxu0
        %v3142 = vsel %vm1073, %v3137, 0.0
        %3143 = vadd.xlane.f32.xlu0 %v3142
        %v3144 = vpop.xlane.xlu0 %3143
        %v3145 = vmul.f32 %v3144, %v1077
        %v3146 = vsub.f32 %v3137, %v3145
        %v3147 = vmul.f32 %v3146, %v3146
        %v3148 = vsel %vm1073, %v3147, 0.0
        %3149 = vadd.xlane.f32.xlu0 %v3148
        %v3150 = vpop.xlane.xlu0 %3149
        %v3151 = vmul.f32 %v3150, %v1077
        %v3152 = vadd.f32 %v3151, 1e-05
        %v3153 = vrsqrt.pop %v3152
        %v3154 = vmul.f32 %v3146, %v3153
        %v3155 = vlaneseq
        %v3156 = vshrl.u32 %v3155, 7
        %v3157 = vsub.s32 4, %v3156
        %v3158 = vrot.slane %v2973, %v3157
        %v3159 = vmul.f32 %v3154, %v3158
        %v3160 = vlaneseq
        %v3161 = vshrl.u32 %v3160, 7
        %v3162 = vsub.s32 5, %v3161
        %v3163 = vrot.slane %v2973, %v3162
        %v3164 = vadd.f32 %v3159, %v3163
        %v3168 = vunpack.c.l.b16 %v2982
        %v3169 = vunpack.c.l.b16 %v2983
        %v3170 = vunpack.c.l.b16 %v2984
        %v3171 = vpack.c.b16 %v3169, %v3168
        %v3172 = vpack.c.b16 %v3170, %v3170
        %v3175 = vsel %vm1112, %v3172, 0
        %3177 = vmatprep.subr.bf16.mxu0 0
        %3178 = vmatpush1.bf16.msra.mxu0 %v3171
        %3179 = vmatprep.subr.bf16.mxu0 0
        %3180 = vmatpush1.bf16.msra.mxu0 %v3175
        %3181 = vmatprep.subr.bf16.mxu0 0
        %3182 = vmatpush1.bf16.msra.mxu0 0
        %3183 = vmatprep.subr.bf16.mxu0 0
        %3184 = vmatpush1.bf16.msra.mxu0 0
        %3185 = vmatprep.subr.bf16.mxu0 0
        %3186 = vmatpush1.bf16.msra.mxu0 0
        %3187 = vmatprep.subr.bf16.mxu0 0
        %3188 = vmatpush1.bf16.msra.mxu0 0
        %3189 = vmatprep.subr.bf16.mxu0 0
        %3190 = vmatpush1.bf16.msra.mxu0 0
        %3191 = vmatprep.subr.bf16.mxu0 0
        %3192 = vmatpush1.bf16.msra.mxu0 0
        %3193 = vmatprep.subr.bf16.mxu0 0
        %3194 = vmatpush1.bf16.msra.mxu0 0
        %3195 = vmatprep.subr.bf16.mxu0 0
        %3196 = vmatpush1.bf16.msra.mxu0 0
        %3197 = vmatprep.subr.bf16.mxu0 0
        %3198 = vmatpush1.bf16.msra.mxu0 0
        %3199 = vmatprep.subr.bf16.mxu0 0
        %3200 = vmatpush1.bf16.msra.mxu0 0
        %3201 = vmatprep.subr.bf16.mxu0 0
        %3202 = vmatpush1.bf16.msra.mxu0 0
        %3203 = vmatprep.subr.bf16.mxu0 0
        %3204 = vmatpush1.bf16.msra.mxu0 0
        %3205 = vmatprep.subr.bf16.mxu0 0
        %3206 = vmatpush1.bf16.msra.mxu0 0
        %3207 = vmatprep.subr.bf16.mxu0 0
        %3208 = vmatpush1.bf16.msra.mxu0 0
        %3209 = vmatprep.mubr.bf16.mxu0 0
        %3210 = vmatmul.mubr.bf16.gmra.mrb[0].mxu0 %v3022
        %v3211 = vpop.f32.mrb[0].mxu0
        %v3212 = vadd.f32 0.0, %v3211
        %v3213 = vpop.f32.mrb[0].mxu0
        %v3214 = vpop.f32.mrb[0].mxu0
        %v3215 = vpop.f32.mrb[0].mxu0
        %3216 = vdwg.mxu0
        %v3217 = vpack.c.bf16 %v3164, %v3164
        %v3218 = vmul.f32 %v3089, %v1043
        %v3219 = vpack.c.bf16 %v3218, %v3218
        %v3221 = vsel %vm1108, %v3219, 0
        %v3224 = vsel %vm1108, %v3217, 0
        %3226 = vmatprep.subr.bf16.mxu0 0
        %3227 = vmatpush1.bf16.xpose.msra.mxu0 %v3224
        %3228 = vmatprep.subr.bf16.mxu0 0
        %3229 = vmatpush1.bf16.xpose.msra.mxu0 0
        %3230 = vmatprep.subr.bf16.mxu0 0
        %3231 = vmatpush1.bf16.xpose.msra.mxu0 0
        %3232 = vmatprep.subr.bf16.mxu0 0
        %3233 = vmatpush1.bf16.xpose.msra.mxu0 0
        %3234 = vmatprep.subr.bf16.mxu0 0
        %3235 = vmatpush1.bf16.xpose.msra.mxu0 0
        %3236 = vmatprep.subr.bf16.mxu0 0
        %3237 = vmatpush1.bf16.xpose.msra.mxu0 0
        %3238 = vmatprep.subr.bf16.mxu0 0
        %3239 = vmatpush1.bf16.xpose.msra.mxu0 0
        %3240 = vmatprep.subr.bf16.mxu0 0
        %3241 = vmatpush1.bf16.xpose.msra.mxu0 0
        %3242 = vmatprep.subr.bf16.mxu0 0
        %3243 = vmatpush1.bf16.xpose.msra.mxu0 0
        %3244 = vmatprep.subr.bf16.mxu0 0
        %3245 = vmatpush1.bf16.xpose.msra.mxu0 0
        %3246 = vmatprep.subr.bf16.mxu0 0
        %3247 = vmatpush1.bf16.xpose.msra.mxu0 0
        %3248 = vmatprep.subr.bf16.mxu0 0
        %3249 = vmatpush1.bf16.xpose.msra.mxu0 0
        %3250 = vmatprep.subr.bf16.mxu0 0
        %3251 = vmatpush1.bf16.xpose.msra.mxu0 0
        %3252 = vmatprep.subr.bf16.mxu0 0
        %3253 = vmatpush1.bf16.xpose.msra.mxu0 0
        %3254 = vmatprep.subr.bf16.mxu0 0
        %3255 = vmatpush1.bf16.xpose.msra.mxu0 0
        %3256 = vmatprep.subr.bf16.mxu0 0
        %3257 = vmatpush1.bf16.xpose.msra.mxu0 0
        %3258 = vmatprep.mubr.bf16.mxu0 0
        %3259 = vmatmul.mubr.bf16.gmra.mrb[0].mxu0 %v3221
        %v3260 = vpop.f32.mrb[0].mxu0
        %v3261 = vadd.f32 0.0, %v3260
        %v3262 = vpop.f32.mrb[0].mxu0
        %v3263 = vpop.f32.mrb[0].mxu0
        %v3264 = vpop.f32.mrb[0].mxu0
        %3265 = vdwg.mxu0
        %v3266 = vmul.f32 %v3261, 0.4472136
        %v3267 = vsel %vm1356, %v3266, -inf
        %3268 = vmax.xlane.f32.xlu0 %v3267
        %v3269 = vpop.xlane.xlu0 %3268
        %v3270 = vsub.f32 %v3266, %v3269
        %v3271 = vmul.f32 %v3270, 1.442695
        %v3272 = vpow.pop %v3271
        %v3273 = vsel %vm1356, %v3272, 0.0
        %3274 = vadd.xlane.f32.xlu0 %v3273
        %v3275 = vpop.xlane.xlu0 %3274
        %v3276 = vrcp.pop %v3275
        %v3277 = vmul.f32 %v3272, %v3276
        %v3278 = vmul.f32 %v3212, %v1043
        %v3279 = vpack.c.bf16 %v3278, %v3278
        %v3280 = vpack.c.bf16 %v3277, %v3277
        %v3281 = vmul.f32 %v3089, %v1048
        %v3282 = vpack.c.bf16 %v3281, %v3281
        %v3284 = vsel %vm1108, %v3282, 0
        %3286 = vmatprep.subr.bf16.mxu0 0
        %3287 = vmatpush1.bf16.xpose.msra.mxu0 %v3224
        %3288 = vmatprep.subr.bf16.mxu0 0
        %3289 = vmatpush1.bf16.xpose.msra.mxu0 0
        %3290 = vmatprep.subr.bf16.mxu0 0
        %3291 = vmatpush1.bf16.xpose.msra.mxu0 0
        %3292 = vmatprep.subr.bf16.mxu0 0
        %3293 = vmatpush1.bf16.xpose.msra.mxu0 0
        %3294 = vmatprep.subr.bf16.mxu0 0
        %3295 = vmatpush1.bf16.xpose.msra.mxu0 0
        %3296 = vmatprep.subr.bf16.mxu0 0
        %3297 = vmatpush1.bf16.xpose.msra.mxu0 0
        %3298 = vmatprep.subr.bf16.mxu0 0
        %3299 = vmatpush1.bf16.xpose.msra.mxu0 0
        %3300 = vmatprep.subr.bf16.mxu0 0
        %3301 = vmatpush1.bf16.xpose.msra.mxu0 0
        %3302 = vmatprep.subr.bf16.mxu0 0
        %3303 = vmatpush1.bf16.xpose.msra.mxu0 0
        %3304 = vmatprep.subr.bf16.mxu0 0
        %3305 = vmatpush1.bf16.xpose.msra.mxu0 0
        %3306 = vmatprep.subr.bf16.mxu0 0
        %3307 = vmatpush1.bf16.xpose.msra.mxu0 0
        %3308 = vmatprep.subr.bf16.mxu0 0
        %3309 = vmatpush1.bf16.xpose.msra.mxu0 0
        %3310 = vmatprep.subr.bf16.mxu0 0
        %3311 = vmatpush1.bf16.xpose.msra.mxu0 0
        %3312 = vmatprep.subr.bf16.mxu0 0
        %3313 = vmatpush1.bf16.xpose.msra.mxu0 0
        %3314 = vmatprep.subr.bf16.mxu0 0
        %3315 = vmatpush1.bf16.xpose.msra.mxu0 0
        %3316 = vmatprep.subr.bf16.mxu0 0
        %3317 = vmatpush1.bf16.xpose.msra.mxu0 0
        %3318 = vmatprep.mubr.bf16.mxu0 0
        %3319 = vmatmul.mubr.bf16.gmra.mrb[0].mxu0 %v3284
        %v3320 = vpop.f32.mrb[0].mxu0
        %v3321 = vadd.f32 0.0, %v3320
        %v3322 = vpop.f32.mrb[0].mxu0
        %v3323 = vpop.f32.mrb[0].mxu0
        %v3324 = vpop.f32.mrb[0].mxu0
        %3325 = vdwg.mxu0
        %v3326 = vmul.f32 %v3321, 0.4472136
        %v3327 = vsel %vm1356, %v3326, -inf
        %3328 = vmax.xlane.f32.xlu0 %v3327
        %v3329 = vpop.xlane.xlu0 %3328
        %v3330 = vsub.f32 %v3326, %v3329
        %v3331 = vmul.f32 %v3330, 1.442695
        %v3332 = vpow.pop %v3331
        %v3333 = vsel %vm1356, %v3332, 0.0
        %3334 = vadd.xlane.f32.xlu0 %v3333
        %v3335 = vpop.xlane.xlu0 %3334
        %v3336 = vrcp.pop %v3335
        %v3337 = vmul.f32 %v3332, %v3336
        %v3338 = vmul.f32 %v3212, %v1048
        %v3339 = vpack.c.bf16 %v3338, %v3338
        %v3340 = vpack.c.bf16 %v3337, %v3337
        %v3342 = vsel %vm1431, %v3340, 0
        %v3345 = vand.u32 %v3339, %v1437
        %3347 = vmatprep.subr.bf16.mxu0 0
        %3348 = vmatpush1.bf16.msra.mxu0 %v3345
        %3349 = vmatprep.subr.bf16.mxu0 0
        %3350 = vmatpush1.bf16.msra.mxu0 0
        %3351 = vmatprep.subr.bf16.mxu0 0
        %3352 = vmatpush1.bf16.msra.mxu0 0
        %3353 = vmatprep.subr.bf16.mxu0 0
        %3354 = vmatpush1.bf16.msra.mxu0 0
        %3355 = vmatprep.subr.bf16.mxu0 0
        %3356 = vmatpush1.bf16.msra.mxu0 0
        %3357 = vmatprep.subr.bf16.mxu0 0
        %3358 = vmatpush1.bf16.msra.mxu0 0
        %3359 = vmatprep.subr.bf16.mxu0 0
        %3360 = vmatpush1.bf16.msra.mxu0 0
        %3361 = vmatprep.subr.bf16.mxu0 0
        %3362 = vmatpush1.bf16.msra.mxu0 0
        %3363 = vmatprep.subr.bf16.mxu0 0
        %3364 = vmatpush1.bf16.msra.mxu0 0
        %3365 = vmatprep.subr.bf16.mxu0 0
        %3366 = vmatpush1.bf16.msra.mxu0 0
        %3367 = vmatprep.subr.bf16.mxu0 0
        %3368 = vmatpush1.bf16.msra.mxu0 0
        %3369 = vmatprep.subr.bf16.mxu0 0
        %3370 = vmatpush1.bf16.msra.mxu0 0
        %3371 = vmatprep.subr.bf16.mxu0 0
        %3372 = vmatpush1.bf16.msra.mxu0 0
        %3373 = vmatprep.subr.bf16.mxu0 0
        %3374 = vmatpush1.bf16.msra.mxu0 0
        %3375 = vmatprep.subr.bf16.mxu0 0
        %3376 = vmatpush1.bf16.msra.mxu0 0
        %3377 = vmatprep.subr.bf16.mxu0 0
        %3378 = vmatpush1.bf16.msra.mxu0 0
        %3379 = vmatprep.mubr.bf16.mxu0 0
        %3380 = vmatmul.mubr.bf16.gmra.mrb[0].mxu0 %v3342
        %v3381 = vpop.f32.mrb[0].mxu0
        %v3382 = vadd.f32 0.0, %v3381
        %v3383 = vpop.f32.mrb[0].mxu0
        %v3384 = vpop.f32.mrb[0].mxu0
        %v3385 = vpop.f32.mrb[0].mxu0
        %3386 = vdwg.mxu0
        %v3388 = vsel %vm1431, %v3280, 0
        %v3391 = vand.u32 %v3279, %v1437
        %3393 = vmatprep.subr.bf16.mxu0 0
        %3394 = vmatpush1.bf16.msra.mxu0 %v3391
        %3395 = vmatprep.subr.bf16.mxu0 0
        %3396 = vmatpush1.bf16.msra.mxu0 0
        %3397 = vmatprep.subr.bf16.mxu0 0
        %3398 = vmatpush1.bf16.msra.mxu0 0
        %3399 = vmatprep.subr.bf16.mxu0 0
        %3400 = vmatpush1.bf16.msra.mxu0 0
        %3401 = vmatprep.subr.bf16.mxu0 0
        %3402 = vmatpush1.bf16.msra.mxu0 0
        %3403 = vmatprep.subr.bf16.mxu0 0
        %3404 = vmatpush1.bf16.msra.mxu0 0
        %3405 = vmatprep.subr.bf16.mxu0 0
        %3406 = vmatpush1.bf16.msra.mxu0 0
        %3407 = vmatprep.subr.bf16.mxu0 0
        %3408 = vmatpush1.bf16.msra.mxu0 0
        %3409 = vmatprep.subr.bf16.mxu0 0
        %3410 = vmatpush1.bf16.msra.mxu0 0
        %3411 = vmatprep.subr.bf16.mxu0 0
        %3412 = vmatpush1.bf16.msra.mxu0 0
        %3413 = vmatprep.subr.bf16.mxu0 0
        %3414 = vmatpush1.bf16.msra.mxu0 0
        %3415 = vmatprep.subr.bf16.mxu0 0
        %3416 = vmatpush1.bf16.msra.mxu0 0
        %3417 = vmatprep.subr.bf16.mxu0 0
        %3418 = vmatpush1.bf16.msra.mxu0 0
        %3419 = vmatprep.subr.bf16.mxu0 0
        %3420 = vmatpush1.bf16.msra.mxu0 0
        %3421 = vmatprep.subr.bf16.mxu0 0
        %3422 = vmatpush1.bf16.msra.mxu0 0
        %3423 = vmatprep.subr.bf16.mxu0 0
        %3424 = vmatpush1.bf16.msra.mxu0 0
        %3425 = vmatprep.mubr.bf16.mxu0 0
        %3426 = vmatmul.mubr.bf16.gmra.mrb[0].mxu0 %v3388
        %v3427 = vpop.f32.mrb[0].mxu0
        %v3428 = vadd.f32 %v3382, %v3427
        %v3429 = vpop.f32.mrb[0].mxu0
        %v3430 = vpop.f32.mrb[0].mxu0
        %v3431 = vpop.f32.mrb[0].mxu0
        %3432 = vdwg.mxu0
        %v3433 = vmul.f32 %v3089, %v1053
        %v3434 = vpack.c.bf16 %v3433, %v3433
        %v3436 = vsel %vm1108, %v3434, 0
        %3438 = vmatprep.subr.bf16.mxu0 0
        %3439 = vmatpush1.bf16.xpose.msra.mxu0 %v3224
        %3440 = vmatprep.subr.bf16.mxu0 0
        %3441 = vmatpush1.bf16.xpose.msra.mxu0 0
        %3442 = vmatprep.subr.bf16.mxu0 0
        %3443 = vmatpush1.bf16.xpose.msra.mxu0 0
        %3444 = vmatprep.subr.bf16.mxu0 0
        %3445 = vmatpush1.bf16.xpose.msra.mxu0 0
        %3446 = vmatprep.subr.bf16.mxu0 0
        %3447 = vmatpush1.bf16.xpose.msra.mxu0 0
        %3448 = vmatprep.subr.bf16.mxu0 0
        %3449 = vmatpush1.bf16.xpose.msra.mxu0 0
        %3450 = vmatprep.subr.bf16.mxu0 0
        %3451 = vmatpush1.bf16.xpose.msra.mxu0 0
        %3452 = vmatprep.subr.bf16.mxu0 0
        %3453 = vmatpush1.bf16.xpose.msra.mxu0 0
        %3454 = vmatprep.subr.bf16.mxu0 0
        %3455 = vmatpush1.bf16.xpose.msra.mxu0 0
        %3456 = vmatprep.subr.bf16.mxu0 0
        %3457 = vmatpush1.bf16.xpose.msra.mxu0 0
        %3458 = vmatprep.subr.bf16.mxu0 0
        %3459 = vmatpush1.bf16.xpose.msra.mxu0 0
        %3460 = vmatprep.subr.bf16.mxu0 0
        %3461 = vmatpush1.bf16.xpose.msra.mxu0 0
        %3462 = vmatprep.subr.bf16.mxu0 0
        %3463 = vmatpush1.bf16.xpose.msra.mxu0 0
        %3464 = vmatprep.subr.bf16.mxu0 0
        %3465 = vmatpush1.bf16.xpose.msra.mxu0 0
        %3466 = vmatprep.subr.bf16.mxu0 0
        %3467 = vmatpush1.bf16.xpose.msra.mxu0 0
        %3468 = vmatprep.subr.bf16.mxu0 0
        %3469 = vmatpush1.bf16.xpose.msra.mxu0 0
        %3470 = vmatprep.mubr.bf16.mxu0 0
        %3471 = vmatmul.mubr.bf16.gmra.mrb[0].mxu0 %v3436
        %v3472 = vpop.f32.mrb[0].mxu0
        %v3473 = vadd.f32 0.0, %v3472
        %v3474 = vpop.f32.mrb[0].mxu0
        %v3475 = vpop.f32.mrb[0].mxu0
        %v3476 = vpop.f32.mrb[0].mxu0
        %3477 = vdwg.mxu0
        %v3478 = vmul.f32 %v3473, 0.4472136
        %v3479 = vsel %vm1356, %v3478, -inf
        %3480 = vmax.xlane.f32.xlu0 %v3479
        %v3481 = vpop.xlane.xlu0 %3480
        %v3482 = vsub.f32 %v3478, %v3481
        %v3483 = vmul.f32 %v3482, 1.442695
        %v3484 = vpow.pop %v3483
        %v3485 = vsel %vm1356, %v3484, 0.0
        %3486 = vadd.xlane.f32.xlu0 %v3485
        %v3487 = vpop.xlane.xlu0 %3486
        %v3488 = vrcp.pop %v3487
        %v3489 = vmul.f32 %v3484, %v3488
        %v3490 = vmul.f32 %v3212, %v1053
        %v3491 = vpack.c.bf16 %v3490, %v3490
        %v3492 = vpack.c.bf16 %v3489, %v3489
        %v3494 = vsel %vm1431, %v3492, 0
        %v3497 = vand.u32 %v3491, %v1437
        %3499 = vmatprep.subr.bf16.mxu0 0
        %3500 = vmatpush1.bf16.msra.mxu0 %v3497
        %3501 = vmatprep.subr.bf16.mxu0 0
        %3502 = vmatpush1.bf16.msra.mxu0 0
        %3503 = vmatprep.subr.bf16.mxu0 0
        %3504 = vmatpush1.bf16.msra.mxu0 0
        %3505 = vmatprep.subr.bf16.mxu0 0
        %3506 = vmatpush1.bf16.msra.mxu0 0
        %3507 = vmatprep.subr.bf16.mxu0 0
        %3508 = vmatpush1.bf16.msra.mxu0 0
        %3509 = vmatprep.subr.bf16.mxu0 0
        %3510 = vmatpush1.bf16.msra.mxu0 0
        %3511 = vmatprep.subr.bf16.mxu0 0
        %3512 = vmatpush1.bf16.msra.mxu0 0
        %3513 = vmatprep.subr.bf16.mxu0 0
        %3514 = vmatpush1.bf16.msra.mxu0 0
        %3515 = vmatprep.subr.bf16.mxu0 0
        %3516 = vmatpush1.bf16.msra.mxu0 0
        %3517 = vmatprep.subr.bf16.mxu0 0
        %3518 = vmatpush1.bf16.msra.mxu0 0
        %3519 = vmatprep.subr.bf16.mxu0 0
        %3520 = vmatpush1.bf16.msra.mxu0 0
        %3521 = vmatprep.subr.bf16.mxu0 0
        %3522 = vmatpush1.bf16.msra.mxu0 0
        %3523 = vmatprep.subr.bf16.mxu0 0
        %3524 = vmatpush1.bf16.msra.mxu0 0
        %3525 = vmatprep.subr.bf16.mxu0 0
        %3526 = vmatpush1.bf16.msra.mxu0 0
        %3527 = vmatprep.subr.bf16.mxu0 0
        %3528 = vmatpush1.bf16.msra.mxu0 0
        %3529 = vmatprep.subr.bf16.mxu0 0
        %3530 = vmatpush1.bf16.msra.mxu0 0
        %3531 = vmatprep.mubr.bf16.mxu0 0
        %3532 = vmatmul.mubr.bf16.gmra.mrb[0].mxu0 %v3494
        %v3533 = vpop.f32.mrb[0].mxu0
        %v3534 = vadd.f32 0.0, %v3533
        %v3535 = vpop.f32.mrb[0].mxu0
        %v3536 = vpop.f32.mrb[0].mxu0
        %v3537 = vpop.f32.mrb[0].mxu0
        %3538 = vdwg.mxu0
        %v3539 = vadd.f32 %v3428, %v3534
        %v3540 = vmul.f32 %v3089, %v1058
        %v3541 = vpack.c.bf16 %v3540, %v3540
        %v3543 = vsel %vm1108, %v3541, 0
        %3545 = vmatprep.subr.bf16.mxu0 0
        %3546 = vmatpush1.bf16.xpose.msra.mxu0 %v3224
        %3547 = vmatprep.subr.bf16.mxu0 0
        %3548 = vmatpush1.bf16.xpose.msra.mxu0 0
        %3549 = vmatprep.subr.bf16.mxu0 0
        %3550 = vmatpush1.bf16.xpose.msra.mxu0 0
        %3551 = vmatprep.subr.bf16.mxu0 0
        %3552 = vmatpush1.bf16.xpose.msra.mxu0 0
        %3553 = vmatprep.subr.bf16.mxu0 0
        %3554 = vmatpush1.bf16.xpose.msra.mxu0 0
        %3555 = vmatprep.subr.bf16.mxu0 0
        %3556 = vmatpush1.bf16.xpose.msra.mxu0 0
        %3557 = vmatprep.subr.bf16.mxu0 0
        %3558 = vmatpush1.bf16.xpose.msra.mxu0 0
        %3559 = vmatprep.subr.bf16.mxu0 0
        %3560 = vmatpush1.bf16.xpose.msra.mxu0 0
        %3561 = vmatprep.subr.bf16.mxu0 0
        %3562 = vmatpush1.bf16.xpose.msra.mxu0 0
        %3563 = vmatprep.subr.bf16.mxu0 0
        %3564 = vmatpush1.bf16.xpose.msra.mxu0 0
        %3565 = vmatprep.subr.bf16.mxu0 0
        %3566 = vmatpush1.bf16.xpose.msra.mxu0 0
        %3567 = vmatprep.subr.bf16.mxu0 0
        %3568 = vmatpush1.bf16.xpose.msra.mxu0 0
        %3569 = vmatprep.subr.bf16.mxu0 0
        %3570 = vmatpush1.bf16.xpose.msra.mxu0 0
        %3571 = vmatprep.subr.bf16.mxu0 0
        %3572 = vmatpush1.bf16.xpose.msra.mxu0 0
        %3573 = vmatprep.subr.bf16.mxu0 0
        %3574 = vmatpush1.bf16.xpose.msra.mxu0 0
        %3575 = vmatprep.subr.bf16.mxu0 0
        %3576 = vmatpush1.bf16.xpose.msra.mxu0 0
        %3577 = vmatprep.mubr.bf16.mxu0 0
        %3578 = vmatmul.mubr.bf16.gmra.mrb[0].mxu0 %v3543
        %v3579 = vpop.f32.mrb[0].mxu0
        %v3580 = vadd.f32 0.0, %v3579
        %v3581 = vpop.f32.mrb[0].mxu0
        %v3582 = vpop.f32.mrb[0].mxu0
        %v3583 = vpop.f32.mrb[0].mxu0
        %3584 = vdwg.mxu0
        %v3585 = vmul.f32 %v3580, 0.4472136
        %v3586 = vsel %vm1356, %v3585, -inf
        %3587 = vmax.xlane.f32.xlu0 %v3586
        %v3588 = vpop.xlane.xlu0 %3587
        %v3589 = vsub.f32 %v3585, %v3588
        %v3590 = vmul.f32 %v3589, 1.442695
        %v3591 = vpow.pop %v3590
        %v3592 = vsel %vm1356, %v3591, 0.0
        %3593 = vadd.xlane.f32.xlu0 %v3592
        %v3594 = vpop.xlane.xlu0 %3593
        %v3595 = vrcp.pop %v3594
        %v3596 = vmul.f32 %v3591, %v3595
        %v3597 = vmul.f32 %v3212, %v1058
        %v3598 = vpack.c.bf16 %v3597, %v3597
        %v3599 = vpack.c.bf16 %v3596, %v3596
        %v3601 = vsel %vm1431, %v3599, 0
        %v3604 = vand.u32 %v3598, %v1437
        %3606 = vmatprep.subr.bf16.mxu0 0
        %3607 = vmatpush1.bf16.msra.mxu0 %v3604
        %3608 = vmatprep.subr.bf16.mxu0 0
        %3609 = vmatpush1.bf16.msra.mxu0 0
        %3610 = vmatprep.subr.bf16.mxu0 0
        %3611 = vmatpush1.bf16.msra.mxu0 0
        %3612 = vmatprep.subr.bf16.mxu0 0
        %3613 = vmatpush1.bf16.msra.mxu0 0
        %3614 = vmatprep.subr.bf16.mxu0 0
        %3615 = vmatpush1.bf16.msra.mxu0 0
        %3616 = vmatprep.subr.bf16.mxu0 0
        %3617 = vmatpush1.bf16.msra.mxu0 0
        %3618 = vmatprep.subr.bf16.mxu0 0
        %3619 = vmatpush1.bf16.msra.mxu0 0
        %3620 = vmatprep.subr.bf16.mxu0 0
        %3621 = vmatpush1.bf16.msra.mxu0 0
        %3622 = vmatprep.subr.bf16.mxu0 0
        %3623 = vmatpush1.bf16.msra.mxu0 0
        %3624 = vmatprep.subr.bf16.mxu0 0
        %3625 = vmatpush1.bf16.msra.mxu0 0
        %3626 = vmatprep.subr.bf16.mxu0 0
        %3627 = vmatpush1.bf16.msra.mxu0 0
        %3628 = vmatprep.subr.bf16.mxu0 0
        %3629 = vmatpush1.bf16.msra.mxu0 0
        %3630 = vmatprep.subr.bf16.mxu0 0
        %3631 = vmatpush1.bf16.msra.mxu0 0
        %3632 = vmatprep.subr.bf16.mxu0 0
        %3633 = vmatpush1.bf16.msra.mxu0 0
        %3634 = vmatprep.subr.bf16.mxu0 0
        %3635 = vmatpush1.bf16.msra.mxu0 0
        %3636 = vmatprep.subr.bf16.mxu0 0
        %3637 = vmatpush1.bf16.msra.mxu0 0
        %3638 = vmatprep.mubr.bf16.mxu0 0
        %3639 = vmatmul.mubr.bf16.gmra.mrb[0].mxu0 %v3601
        %v3640 = vpop.f32.mrb[0].mxu0
        %v3641 = vadd.f32 0.0, %v3640
        %v3642 = vpop.f32.mrb[0].mxu0
        %v3643 = vpop.f32.mrb[0].mxu0
        %v3644 = vpop.f32.mrb[0].mxu0
        %3645 = vdwg.mxu0
        %v3646 = vadd.f32 %v3539, %v3641
        %v3647 = vpack.c.bf16 %v3646, %v3646
        %v3648 = vlaneseq
        %v3649 = vshrl.u32 %v3648, 7
        %v3650 = vsub.s32 6, %v3649
        %v3651 = vrot.slane %v2973, %v3650
        %v3655 = vunpack.c.l.b16 %v2985
        %v3656 = vunpack.c.l.b16 %v2986
        %v3657 = vunpack.c.l.b16 %v2987
        %v3658 = vpack.c.b16 %v3656, %v3655
        %v3659 = vpack.c.b16 %v3657, %v3657
        %v3662 = vsel %vm1108, %v3647, 0
        %v3665 = vsel %vm1112, %v3659, 0
        %3667 = vmatprep.subr.bf16.mxu0 0
        %3668 = vmatpush1.bf16.msra.mxu0 %v3658
        %3669 = vmatprep.subr.bf16.mxu0 0
        %3670 = vmatpush1.bf16.msra.mxu0 %v3665
        %3671 = vmatprep.subr.bf16.mxu0 0
        %3672 = vmatpush1.bf16.msra.mxu0 0
        %3673 = vmatprep.subr.bf16.mxu0 0
        %3674 = vmatpush1.bf16.msra.mxu0 0
        %3675 = vmatprep.subr.bf16.mxu0 0
        %3676 = vmatpush1.bf16.msra.mxu0 0
        %3677 = vmatprep.subr.bf16.mxu0 0
        %3678 = vmatpush1.bf16.msra.mxu0 0
        %3679 = vmatprep.subr.bf16.mxu0 0
        %3680 = vmatpush1.bf16.msra.mxu0 0
        %3681 = vmatprep.subr.bf16.mxu0 0
        %3682 = vmatpush1.bf16.msra.mxu0 0
        %3683 = vmatprep.subr.bf16.mxu0 0
        %3684 = vmatpush1.bf16.msra.mxu0 0
        %3685 = vmatprep.subr.bf16.mxu0 0
        %3686 = vmatpush1.bf16.msra.mxu0 0
        %3687 = vmatprep.subr.bf16.mxu0 0
        %3688 = vmatpush1.bf16.msra.mxu0 0
        %3689 = vmatprep.subr.bf16.mxu0 0
        %3690 = vmatpush1.bf16.msra.mxu0 0
        %3691 = vmatprep.subr.bf16.mxu0 0
        %3692 = vmatpush1.bf16.msra.mxu0 0
        %3693 = vmatprep.subr.bf16.mxu0 0
        %3694 = vmatpush1.bf16.msra.mxu0 0
        %3695 = vmatprep.subr.bf16.mxu0 0
        %3696 = vmatpush1.bf16.msra.mxu0 0
        %3697 = vmatprep.subr.bf16.mxu0 0
        %3698 = vmatpush1.bf16.msra.mxu0 0
        %3699 = vmatprep.mubr.bf16.mxu0 0
        %3700 = vmatmul.mubr.bf16.gmra.mrb[0].mxu0 %v3662
        %v3701 = vpop.f32.mrb[0].mxu0
        %v3702 = vadd.f32 %v3651, %v3701
        %v3703 = vpop.f32.mrb[0].mxu0
        %v3704 = vpop.f32.mrb[0].mxu0
        %v3705 = vpop.f32.mrb[0].mxu0
        %3706 = vdwg.mxu0
        %v3707 = vlaneseq
        %v3708 = vshrl.u32 %v3707, 7
        %v3709 = vsub.s32 7, %v3708
        %v3710 = vrot.slane %v2973, %v3709
        %v3711 = vmul.f32 %v3710, %v3702
        %v3712 = vadd.f32 %v2971, %v3711
        %v3713 = vsel %vm1073, %v3712, 0.0
        %3714 = vadd.xlane.f32.xlu0 %v3713
        %v3715 = vpop.xlane.xlu0 %3714
        %v3716 = vmul.f32 %v3715, %v1077
        %v3717 = vsub.f32 %v3712, %v3716
        %v3718 = vmul.f32 %v3717, %v3717
        %v3719 = vsel %vm1073, %v3718, 0.0
        %3720 = vadd.xlane.f32.xlu0 %v3719
        %v3721 = vpop.xlane.xlu0 %3720
        %v3722 = vmul.f32 %v3721, %v1077
        %v3723 = vadd.f32 %v3722, 1e-05
        %v3724 = vrsqrt.pop %v3723
        %v3725 = vmul.f32 %v3717, %v3724
        %v3726 = vlaneseq
        %v3727 = vshrl.u32 %v3726, 7
        %v3728 = vsub.s32 0, %v3727
        %v3729 = vrot.slane %v2974, %v3728
        %v3730 = vmul.f32 %v3725, %v3729
        %v3731 = vlaneseq
        %v3732 = vshrl.u32 %v3731, 7
        %v3733 = vsub.s32 1, %v3732
        %v3734 = vrot.slane %v2974, %v3733
        %v3735 = vadd.f32 %v3730, %v3734
        %v3736 = vpack.c.bf16 %v3735, %v3735
        %s3737 = scalar_lea.vmem %s11, 24
        %v3738 = vld [vmem:[%s3737] sm:$0xf]
        %v3739 = vld [vmem:[%s3737 + $0x4] sm:$0xf]
        %v3740 = vld [vmem:[%s3737 + $0x8] sm:$0x3]
        %s3741 = scalar_lea.vmem %s9, 2
        %v3742 = vld [vmem:[%s3741] sm:$0x1]
        %v3744 = vlaneseq
        %v3745 = vshrl.u32 %v3744, 7
        %v3746 = vsub.s32 0, %v3745
        %v3747 = vrot.slane %v3742, %v3746
        %v3752 = vunpack.c.l.b16 %v3738
        %v3753 = vunpack.c.l.b16 %v3739
        %v3754 = vunpack.c.l.b16 %v3740
        %v3755 = vpack.c.b16 %v3753, %v3752
        %v3756 = vpack.c.b16 %v3754, %v3754
        %v3759 = vsel %vm1108, %v3736, 0
        %v3762 = vsel %vm1112, %v3756, 0
        %3764 = vmatprep.subr.bf16.mxu0 0
        %3765 = vmatpush1.bf16.msra.mxu0 %v3755
        %3766 = vmatprep.subr.bf16.mxu0 0
        %3767 = vmatpush1.bf16.msra.mxu0 %v3762
        %3768 = vmatprep.subr.bf16.mxu0 0
        %3769 = vmatpush1.bf16.msra.mxu0 0
        %3770 = vmatprep.subr.bf16.mxu0 0
        %3771 = vmatpush1.bf16.msra.mxu0 0
        %3772 = vmatprep.subr.bf16.mxu0 0
        %3773 = vmatpush1.bf16.msra.mxu0 0
        %3774 = vmatprep.subr.bf16.mxu0 0
        %3775 = vmatpush1.bf16.msra.mxu0 0
        %3776 = vmatprep.subr.bf16.mxu0 0
        %3777 = vmatpush1.bf16.msra.mxu0 0
        %3778 = vmatprep.subr.bf16.mxu0 0
        %3779 = vmatpush1.bf16.msra.mxu0 0
        %3780 = vmatprep.subr.bf16.mxu0 0
        %3781 = vmatpush1.bf16.msra.mxu0 0
        %3782 = vmatprep.subr.bf16.mxu0 0
        %3783 = vmatpush1.bf16.msra.mxu0 0
        %3784 = vmatprep.subr.bf16.mxu0 0
        %3785 = vmatpush1.bf16.msra.mxu0 0
        %3786 = vmatprep.subr.bf16.mxu0 0
        %3787 = vmatpush1.bf16.msra.mxu0 0
        %3788 = vmatprep.subr.bf16.mxu0 0
        %3789 = vmatpush1.bf16.msra.mxu0 0
        %3790 = vmatprep.subr.bf16.mxu0 0
        %3791 = vmatpush1.bf16.msra.mxu0 0
        %3792 = vmatprep.subr.bf16.mxu0 0
        %3793 = vmatpush1.bf16.msra.mxu0 0
        %3794 = vmatprep.subr.bf16.mxu0 0
        %3795 = vmatpush1.bf16.msra.mxu0 0
        %3796 = vmatprep.mubr.bf16.mxu0 0
        %3797 = vmatmul.mubr.bf16.gmra.mrb[0].mxu0 %v3759
        %v3798 = vpop.f32.mrb[0].mxu0
        %v3799 = vadd.f32 %v3747, %v3798
        %v3800 = vpop.f32.mrb[0].mxu0
        %v3801 = vpop.f32.mrb[0].mxu0
        %v3802 = vpop.f32.mrb[0].mxu0
        %3803 = vdwg.mxu0
        %v3804 = vmul.f32 %v3799, 0.5
        %v3805 = vmul.f32 %v3799, 0.70710677
        %vm3806 = vcmp.ge.f32.partialorder %v3805, 0.0
        %v3807 = vsel %vm3806, 1.0, -1.0
        %v3808 = vand.u32 2147483647, %v3805
        %v3809 = vmul.f32 %v3808, 0.3275911
        %v3810 = vadd.f32 %v3809, 1.0
        %v3811 = vrcp.pop %v3810
        %v3812 = vmul.f32 1.0, %v3811
        %v3813 = vmul.f32 %v3812, 1.0614054
        %v3814 = vadd.f32 %v3813, -1.4531521
        %v3815 = vmul.f32 %v3814, %v3812
        %v3816 = vadd.f32 %v3815, 1.4214138
        %v3817 = vmul.f32 %v3816, %v3812
        %v3818 = vadd.f32 %v3817, -0.28449672
        %v3819 = vmul.f32 %v3818, %v3812
        %v3820 = vadd.f32 %v3819, 0.2548296
        %v3821 = vmul.f32 %v3820, %v3812
        %v3822 = vsub.f32 0.0, %v3808
        %v3823 = vmul.f32 %v3822, %v3808
        %v3824 = vmul.f32 %v3823, 1.442695
        %v3825 = vpow.pop %v3824
        %v3826 = vmul.f32 %v3821, %v3825
        %v3827 = vsub.f32 1.0, %v3826
        %v3828 = vmul.f32 %v3807, %v3827
        %v3829 = vadd.f32 %v3828, 1.0
        %v3830 = vmul.f32 %v3804, %v3829
        %v3831 = vpack.c.bf16 %v3830, %v3830
        %s3832 = scalar_lea.vmem %s12, 80
        %v3833 = vld [vmem:[%s3832] sm:$0xf]
        %v3834 = vld [vmem:[%s3832 + $0x4] sm:$0xf]
        %v3835 = vld [vmem:[%s3832 + $0x8] sm:$0xf]
        %v3836 = vld [vmem:[%s3832 + $0xc] sm:$0xf]
        %v3837 = vld [vmem:[%s3832 + $0x10] sm:$0xf]
        %v3838 = vld [vmem:[%s3832 + $0x14] sm:$0xf]
        %v3839 = vld [vmem:[%s3832 + $0x18] sm:$0xf]
        %v3840 = vld [vmem:[%s3832 + $0x1c] sm:$0xf]
        %v3841 = vld [vmem:[%s3832 + $0x20] sm:$0xf]
        %v3842 = vld [vmem:[%s3832 + $0x24] sm:$0xf]
        %v3843 = vlaneseq
        %v3844 = vshrl.u32 %v3843, 7
        %v3845 = vsub.s32 2, %v3844
        %v3846 = vrot.slane %v2974, %v3845
        %v3857 = vunpack.c.l.b16 %v3833
        %v3858 = vunpack.c.l.b16 %v3834
        %v3859 = vunpack.c.l.b16 %v3835
        %v3860 = vunpack.c.l.b16 %v3836
        %v3861 = vunpack.c.l.b16 %v3837
        %v3862 = vunpack.c.l.b16 %v3838
        %v3863 = vunpack.c.l.b16 %v3839
        %v3864 = vunpack.c.l.b16 %v3840
        %v3865 = vunpack.c.l.b16 %v3841
        %v3866 = vunpack.c.l.b16 %v3842
        %v3867 = vpack.c.b16 %v3858, %v3857
        %v3868 = vpack.c.b16 %v3860, %v3859
        %v3869 = vpack.c.b16 %v3862, %v3861
        %v3870 = vpack.c.b16 %v3864, %v3863
        %v3871 = vpack.c.b16 %v3866, %v3865
        %v3878 = vsel %vm1968, %v3831, 0
        %3880 = vmatprep.subr.bf16.mxu0 0
        %3881 = vmatpush1.bf16.msra.mxu0 %v3867
        %3882 = vmatprep.subr.bf16.mxu0 0
        %3883 = vmatpush1.bf16.msra.mxu0 %v3868
        %3884 = vmatprep.subr.bf16.mxu0 0
        %3885 = vmatpush1.bf16.msra.mxu0 %v3869
        %3886 = vmatprep.subr.bf16.mxu0 0
        %3887 = vmatpush1.bf16.msra.mxu0 %v3870
        %3888 = vmatprep.subr.bf16.mxu0 0
        %3889 = vmatpush1.bf16.msra.mxu0 %v3871
        %3890 = vmatprep.subr.bf16.mxu0 0
        %3891 = vmatpush1.bf16.msra.mxu0 0
        %3892 = vmatprep.subr.bf16.mxu0 0
        %3893 = vmatpush1.bf16.msra.mxu0 0
        %3894 = vmatprep.subr.bf16.mxu0 0
        %3895 = vmatpush1.bf16.msra.mxu0 0
        %3896 = vmatprep.subr.bf16.mxu0 0
        %3897 = vmatpush1.bf16.msra.mxu0 0
        %3898 = vmatprep.subr.bf16.mxu0 0
        %3899 = vmatpush1.bf16.msra.mxu0 0
        %3900 = vmatprep.subr.bf16.mxu0 0
        %3901 = vmatpush1.bf16.msra.mxu0 0
        %3902 = vmatprep.subr.bf16.mxu0 0
        %3903 = vmatpush1.bf16.msra.mxu0 0
        %3904 = vmatprep.subr.bf16.mxu0 0
        %3905 = vmatpush1.bf16.msra.mxu0 0
        %3906 = vmatprep.subr.bf16.mxu0 0
        %3907 = vmatpush1.bf16.msra.mxu0 0
        %3908 = vmatprep.subr.bf16.mxu0 0
        %3909 = vmatpush1.bf16.msra.mxu0 0
        %3910 = vmatprep.subr.bf16.mxu0 0
        %3911 = vmatpush1.bf16.msra.mxu0 0
        %3912 = vmatprep.mubr.bf16.mxu0 0
        %3913 = vmatmul.mubr.bf16.gmra.mrb[0].mxu0 %v3878
        %v3914 = vpop.f32.mrb[0].mxu0
        %v3915 = vadd.f32 %v3846, %v3914
        %v3916 = vpop.f32.mrb[0].mxu0
        %v3917 = vpop.f32.mrb[0].mxu0
        %v3918 = vpop.f32.mrb[0].mxu0
        %3919 = vdwg.mxu0
        %v3920 = vlaneseq
        %v3921 = vshrl.u32 %v3920, 7
        %v3922 = vsub.s32 3, %v3921
        %v3923 = vrot.slane %v2974, %v3922
        %v3924 = vmul.f32 %v3923, %v3915
        %v3925 = vadd.f32 %v3712, %v3924
        %v3926 = vld [vmem:[%s13] sm:$0x3]
        %v3927 = vsel %vm1028, %v3925, 0.0
        %3928 = vadd.xlane.f32.xlu0 %v3927
        %v3929 = vpop.xlane.xlu0 %3928
        %v3930 = vmul.f32 %v3929, %v1077
        %v3931 = vsub.f32 %v3925, %v3930
        %v3932 = vmul.f32 %v3931, %v3931
        %v3933 = vsel %vm1028, %v3932, 0.0
        %3934 = vadd.xlane.f32.xlu0 %v3933
        %v3935 = vpop.xlane.xlu0 %3934
        %v3936 = vmul.f32 %v3935, %v1077
        %v3937 = vadd.f32 %v3936, 1e-05
        %v3938 = vrsqrt.pop %v3937
        %v3939 = vmul.f32 %v3931, %v3938
        %v3940 = vmul.f32 %v3939, %v3926
        %v3942 = vrot.slane %v3926, 1
        %v3944 = vadd.f32 %v3940, %v3942
        %v3945 = vpack.c.bf16 %v3944, %v3944
        %v3946 = vld [vmem:[%s14] sm:$0xf]
        %v3947 = vld [vmem:[%s14 + $0x4] sm:$0xf]
        %v3948 = vld [vmem:[%s14 + $0x8] sm:$0x3]
        %v3949 = vld [vmem:[%s15] sm:$0x1]
        %v3953 = vunpack.c.l.b16 %v3946
        %v3954 = vunpack.c.l.b16 %v3947
        %v3955 = vunpack.c.l.b16 %v3948
        %v3956 = vpack.c.b16 %v3954, %v3953
        %v3957 = vpack.c.b16 %v3955, %v3955
        %v3960 = vsel %vm1108, %v3945, 0
        %v3963 = vsel %vm1112, %v3957, 0
        %3965 = vmatprep.subr.bf16.mxu0 0
        %3966 = vmatpush1.bf16.msra.mxu0 %v3956
        %3967 = vmatprep.subr.bf16.mxu0 0
        %3968 = vmatpush1.bf16.msra.mxu0 %v3963
        %3969 = vmatprep.subr.bf16.mxu0 0
        %3970 = vmatpush1.bf16.msra.mxu0 0
        %3971 = vmatprep.subr.bf16.mxu0 0
        %3972 = vmatpush1.bf16.msra.mxu0 0
        %3973 = vmatprep.subr.bf16.mxu0 0
        %3974 = vmatpush1.bf16.msra.mxu0 0
        %3975 = vmatprep.subr.bf16.mxu0 0
        %3976 = vmatpush1.bf16.msra.mxu0 0
        %3977 = vmatprep.subr.bf16.mxu0 0
        %3978 = vmatpush1.bf16.msra.mxu0 0
        %3979 = vmatprep.subr.bf16.mxu0 0
        %3980 = vmatpush1.bf16.msra.mxu0 0
        %3981 = vmatprep.subr.bf16.mxu0 0
        %3982 = vmatpush1.bf16.msra.mxu0 0
        %3983 = vmatprep.subr.bf16.mxu0 0
        %3984 = vmatpush1.bf16.msra.mxu0 0
        %3985 = vmatprep.subr.bf16.mxu0 0
        %3986 = vmatpush1.bf16.msra.mxu0 0
        %3987 = vmatprep.subr.bf16.mxu0 0
        %3988 = vmatpush1.bf16.msra.mxu0 0
        %3989 = vmatprep.subr.bf16.mxu0 0
        %3990 = vmatpush1.bf16.msra.mxu0 0
        %3991 = vmatprep.subr.bf16.mxu0 0
        %3992 = vmatpush1.bf16.msra.mxu0 0
        %3993 = vmatprep.subr.bf16.mxu0 0
        %3994 = vmatpush1.bf16.msra.mxu0 0
        %3995 = vmatprep.subr.bf16.mxu0 0
        %3996 = vmatpush1.bf16.msra.mxu0 0
        %3997 = vmatprep.mubr.bf16.mxu0 0
        %3998 = vmatmul.mubr.bf16.gmra.mrb[0].mxu0 %v3960
        %v3999 = vpop.f32.mrb[0].mxu0
        %v4000 = vadd.f32 %v3949, %v3999
        %v4001 = vpop.f32.mrb[0].mxu0
        %v4002 = vpop.f32.mrb[0].mxu0
        %v4003 = vpop.f32.mrb[0].mxu0
        %4004 = vdwg.mxu0
        %vm4005 = vcmask 122880
        %4006 = vst.msk [vmem:[%s511] sm:$0x1] %vm4005, %v4000
        %s4007 = sand.u32 %s379, 1
        %s4008 = scalar_lea.sflag [#allocation4], %s4007
        %s4009 = sand.u32 %s379, 1
        %s4010 = scalar_lea.vmem [#allocation3], %s4009
        // Predicated region
        $region85: #{labram_forward.1} parent=83 // pred_check
          %p4011 = pneg %p389
        $region86: #{labram_forward.1} parent=83 // pred_check_branch
          %4013 = sbr.rel (%p4011) target = $region88
        $region87: #{labram_forward.1} parent=83 // pred_region
          %s4015 = ssub.s32 16, 16
          %4016 = vsyncadd %s4008, %s4015
          %s4017 = smul.addr %s30, 16
          %s4018 = scalar_lea.hbm %s16, %s4017
          %s4020 = sshll.u32 %s4010, 4
          %s4021 = int_to_ptr.vmem [resolvable:$true] %s4020
          %4023 = dma.vmem_to_hbm [thread:$0]  %s4021, 16, %s4018, %s4008
        $region88: #{labram_forward.1} parent=83 // pred_fallthru
          _
      $region84: #{labram_forward.1} parent=5 // pred_fallthru
        _
      %p4024 = scmp.le.s32.totalorder 2, %s25
      // Predicated region
      $region89: #{labram_forward.1} parent=5 // pred_check
        %p4025 = pneg %p4024
      $region90: #{labram_forward.1} parent=5 // pred_check_branch
        %4027 = sbr.rel (%p4025) target = $region92
      $region91: #{labram_forward.1} parent=5 // pred_region
        %s4028 = ssub.s32 %s25, 2
        // Predicated region
        $region93: #{labram_forward.1} parent=91 // pred_check
          %p4029 = pneg %p395
        $region94: #{labram_forward.1} parent=91 // pred_check_branch
          %4031 = sbr.rel (%p4029) target = $region96
        $region95: #{labram_forward.1} parent=91 // pred_region
          %s4032 = sand.u32 %s380, 1
          %s4033 = scalar_lea.sflag [#allocation4], %s4032
          %s4034 = sand.u32 %s380, 1
          %s4035 = scalar_lea.vmem [#allocation3], %s4034
          %4036 = dma.done %s4033, 16
        $region96: #{labram_forward.1} parent=91 // pred_fallthru
          _
      $region92: #{labram_forward.1} parent=5 // pred_fallthru
        _
    $region6: #{labram_forward.1} parent=1 // loop_footer
      %s29 = sadd.s32 1, %s25
    $region7: #{labram_forward.1} parent=1 // loop_footer_branch
      %24 = sbr.rel target = $region3
    $region8: #{labram_forward.1} parent=1 // loop_exit
      _
    %4037 = vsyncpa [#allocation4], 1
    %s4038 = scalar_lea.sflag [#allocation4], 1
    %4039 = vsyncpa %s4038, 1

</llo_original>
